<compile_context>
chip_gen: v5e
topology: v5e:2x2
jax: 0.10.0
libtpu: 0.0.40
codegen_flags: <defaults>
</compile_context>

<pallas_src>
import jax
import jax.numpy as jnp
from jax import lax
from jax.experimental import pallas as pl
from jax.experimental.pallas import tpu as pltpu

# ---- small, module-consistent config -------------------------------------------------
HIDDEN = 32          # hidden_size (module default)
NUM_LAYERS = 2       # module default is 5; kept small for the demo (must be >= 2 here)
INPUT = 16           # input_size == output_size (decoder feeds its output back)
OUTPUT = 16
BATCH = 4            # padded to 8 sublanes inside the wrapper
MAX_ITERS = 8        # module default 200; small for the demo


# --------------------------------------------------------------------------------------
# Kernel
# --------------------------------------------------------------------------------------
def _make_decoder_kernel(max_iters, num_layers, hidden):
    H, L = hidden, num_layers
    HH = 2 * H                                    # per-layer direction-packed state width
    unroll = True if max_iters <= 32 else 4       # full unroll at demo size, partial at T=200

    def kernel(h0_ref, c0_ref, x0_ref, wx0_ref, wxl_ref, wh_ref, b_ref,
               wlin_ref, blin_ref, out_ref):
        def step(t, carry):
            hs, cs, x = carry                     # tuples of (Bp, 2H); x: (Bp, IN)
            layer_in = x
            new_hs, new_cs = [], []
            for l in range(L):                    # static unroll over layers
                # Static ref reads: weights stay in VMEM and feed the MXU directly,
                # instead of being carried in vregs across the time loop.
                wx = wx0_ref[...] if l == 0 else wxl_ref[l - 1]
                # Columns: [i0 i1 f0 f1 o0 o1 g0 g1]; i/f/o columns pre-scaled by 0.5.
                gates = (jnp.dot(layer_in, wx, preferred_element_type=jnp.float32)
                         + jnp.dot(hs[l], wh_ref[l], preferred_element_type=jnp.float32)
                         + b_ref[l])                              # (Bp, 8H)
                act = jnp.tanh(gates)                             # ONE EUP pass for all 4 gates
                sig = 0.5 * act[:, :3 * HH] + 0.5                 # sigmoid(z) = 0.5*tanh(z/2)+0.5
                i_g = sig[:, 0:HH]
                f_g = sig[:, HH:2 * HH]
                o_g = sig[:, 2 * HH:3 * HH]
                g_g = act[:, 3 * HH:]
                c_new = f_g * cs[l] + i_g * g_g                   # (Bp, 2H)
                h_new = o_g * jnp.tanh(c_new)                     # (Bp, 2H) == bidir layer out
                new_hs.append(h_new)
                new_cs.append(c_new)
                layer_in = h_new
            # Linear(2H -> OUT) + tanh, fed back as the next step's input.
            y = jnp.tanh(jnp.dot(layer_in, wlin_ref[...],
                                 preferred_element_type=jnp.float32) + blin_ref[...])
            out_ref[t] = y                                        # VMEM-resident output block
            return (tuple(new_hs), tuple(new_cs), y)

        lax.fori_loop(
            0, max_iters, step,
            (tuple(h0_ref[l] for l in range(L)),
             tuple(c0_ref[l] for l in range(L)),
             x0_ref[...]),
            unroll=unroll)

    return kernel


# --------------------------------------------------------------------------------------
# Wrapper-side weight fusion
# --------------------------------------------------------------------------------------
def _fuse_layer(w_ih_d0, w_ih_d1, w_hh_d0, w_hh_d1, b_ih_2, b_hh_2, H):
    """Build per-layer fused weights for one bidirectional LSTM layer.

    Returns:
      Wx: (K_in, 8H)  x-path weights
      Wh: (2H, 8H)    recurrent weights, block-diagonal per direction
      b:  (8H,)       fused bias (b_ih + b_hh)
    Column layout (each block H wide): [i0 i1 f0 f1 o0 o1 g0 g1].
    The sigmoid-gate (i, f, o == first 6H) columns are pre-scaled by 0.5 so the kernel
    can evaluate all four gates with a single tanh: sigmoid(z) = 0.5*tanh(0.5*z) + 0.5.
    """
    dt = w_ih_d0.dtype

    def gate_split(w):     # PyTorch gate-row order is i, f, g, o
        return w[0:H], w[H:2 * H], w[2 * H:3 * H], w[3 * H:4 * H]

    i0, f0, g0, o0 = gate_split(w_ih_d0)                   # (H, K_in) each
    i1, f1, g1, o1 = gate_split(w_ih_d1)
    Wx = jnp.concatenate([i0, i1, f0, f1, o0, o1, g0, g1], axis=0).T     # (K_in, 8H)

    hi0, hf0, hg0, ho0 = gate_split(w_hh_d0)               # (H, H) each
    hi1, hf1, hg1, ho1 = gate_split(w_hh_d1)
    Z = jnp.zeros((H, H), dtype=dt)
    rows_d0 = jnp.concatenate([hi0, Z, hf0, Z, ho0, Z, hg0, Z], axis=0).T  # (H, 8H)
    rows_d1 = jnp.concatenate([Z, hi1, Z, hf1, Z, ho1, Z, hg1], axis=0).T  # (H, 8H)
    Wh = jnp.concatenate([rows_d0, rows_d1], axis=0)                       # (2H, 8H)

    bi0, bf0, bg0, bo0 = gate_split(b_ih_2[0] + b_hh_2[0])
    bi1, bf1, bg1, bo1 = gate_split(b_ih_2[1] + b_hh_2[1])
    b = jnp.concatenate([bi0, bi1, bf0, bf1, bo0, bo1, bg0, bg1])          # (8H,)

    scale = jnp.concatenate([jnp.full((6 * H,), 0.5, dtype=dt),
                             jnp.ones((2 * H,), dtype=dt)])
    return Wx * scale, Wh * scale, b * scale


# --------------------------------------------------------------------------------------
# Parameters (PyTorch layout) and forward wrapper
# --------------------------------------------------------------------------------------
def make_params(key):
    """Deterministic synthetic parameters in PyTorch weight layout."""
    H, In, Out, L = HIDDEN, INPUT, OUTPUT, NUM_LAYERS
    ks = jax.random.split(key, 8)
    s = 0.1
    n = lambda k, shp: s * jax.random.normal(k, shp, dtype=jnp.float32)
    return dict(
        w_ih0=n(ks[0], (2, 4 * H, In)),              # layer 0, both directions
        w_ihl=n(ks[1], (L - 1, 2, 4 * H, 2 * H)),    # layers 1..L-1
        w_hh=n(ks[2], (L, 2, 4 * H, H)),
        b_ih=n(ks[3], (L, 2, 4 * H)),
        b_hh=n(ks[4], (L, 2, 4 * H)),
        w_lin=n(ks[5], (Out, 2 * H)),
        b_lin=n(ks[6], (Out,)),
        start_token=n(ks[7], (1, 1, In)),
    )


def decoder_forward(h0, c0, params, max_iters=MAX_ITERS):
    H, In, Out, L = HIDDEN, INPUT, OUTPUT, NUM_LAYERS
    assert In == Out, "decoder feeds its output back as its next input"
    assert L >= 2
    B = h0.shape[1]
    Bp = max(8, -(-B // 8) * 8)      # pad batch to a sublane multiple (vreg = 8 sublanes)

    # --- pack state (2L, B, H) -> (L, Bp, 2H): per-layer lane-dense [dir0 | dir1]
    def pack_state(s):
        s = s.astype(jnp.float32).reshape(L, 2, B, H)
        s = jnp.transpose(s, (0, 2, 1, 3)).reshape(L, B, 2 * H)
        return jnp.pad(s, ((0, 0), (0, Bp - B), (0, 0)))

    h0_p = pack_state(h0)
    c0_p = pack_state(c0)
    x0 = jnp.broadcast_to(params["start_token"][0], (B, In)).astype(jnp.float32)
    x0_p = jnp.pad(x0, ((0, Bp - B), (0, 0)))

    # --- fused per-layer weights (gate reorder + direction fusion + sigmoid pre-scale)
    wx_list, wh_list, b_list = [], [], []
    for l in range(L):
        w_ih = params["w_ih0"] if l == 0 else params["w_ihl"][l - 1]
        Wx, Wh, bl = _fuse_layer(w_ih[0], w_ih[1],
                                 params["w_hh"][l, 0], params["w_hh"][l, 1],
                                 params["b_ih"][l], params["b_hh"][l], H)
        wx_list.append(Wx)
        wh_list.append(Wh)
        b_list.append(bl)
    wx0 = wx_list[0]                                     # (In, 8H)
    wxl = jnp.stack(wx_list[1:])                         # (L-1, 2H, 8H)
    wh = jnp.stack(wh_list)                              # (L, 2H, 8H)
    b_all = jnp.stack(b_list).reshape(L, 1, 8 * H)       # (L, 1, 8H)
    wlin_t = params["w_lin"].T                           # (2H, Out)
    blin = params["b_lin"].reshape(1, Out)

    operands = (h0_p, c0_p, x0_p, wx0, wxl, wh, b_all, wlin_t, blin)

    def full_spec(a):
        nd = a.ndim
        return pl.BlockSpec(a.shape, lambda i, _nd=nd: (0,) * _nd)

    grid_spec = pltpu.PrefetchScalarGridSpec(
        num_scalar_prefetch=0,
        grid=(1,),                        # single program: time loop lives inside the kernel
        in_specs=[full_spec(a) for a in operands],
        out_specs=pl.BlockSpec((max_iters, Bp, Out), lambda i: (0, 0, 0)),
    )
    out = pl.pallas_call(
        _make_decoder_kernel(max_iters, L, H),
        out_shape=jax.ShapeDtypeStruct((max_iters, Bp, Out), jnp.float32),
        grid_spec=grid_spec,
        compiler_params=pltpu.CompilerParams(
            dimension_semantics=("arbitrary",)),
    )(*operands)
    return out[:, :B, :]


# --------------------------------------------------------------------------------------
# Pure-JAX reference mirroring PyTorch LSTM/Linear semantics
# --------------------------------------------------------------------------------------
def decoder_ref(h0, c0, params, max_iters=MAX_ITERS):
    H, In, L = HIDDEN, INPUT, NUM_LAYERS
    B = h0.shape[1]
    h, c = h0, c0
    x = jnp.broadcast_to(params["start_token"][0], (B, In))
    outs = []
    for _ in range(max_iters):
        layer_in = x
        for l in range(L):
            d_outs = []
            for d in range(2):
                idx = 2 * l + d
                w_ih = params["w_ih0"][d] if l == 0 else params["w_ihl"][l - 1, d]
                w_hh = params["w_hh"][l, d]
                gates = (layer_in @ w_ih.T + h[idx] @ w_hh.T
                         + params["b_ih"][l, d] + params["b_hh"][l, d])
                i_g = jax.nn.sigmoid(gates[:, :H])
                f_g = jax.nn.sigmoid(gates[:, H:2 * H])
                g_g = jnp.tanh(gates[:, 2 * H:3 * H])
                o_g = jax.nn.sigmoid(gates[:, 3 * H:])
                cc = f_g * c[idx] + i_g * g_g
                hh = o_g * jnp.tanh(cc)
                h = h.at[idx].set(hh)
                c = c.at[idx].set(cc)
                d_outs.append(hh)
            layer_in = jnp.concatenate(d_outs, axis=-1)
        y = jnp.tanh(layer_in @ params["w_lin"].T + params["b_lin"])
        x = y
        outs.append(y[None])
    return jnp.concatenate(outs, axis=0)


if __name__ == "__main__":
    key = jax.random.PRNGKey(0)
    k_p, k_h, k_c = jax.random.split(key, 3)
    params = make_params(k_p)
    # hidden = (h0, c0), each (num_layers * 2, batch, hidden) — PyTorch LSTM convention.
    h0 = 0.1 * jax.random.normal(k_h, (2 * NUM_LAYERS, BATCH, HIDDEN), dtype=jnp.float32)
    c0 = 0.1 * jax.random.normal(k_c, (2 * NUM_LAYERS, BATCH, HIDDEN), dtype=jnp.float32)

    out = decoder_forward(h0, c0, params, MAX_ITERS)
    out = jax.block_until_ready(out)

    ref = decoder_ref(h0, c0, params, MAX_ITERS)
    assert out.shape == (MAX_ITERS, BATCH, OUTPUT)
    assert jnp.allclose(out, ref, atol=1e-4, rtol=1e-4), "mismatch vs reference"
    print("KERNEL_OK")
</pallas_src>

<mosaic_0001>
module attributes {stable_mosaic.version = 11 : i64} {
  func.func @kernel(%arg0: i32, %arg1: memref<2x8x64xf32, #tpu.memory_space<vmem>>, %arg2: memref<2x8x64xf32, #tpu.memory_space<vmem>>, %arg3: memref<8x16xf32, #tpu.memory_space<vmem>>, %arg4: memref<16x256xf32, #tpu.memory_space<vmem>>, %arg5: memref<1x64x256xf32, #tpu.memory_space<vmem>>, %arg6: memref<2x64x256xf32, #tpu.memory_space<vmem>>, %arg7: memref<2x1x256xf32, #tpu.memory_space<vmem>>, %arg8: memref<64x16xf32, #tpu.memory_space<vmem>>, %arg9: memref<1x16xf32, #tpu.memory_space<vmem>>, %arg10: memref<8x8x16xf32, #tpu.memory_space<vmem>>) attributes {dimension_semantics = [#tpu.dimension_semantics<arbitrary>], iteration_bounds = array<i64: 1>, scalar_prefetch = 0 : i64, scratch_operands = 0 : i64, tpu.core_type = #tpu.core_type<tc>, window_params = [{pipeline_mode = #tpu.pipeline_mode<synchronous>, transform_indices = @transform_0, window_bounds = array<i64: 2, 8, 64>}, {pipeline_mode = #tpu.pipeline_mode<synchronous>, transform_indices = @transform_1, window_bounds = array<i64: 2, 8, 64>}, {pipeline_mode = #tpu.pipeline_mode<synchronous>, transform_indices = @transform_2, window_bounds = array<i64: 8, 16>}, {pipeline_mode = #tpu.pipeline_mode<synchronous>, transform_indices = @transform_3, window_bounds = array<i64: 16, 256>}, {pipeline_mode = #tpu.pipeline_mode<synchronous>, transform_indices = @transform_4, window_bounds = array<i64: 1, 64, 256>}, {pipeline_mode = #tpu.pipeline_mode<synchronous>, transform_indices = @transform_5, window_bounds = array<i64: 2, 64, 256>}, {pipeline_mode = #tpu.pipeline_mode<synchronous>, transform_indices = @transform_6, window_bounds = array<i64: 2, 1, 256>}, {pipeline_mode = #tpu.pipeline_mode<synchronous>, transform_indices = @transform_7, window_bounds = array<i64: 64, 16>}, {pipeline_mode = #tpu.pipeline_mode<synchronous>, transform_indices = @transform_8, window_bounds = array<i64: 1, 16>}, {pipeline_mode = #tpu.pipeline_mode<synchronous>, transform_indices = @transform_9, window_bounds = array<i64: 8, 8, 16>}]} {
    %c0 = arith.constant 0 : index
    %c0_0 = arith.constant 0 : index
    %c0_1 = arith.constant 0 : index
    %0 = vector.load %arg1[%c0, %c0_0, %c0_1] : memref<2x8x64xf32, #tpu.memory_space<vmem>>, vector<1x8x64xf32>
    %1 = vector.shape_cast %0 : vector<1x8x64xf32> to vector<8x64xf32>
    %c1 = arith.constant 1 : index
    %c0_2 = arith.constant 0 : index
    %c0_3 = arith.constant 0 : index
    %2 = vector.load %arg1[%c1, %c0_2, %c0_3] : memref<2x8x64xf32, #tpu.memory_space<vmem>>, vector<1x8x64xf32>
    %3 = vector.shape_cast %2 : vector<1x8x64xf32> to vector<8x64xf32>
    %c0_4 = arith.constant 0 : index
    %c0_5 = arith.constant 0 : index
    %c0_6 = arith.constant 0 : index
    %4 = vector.load %arg2[%c0_4, %c0_5, %c0_6] : memref<2x8x64xf32, #tpu.memory_space<vmem>>, vector<1x8x64xf32>
    %5 = vector.shape_cast %4 : vector<1x8x64xf32> to vector<8x64xf32>
    %c1_7 = arith.constant 1 : index
    %c0_8 = arith.constant 0 : index
    %c0_9 = arith.constant 0 : index
    %6 = vector.load %arg2[%c1_7, %c0_8, %c0_9] : memref<2x8x64xf32, #tpu.memory_space<vmem>>, vector<1x8x64xf32>
    %7 = vector.shape_cast %6 : vector<1x8x64xf32> to vector<8x64xf32>
    %c0_10 = arith.constant 0 : index
    %c0_11 = arith.constant 0 : index
    %8 = vector.load %arg3[%c0_10, %c0_11] : memref<8x16xf32, #tpu.memory_space<vmem>>, vector<8x16xf32>
    %c0_i32 = arith.constant 0 : i32
    %c0_12 = arith.constant 0 : index
    %c0_13 = arith.constant 0 : index
    %9 = vector.load %arg4[%c0_12, %c0_13] : memref<16x256xf32, #tpu.memory_space<vmem>>, vector<16x256xf32>
    %cst = arith.constant dense<0.000000e+00> : vector<8x256xf32>
    %10 = tpu.matmul %8, %9, %cst {dimension_numbers = #tpu.dot_dimension_numbers<[1], [0], [0], [1], [0, 0, 1, 1], [], []>} : vector<8x16xf32>, vector<16x256xf32>, vector<8x256xf32> -> vector<8x256xf32>
    %c0_14 = arith.constant 0 : index
    %c0_15 = arith.constant 0 : index
    %c0_16 = arith.constant 0 : index
    %11 = vector.load %arg6[%c0_14, %c0_15, %c0_16] : memref<2x64x256xf32, #tpu.memory_space<vmem>>, vector<1x64x256xf32>
    %12 = vector.shape_cast %11 : vector<1x64x256xf32> to vector<64x256xf32>
    %cst_17 = arith.constant dense<0.000000e+00> : vector<8x256xf32>
    %13 = tpu.matmul %1, %12, %cst_17 {dimension_numbers = #tpu.dot_dimension_numbers<[1], [0], [0], [1], [0, 0, 1, 1], [], []>} : vector<8x64xf32>, vector<64x256xf32>, vector<8x256xf32> -> vector<8x256xf32>
    %14 = arith.addf %10, %13 : vector<8x256xf32>
    %c0_18 = arith.constant 0 : index
    %c0_19 = arith.constant 0 : index
    %c0_20 = arith.constant 0 : index
    %15 = vector.load %arg7[%c0_18, %c0_19, %c0_20] : memref<2x1x256xf32, #tpu.memory_space<vmem>>, vector<1x1x256xf32>
    %16 = vector.shape_cast %15 : vector<1x1x256xf32> to vector<1x256xf32>
    %17 = vector.broadcast %16 : vector<1x256xf32> to vector<8x256xf32>
    %18 = arith.addf %14, %17 : vector<8x256xf32>
    %19 = math.tanh %18 : vector<8x256xf32>
    %20 = vector.extract_strided_slice %19 {offsets = [0, 0], sizes = [8, 192], strides = [1, 1]} : vector<8x256xf32> to vector<8x192xf32>
    %cst_21 = arith.constant 5.000000e-01 : f32
    %21 = vector.broadcast %cst_21 : f32 to vector<8x192xf32>
    %22 = arith.mulf %21, %20 : vector<8x192xf32>
    %cst_22 = arith.constant 5.000000e-01 : f32
    %23 = vector.broadcast %cst_22 : f32 to vector<8x192xf32>
    %24 = arith.addf %22, %23 : vector<8x192xf32>
    %25 = vector.extract_strided_slice %24 {offsets = [0, 0], sizes = [8, 64], strides = [1, 1]} : vector<8x192xf32> to vector<8x64xf32>
    %26 = vector.extract_strided_slice %24 {offsets = [0, 64], sizes = [8, 64], strides = [1, 1]} : vector<8x192xf32> to vector<8x64xf32>
    %27 = vector.extract_strided_slice %24 {offsets = [0, 128], sizes = [8, 64], strides = [1, 1]} : vector<8x192xf32> to vector<8x64xf32>
    %28 = vector.extract_strided_slice %19 {offsets = [0, 192], sizes = [8, 64], strides = [1, 1]} : vector<8x256xf32> to vector<8x64xf32>
    %29 = arith.mulf %26, %5 : vector<8x64xf32>
    %30 = arith.mulf %25, %28 : vector<8x64xf32>
    %31 = arith.addf %29, %30 : vector<8x64xf32>
    %32 = math.tanh %31 : vector<8x64xf32>
    %33 = arith.mulf %27, %32 : vector<8x64xf32>
    %c0_23 = arith.constant 0 : index
    %c0_24 = arith.constant 0 : index
    %c0_25 = arith.constant 0 : index
    %34 = vector.load %arg5[%c0_23, %c0_24, %c0_25] : memref<1x64x256xf32, #tpu.memory_space<vmem>>, vector<1x64x256xf32>
    %35 = vector.shape_cast %34 : vector<1x64x256xf32> to vector<64x256xf32>
    %cst_26 = arith.constant dense<0.000000e+00> : vector<8x256xf32>
    %36 = tpu.matmul %33, %35, %cst_26 {dimension_numbers = #tpu.dot_dimension_numbers<[1], [0], [0], [1], [0, 0, 1, 1], [], []>} : vector<8x64xf32>, vector<64x256xf32>, vector<8x256xf32> -> vector<8x256xf32>
    %c1_27 = arith.constant 1 : index
    %c0_28 = arith.constant 0 : index
    %c0_29 = arith.constant 0 : index
    %37 = vector.load %arg6[%c1_27, %c0_28, %c0_29] : memref<2x64x256xf32, #tpu.memory_space<vmem>>, vector<1x64x256xf32>
    %38 = vector.shape_cast %37 : vector<1x64x256xf32> to vector<64x256xf32>
    %cst_30 = arith.constant dense<0.000000e+00> : vector<8x256xf32>
    %39 = tpu.matmul %3, %38, %cst_30 {dimension_numbers = #tpu.dot_dimension_numbers<[1], [0], [0], [1], [0, 0, 1, 1], [], []>} : vector<8x64xf32>, vector<64x256xf32>, vector<8x256xf32> -> vector<8x256xf32>
    %40 = arith.addf %36, %39 : vector<8x256xf32>
    %c1_31 = arith.constant 1 : index
    %c0_32 = arith.constant 0 : index
    %c0_33 = arith.constant 0 : index
    %41 = vector.load %arg7[%c1_31, %c0_32, %c0_33] : memref<2x1x256xf32, #tpu.memory_space<vmem>>, vector<1x1x256xf32>
    %42 = vector.shape_cast %41 : vector<1x1x256xf32> to vector<1x256xf32>
    %43 = vector.broadcast %42 : vector<1x256xf32> to vector<8x256xf32>
    %44 = arith.addf %40, %43 : vector<8x256xf32>
    %45 = math.tanh %44 : vector<8x256xf32>
    %46 = vector.extract_strided_slice %45 {offsets = [0, 0], sizes = [8, 192], strides = [1, 1]} : vector<8x256xf32> to vector<8x192xf32>
    %cst_34 = arith.constant 5.000000e-01 : f32
    %47 = vector.broadcast %cst_34 : f32 to vector<8x192xf32>
    %48 = arith.mulf %47, %46 : vector<8x192xf32>
    %cst_35 = arith.constant 5.000000e-01 : f32
    %49 = vector.broadcast %cst_35 : f32 to vector<8x192xf32>
    %50 = arith.addf %48, %49 : vector<8x192xf32>
    %51 = vector.extract_strided_slice %50 {offsets = [0, 0], sizes = [8, 64], strides = [1, 1]} : vector<8x192xf32> to vector<8x64xf32>
    %52 = vector.extract_strided_slice %50 {offsets = [0, 64], sizes = [8, 64], strides = [1, 1]} : vector<8x192xf32> to vector<8x64xf32>
    %53 = vector.extract_strided_slice %50 {offsets = [0, 128], sizes = [8, 64], strides = [1, 1]} : vector<8x192xf32> to vector<8x64xf32>
    %54 = vector.extract_strided_slice %45 {offsets = [0, 192], sizes = [8, 64], strides = [1, 1]} : vector<8x256xf32> to vector<8x64xf32>
    %55 = arith.mulf %52, %7 : vector<8x64xf32>
    %56 = arith.mulf %51, %54 : vector<8x64xf32>
    %57 = arith.addf %55, %56 : vector<8x64xf32>
    %58 = math.tanh %57 : vector<8x64xf32>
    %59 = arith.mulf %53, %58 : vector<8x64xf32>
    %c0_36 = arith.constant 0 : index
    %c0_37 = arith.constant 0 : index
    %60 = vector.load %arg8[%c0_36, %c0_37] : memref<64x16xf32, #tpu.memory_space<vmem>>, vector<64x16xf32>
    %cst_38 = arith.constant dense<0.000000e+00> : vector<8x16xf32>
    %61 = tpu.matmul %59, %60, %cst_38 {dimension_numbers = #tpu.dot_dimension_numbers<[1], [0], [0], [1], [0, 0, 1, 1], [], []>} : vector<8x64xf32>, vector<64x16xf32>, vector<8x16xf32> -> vector<8x16xf32>
    %c0_39 = arith.constant 0 : index
    %c0_40 = arith.constant 0 : index
    %62 = vector.load %arg9[%c0_39, %c0_40] : memref<1x16xf32, #tpu.memory_space<vmem>>, vector<1x16xf32>
    %63 = vector.broadcast %62 : vector<1x16xf32> to vector<8x16xf32>
    %64 = arith.addf %61, %63 : vector<8x16xf32>
    %65 = math.tanh %64 : vector<8x16xf32>
    %66 = arith.index_cast %c0_i32 : i32 to index
    %c0_41 = arith.constant 0 : index
    %c0_42 = arith.constant 0 : index
    %67 = vector.load %arg10[%66, %c0_41, %c0_42] : memref<8x8x16xf32, #tpu.memory_space<vmem>>, vector<1x8x16xf32>
    %68 = vector.shape_cast %67 : vector<1x8x16xf32> to vector<8x16xf32>
    %69 = vector.shape_cast %65 : vector<8x16xf32> to vector<1x8x16xf32>
    tpu.vector_store %arg10[%66, %c0_41, %c0_42], %69 {strides = array<i32>} : memref<8x8x16xf32, #tpu.memory_space<vmem>>, vector<1x8x16xf32>,
    %c1_i32 = arith.constant 1 : i32
    %c0_43 = arith.constant 0 : index
    %c0_44 = arith.constant 0 : index
    %70 = vector.load %arg4[%c0_43, %c0_44] : memref<16x256xf32, #tpu.memory_space<vmem>>, vector<16x256xf32>
    %cst_45 = arith.constant dense<0.000000e+00> : vector<8x256xf32>
    %71 = tpu.matmul %65, %70, %cst_45 {dimension_numbers = #tpu.dot_dimension_numbers<[1], [0], [0], [1], [0, 0, 1, 1], [], []>} : vector<8x16xf32>, vector<16x256xf32>, vector<8x256xf32> -> vector<8x256xf32>
    %c0_46 = arith.constant 0 : index
    %c0_47 = arith.constant 0 : index
    %c0_48 = arith.constant 0 : index
    %72 = vector.load %arg6[%c0_46, %c0_47, %c0_48] : memref<2x64x256xf32, #tpu.memory_space<vmem>>, vector<1x64x256xf32>
    %73 = vector.shape_cast %72 : vector<1x64x256xf32> to vector<64x256xf32>
    %cst_49 = arith.constant dense<0.000000e+00> : vector<8x256xf32>
    %74 = tpu.matmul %33, %73, %cst_49 {dimension_numbers = #tpu.dot_dimension_numbers<[1], [0], [0], [1], [0, 0, 1, 1], [], []>} : vector<8x64xf32>, vector<64x256xf32>, vector<8x256xf32> -> vector<8x256xf32>
    %75 = arith.addf %71, %74 : vector<8x256xf32>
    %c0_50 = arith.constant 0 : index
    %c0_51 = arith.constant 0 : index
    %c0_52 = arith.constant 0 : index
    %76 = vector.load %arg7[%c0_50, %c0_51, %c0_52] : memref<2x1x256xf32, #tpu.memory_space<vmem>>, vector<1x1x256xf32>
    %77 = vector.shape_cast %76 : vector<1x1x256xf32> to vector<1x256xf32>
    %78 = vector.broadcast %77 : vector<1x256xf32> to vector<8x256xf32>
    %79 = arith.addf %75, %78 : vector<8x256xf32>
    %80 = math.tanh %79 : vector<8x256xf32>
    %81 = vector.extract_strided_slice %80 {offsets = [0, 0], sizes = [8, 192], strides = [1, 1]} : vector<8x256xf32> to vector<8x192xf32>
    %cst_53 = arith.constant 5.000000e-01 : f32
    %82 = vector.broadcast %cst_53 : f32 to vector<8x192xf32>
    %83 = arith.mulf %82, %81 : vector<8x192xf32>
    %cst_54 = arith.constant 5.000000e-01 : f32
    %84 = vector.broadcast %cst_54 : f32 to vector<8x192xf32>
    %85 = arith.addf %83, %84 : vector<8x192xf32>
    %86 = vector.extract_strided_slice %85 {offsets = [0, 0], sizes = [8, 64], strides = [1, 1]} : vector<8x192xf32> to vector<8x64xf32>
    %87 = vector.extract_strided_slice %85 {offsets = [0, 64], sizes = [8, 64], strides = [1, 1]} : vector<8x192xf32> to vector<8x64xf32>
    %88 = vector.extract_strided_slice %85 {offsets = [0, 128], sizes = [8, 64], strides = [1, 1]} : vector<8x192xf32> to vector<8x64xf32>
    %89 = vector.extract_strided_slice %80 {offsets = [0, 192], sizes = [8, 64], strides = [1, 1]} : vector<8x256xf32> to vector<8x64xf32>
    %90 = arith.mulf %87, %31 : vector<8x64xf32>
    %91 = arith.mulf %86, %89 : vector<8x64xf32>
    %92 = arith.addf %90, %91 : vector<8x64xf32>
    %93 = math.tanh %92 : vector<8x64xf32>
    %94 = arith.mulf %88, %93 : vector<8x64xf32>
    %c0_55 = arith.constant 0 : index
    %c0_56 = arith.constant 0 : index
    %c0_57 = arith.constant 0 : index
    %95 = vector.load %arg5[%c0_55, %c0_56, %c0_57] : memref<1x64x256xf32, #tpu.memory_space<vmem>>, vector<1x64x256xf32>
    %96 = vector.shape_cast %95 : vector<1x64x256xf32> to vector<64x256xf32>
    %cst_58 = arith.constant dense<0.000000e+00> : vector<8x256xf32>
    %97 = tpu.matmul %94, %96, %cst_58 {dimension_numbers = #tpu.dot_dimension_numbers<[1], [0], [0], [1], [0, 0, 1, 1], [], []>} : vector<8x64xf32>, vector<64x256xf32>, vector<8x256xf32> -> vector<8x256xf32>
    %c1_59 = arith.constant 1 : index
    %c0_60 = arith.constant 0 : index
    %c0_61 = arith.constant 0 : index
    %98 = vector.load %arg6[%c1_59, %c0_60, %c0_61] : memref<2x64x256xf32, #tpu.memory_space<vmem>>, vector<1x64x256xf32>
    %99 = vector.shape_cast %98 : vector<1x64x256xf32> to vector<64x256xf32>
    %cst_62 = arith.constant dense<0.000000e+00> : vector<8x256xf32>
    %100 = tpu.matmul %59, %99, %cst_62 {dimension_numbers = #tpu.dot_dimension_numbers<[1], [0], [0], [1], [0, 0, 1, 1], [], []>} : vector<8x64xf32>, vector<64x256xf32>, vector<8x256xf32> -> vector<8x256xf32>
    %101 = arith.addf %97, %100 : vector<8x256xf32>
    %c1_63 = arith.constant 1 : index
    %c0_64 = arith.constant 0 : index
    %c0_65 = arith.constant 0 : index
    %102 = vector.load %arg7[%c1_63, %c0_64, %c0_65] : memref<2x1x256xf32, #tpu.memory_space<vmem>>, vector<1x1x256xf32>
    %103 = vector.shape_cast %102 : vector<1x1x256xf32> to vector<1x256xf32>
    %104 = vector.broadcast %103 : vector<1x256xf32> to vector<8x256xf32>
    %105 = arith.addf %101, %104 : vector<8x256xf32>
    %106 = math.tanh %105 : vector<8x256xf32>
    %107 = vector.extract_strided_slice %106 {offsets = [0, 0], sizes = [8, 192], strides = [1, 1]} : vector<8x256xf32> to vector<8x192xf32>
    %cst_66 = arith.constant 5.000000e-01 : f32
    %108 = vector.broadcast %cst_66 : f32 to vector<8x192xf32>
    %109 = arith.mulf %108, %107 : vector<8x192xf32>
    %cst_67 = arith.constant 5.000000e-01 : f32
    %110 = vector.broadcast %cst_67 : f32 to vector<8x192xf32>
    %111 = arith.addf %109, %110 : vector<8x192xf32>
    %112 = vector.extract_strided_slice %111 {offsets = [0, 0], sizes = [8, 64], strides = [1, 1]} : vector<8x192xf32> to vector<8x64xf32>
    %113 = vector.extract_strided_slice %111 {offsets = [0, 64], sizes = [8, 64], strides = [1, 1]} : vector<8x192xf32> to vector<8x64xf32>
    %114 = vector.extract_strided_slice %111 {offsets = [0, 128], sizes = [8, 64], strides = [1, 1]} : vector<8x192xf32> to vector<8x64xf32>
    %115 = vector.extract_strided_slice %106 {offsets = [0, 192], sizes = [8, 64], strides = [1, 1]} : vector<8x256xf32> to vector<8x64xf32>
    %116 = arith.mulf %113, %57 : vector<8x64xf32>
    %117 = arith.mulf %112, %115 : vector<8x64xf32>
    %118 = arith.addf %116, %117 : vector<8x64xf32>
    %119 = math.tanh %118 : vector<8x64xf32>
    %120 = arith.mulf %114, %119 : vector<8x64xf32>
    %c0_68 = arith.constant 0 : index
    %c0_69 = arith.constant 0 : index
    %121 = vector.load %arg8[%c0_68, %c0_69] : memref<64x16xf32, #tpu.memory_space<vmem>>, vector<64x16xf32>
    %cst_70 = arith.constant dense<0.000000e+00> : vector<8x16xf32>
    %122 = tpu.matmul %120, %121, %cst_70 {dimension_numbers = #tpu.dot_dimension_numbers<[1], [0], [0], [1], [0, 0, 1, 1], [], []>} : vector<8x64xf32>, vector<64x16xf32>, vector<8x16xf32> -> vector<8x16xf32>
    %c0_71 = arith.constant 0 : index
    %c0_72 = arith.constant 0 : index
    %123 = vector.load %arg9[%c0_71, %c0_72] : memref<1x16xf32, #tpu.memory_space<vmem>>, vector<1x16xf32>
    %124 = vector.broadcast %123 : vector<1x16xf32> to vector<8x16xf32>
    %125 = arith.addf %122, %124 : vector<8x16xf32>
    %126 = math.tanh %125 : vector<8x16xf32>
    %127 = arith.index_cast %c1_i32 : i32 to index
    %c0_73 = arith.constant 0 : index
    %c0_74 = arith.constant 0 : index
    %128 = vector.load %arg10[%127, %c0_73, %c0_74] : memref<8x8x16xf32, #tpu.memory_space<vmem>>, vector<1x8x16xf32>
    %129 = vector.shape_cast %128 : vector<1x8x16xf32> to vector<8x16xf32>
    %130 = vector.shape_cast %126 : vector<8x16xf32> to vector<1x8x16xf32>
    tpu.vector_store %arg10[%127, %c0_73, %c0_74], %130 {strides = array<i32>} : memref<8x8x16xf32, #tpu.memory_space<vmem>>, vector<1x8x16xf32>,
    %c2_i32 = arith.constant 2 : i32
    %c0_75 = arith.constant 0 : index
    %c0_76 = arith.constant 0 : index
    %131 = vector.load %arg4[%c0_75, %c0_76] : memref<16x256xf32, #tpu.memory_space<vmem>>, vector<16x256xf32>
    %cst_77 = arith.constant dense<0.000000e+00> : vector<8x256xf32>
    %132 = tpu.matmul %126, %131, %cst_77 {dimension_numbers = #tpu.dot_dimension_numbers<[1], [0], [0], [1], [0, 0, 1, 1], [], []>} : vector<8x16xf32>, vector<16x256xf32>, vector<8x256xf32> -> vector<8x256xf32>
    %c0_78 = arith.constant 0 : index
    %c0_79 = arith.constant 0 : index
    %c0_80 = arith.constant 0 : index
    %133 = vector.load %arg6[%c0_78, %c0_79, %c0_80] : memref<2x64x256xf32, #tpu.memory_space<vmem>>, vector<1x64x256xf32>
    %134 = vector.shape_cast %133 : vector<1x64x256xf32> to vector<64x256xf32>
    %cst_81 = arith.constant dense<0.000000e+00> : vector<8x256xf32>
    %135 = tpu.matmul %94, %134, %cst_81 {dimension_numbers = #tpu.dot_dimension_numbers<[1], [0], [0], [1], [0, 0, 1, 1], [], []>} : vector<8x64xf32>, vector<64x256xf32>, vector<8x256xf32> -> vector<8x256xf32>
    %136 = arith.addf %132, %135 : vector<8x256xf32>
    %c0_82 = arith.constant 0 : index
    %c0_83 = arith.constant 0 : index
    %c0_84 = arith.constant 0 : index
    %137 = vector.load %arg7[%c0_82, %c0_83, %c0_84] : memref<2x1x256xf32, #tpu.memory_space<vmem>>, vector<1x1x256xf32>
    %138 = vector.shape_cast %137 : vector<1x1x256xf32> to vector<1x256xf32>
    %139 = vector.broadcast %138 : vector<1x256xf32> to vector<8x256xf32>
    %140 = arith.addf %136, %139 : vector<8x256xf32>
    %141 = math.tanh %140 : vector<8x256xf32>
    %142 = vector.extract_strided_slice %141 {offsets = [0, 0], sizes = [8, 192], strides = [1, 1]} : vector<8x256xf32> to vector<8x192xf32>
    %cst_85 = arith.constant 5.000000e-01 : f32
    %143 = vector.broadcast %cst_85 : f32 to vector<8x192xf32>
    %144 = arith.mulf %143, %142 : vector<8x192xf32>
    %cst_86 = arith.constant 5.000000e-01 : f32
    %145 = vector.broadcast %cst_86 : f32 to vector<8x192xf32>
    %146 = arith.addf %144, %145 : vector<8x192xf32>
    %147 = vector.extract_strided_slice %146 {offsets = [0, 0], sizes = [8, 64], strides = [1, 1]} : vector<8x192xf32> to vector<8x64xf32>
    %148 = vector.extract_strided_slice %146 {offsets = [0, 64], sizes = [8, 64], strides = [1, 1]} : vector<8x192xf32> to vector<8x64xf32>
    %149 = vector.extract_strided_slice %146 {offsets = [0, 128], sizes = [8, 64], strides = [1, 1]} : vector<8x192xf32> to vector<8x64xf32>
    %150 = vector.extract_strided_slice %141 {offsets = [0, 192], sizes = [8, 64], strides = [1, 1]} : vector<8x256xf32> to vector<8x64xf32>
    %151 = arith.mulf %148, %92 : vector<8x64xf32>
    %152 = arith.mulf %147, %150 : vector<8x64xf32>
    %153 = arith.addf %151, %152 : vector<8x64xf32>
    %154 = math.tanh %153 : vector<8x64xf32>
    %155 = arith.mulf %149, %154 : vector<8x64xf32>
    %c0_87 = arith.constant 0 : index
    %c0_88 = arith.constant 0 : index
    %c0_89 = arith.constant 0 : index
    %156 = vector.load %arg5[%c0_87, %c0_88, %c0_89] : memref<1x64x256xf32, #tpu.memory_space<vmem>>, vector<1x64x256xf32>
    %157 = vector.shape_cast %156 : vector<1x64x256xf32> to vector<64x256xf32>
    %cst_90 = arith.constant dense<0.000000e+00> : vector<8x256xf32>
    %158 = tpu.matmul %155, %157, %cst_90 {dimension_numbers = #tpu.dot_dimension_numbers<[1], [0], [0], [1], [0, 0, 1, 1], [], []>} : vector<8x64xf32>, vector<64x256xf32>, vector<8x256xf32> -> vector<8x256xf32>
    %c1_91 = arith.constant 1 : index
    %c0_92 = arith.constant 0 : index
    %c0_93 = arith.constant 0 : index
    %159 = vector.load %arg6[%c1_91, %c0_92, %c0_93] : memref<2x64x256xf32, #tpu.memory_space<vmem>>, vector<1x64x256xf32>
    %160 = vector.shape_cast %159 : vector<1x64x256xf32> to vector<64x256xf32>
    %cst_94 = arith.constant dense<0.000000e+00> : vector<8x256xf32>
    %161 = tpu.matmul %120, %160, %cst_94 {dimension_numbers = #tpu.dot_dimension_numbers<[1], [0], [0], [1], [0, 0, 1, 1], [], []>} : vector<8x64xf32>, vector<64x256xf32>, vector<8x256xf32> -> vector<8x256xf32>
    %162 = arith.addf %158, %161 : vector<8x256xf32>
    %c1_95 = arith.constant 1 : index
    %c0_96 = arith.constant 0 : index
    %c0_97 = arith.constant 0 : index
    %163 = vector.load %arg7[%c1_95, %c0_96, %c0_97] : memref<2x1x256xf32, #tpu.memory_space<vmem>>, vector<1x1x256xf32>
    %164 = vector.shape_cast %163 : vector<1x1x256xf32> to vector<1x256xf32>
    %165 = vector.broadcast %164 : vector<1x256xf32> to vector<8x256xf32>
    %166 = arith.addf %162, %165 : vector<8x256xf32>
    %167 = math.tanh %166 : vector<8x256xf32>
    %168 = vector.extract_strided_slice %167 {offsets = [0, 0], sizes = [8, 192], strides = [1, 1]} : vector<8x256xf32> to vector<8x192xf32>
    %cst_98 = arith.constant 5.000000e-01 : f32
    %169 = vector.broadcast %cst_98 : f32 to vector<8x192xf32>
    %170 = arith.mulf %169, %168 : vector<8x192xf32>
    %cst_99 = arith.constant 5.000000e-01 : f32
    %171 = vector.broadcast %cst_99 : f32 to vector<8x192xf32>
    %172 = arith.addf %170, %171 : vector<8x192xf32>
    %173 = vector.extract_strided_slice %172 {offsets = [0, 0], sizes = [8, 64], strides = [1, 1]} : vector<8x192xf32> to vector<8x64xf32>
    %174 = vector.extract_strided_slice %172 {offsets = [0, 64], sizes = [8, 64], strides = [1, 1]} : vector<8x192xf32> to vector<8x64xf32>
    %175 = vector.extract_strided_slice %172 {offsets = [0, 128], sizes = [8, 64], strides = [1, 1]} : vector<8x192xf32> to vector<8x64xf32>
    %176 = vector.extract_strided_slice %167 {offsets = [0, 192], sizes = [8, 64], strides = [1, 1]} : vector<8x256xf32> to vector<8x64xf32>
    %177 = arith.mulf %174, %118 : vector<8x64xf32>
    %178 = arith.mulf %173, %176 : vector<8x64xf32>
    %179 = arith.addf %177, %178 : vector<8x64xf32>
    %180 = math.tanh %179 : vector<8x64xf32>
    %181 = arith.mulf %175, %180 : vector<8x64xf32>
    %c0_100 = arith.constant 0 : index
    %c0_101 = arith.constant 0 : index
    %182 = vector.load %arg8[%c0_100, %c0_101] : memref<64x16xf32, #tpu.memory_space<vmem>>, vector<64x16xf32>
    %cst_102 = arith.constant dense<0.000000e+00> : vector<8x16xf32>
    %183 = tpu.matmul %181, %182, %cst_102 {dimension_numbers = #tpu.dot_dimension_numbers<[1], [0], [0], [1], [0, 0, 1, 1], [], []>} : vector<8x64xf32>, vector<64x16xf32>, vector<8x16xf32> -> vector<8x16xf32>
    %c0_103 = arith.constant 0 : index
    %c0_104 = arith.constant 0 : index
    %184 = vector.load %arg9[%c0_103, %c0_104] : memref<1x16xf32, #tpu.memory_space<vmem>>, vector<1x16xf32>
    %185 = vector.broadcast %184 : vector<1x16xf32> to vector<8x16xf32>
    %186 = arith.addf %183, %185 : vector<8x16xf32>
    %187 = math.tanh %186 : vector<8x16xf32>
    %188 = arith.index_cast %c2_i32 : i32 to index
    %c0_105 = arith.constant 0 : index
    %c0_106 = arith.constant 0 : index
    %189 = vector.load %arg10[%188, %c0_105, %c0_106] : memref<8x8x16xf32, #tpu.memory_space<vmem>>, vector<1x8x16xf32>
    %190 = vector.shape_cast %189 : vector<1x8x16xf32> to vector<8x16xf32>
    %191 = vector.shape_cast %187 : vector<8x16xf32> to vector<1x8x16xf32>
    tpu.vector_store %arg10[%188, %c0_105, %c0_106], %191 {strides = array<i32>} : memref<8x8x16xf32, #tpu.memory_space<vmem>>, vector<1x8x16xf32>,
    %c3_i32 = arith.constant 3 : i32
    %c0_107 = arith.constant 0 : index
    %c0_108 = arith.constant 0 : index
    %192 = vector.load %arg4[%c0_107, %c0_108] : memref<16x256xf32, #tpu.memory_space<vmem>>, vector<16x256xf32>
    %cst_109 = arith.constant dense<0.000000e+00> : vector<8x256xf32>
    %193 = tpu.matmul %187, %192, %cst_109 {dimension_numbers = #tpu.dot_dimension_numbers<[1], [0], [0], [1], [0, 0, 1, 1], [], []>} : vector<8x16xf32>, vector<16x256xf32>, vector<8x256xf32> -> vector<8x256xf32>
    %c0_110 = arith.constant 0 : index
    %c0_111 = arith.constant 0 : index
    %c0_112 = arith.constant 0 : index
    %194 = vector.load %arg6[%c0_110, %c0_111, %c0_112] : memref<2x64x256xf32, #tpu.memory_space<vmem>>, vector<1x64x256xf32>
    %195 = vector.shape_cast %194 : vector<1x64x256xf32> to vector<64x256xf32>
    %cst_113 = arith.constant dense<0.000000e+00> : vector<8x256xf32>
    %196 = tpu.matmul %155, %195, %cst_113 {dimension_numbers = #tpu.dot_dimension_numbers<[1], [0], [0], [1], [0, 0, 1, 1], [], []>} : vector<8x64xf32>, vector<64x256xf32>, vector<8x256xf32> -> vector<8x256xf32>
    %197 = arith.addf %193, %196 : vector<8x256xf32>
    %c0_114 = arith.constant 0 : index
    %c0_115 = arith.constant 0 : index
    %c0_116 = arith.constant 0 : index
    %198 = vector.load %arg7[%c0_114, %c0_115, %c0_116] : memref<2x1x256xf32, #tpu.memory_space<vmem>>, vector<1x1x256xf32>
    %199 = vector.shape_cast %198 : vector<1x1x256xf32> to vector<1x256xf32>
    %200 = vector.broadcast %199 : vector<1x256xf32> to vector<8x256xf32>
    %201 = arith.addf %197, %200 : vector<8x256xf32>
    %202 = math.tanh %201 : vector<8x256xf32>
    %203 = vector.extract_strided_slice %202 {offsets = [0, 0], sizes = [8, 192], strides = [1, 1]} : vector<8x256xf32> to vector<8x192xf32>
    %cst_117 = arith.constant 5.000000e-01 : f32
    %204 = vector.broadcast %cst_117 : f32 to vector<8x192xf32>
    %205 = arith.mulf %204, %203 : vector<8x192xf32>
    %cst_118 = arith.constant 5.000000e-01 : f32
    %206 = vector.broadcast %cst_118 : f32 to vector<8x192xf32>
    %207 = arith.addf %205, %206 : vector<8x192xf32>
    %208 = vector.extract_strided_slice %207 {offsets = [0, 0], sizes = [8, 64], strides = [1, 1]} : vector<8x192xf32> to vector<8x64xf32>
    %209 = vector.extract_strided_slice %207 {offsets = [0, 64], sizes = [8, 64], strides = [1, 1]} : vector<8x192xf32> to vector<8x64xf32>
    %210 = vector.extract_strided_slice %207 {offsets = [0, 128], sizes = [8, 64], strides = [1, 1]} : vector<8x192xf32> to vector<8x64xf32>
    %211 = vector.extract_strided_slice %202 {offsets = [0, 192], sizes = [8, 64], strides = [1, 1]} : vector<8x256xf32> to vector<8x64xf32>
    %212 = arith.mulf %209, %153 : vector<8x64xf32>
    %213 = arith.mulf %208, %211 : vector<8x64xf32>
    %214 = arith.addf %212, %213 : vector<8x64xf32>
    %215 = math.tanh %214 : vector<8x64xf32>
    %216 = arith.mulf %210, %215 : vector<8x64xf32>
    %c0_119 = arith.constant 0 : index
    %c0_120 = arith.constant 0 : index
    %c0_121 = arith.constant 0 : index
    %217 = vector.load %arg5[%c0_119, %c0_120, %c0_121] : memref<1x64x256xf32, #tpu.memory_space<vmem>>, vector<1x64x256xf32>
    %218 = vector.shape_cast %217 : vector<1x64x256xf32> to vector<64x256xf32>
    %cst_122 = arith.constant dense<0.000000e+00> : vector<8x256xf32>
    %219 = tpu.matmul %216, %218, %cst_122 {dimension_numbers = #tpu.dot_dimension_numbers<[1], [0], [0], [1], [0, 0, 1, 1], [], []>} : vector<8x64xf32>, vector<64x256xf32>, vector<8x256xf32> -> vector<8x256xf32>
    %c1_123 = arith.constant 1 : index
    %c0_124 = arith.constant 0 : index
    %c0_125 = arith.constant 0 : index
    %220 = vector.load %arg6[%c1_123, %c0_124, %c0_125] : memref<2x64x256xf32, #tpu.memory_space<vmem>>, vector<1x64x256xf32>
    %221 = vector.shape_cast %220 : vector<1x64x256xf32> to vector<64x256xf32>
    %cst_126 = arith.constant dense<0.000000e+00> : vector<8x256xf32>
    %222 = tpu.matmul %181, %221, %cst_126 {dimension_numbers = #tpu.dot_dimension_numbers<[1], [0], [0], [1], [0, 0, 1, 1], [], []>} : vector<8x64xf32>, vector<64x256xf32>, vector<8x256xf32> -> vector<8x256xf32>
    %223 = arith.addf %219, %222 : vector<8x256xf32>
    %c1_127 = arith.constant 1 : index
    %c0_128 = arith.constant 0 : index
    %c0_129 = arith.constant 0 : index
    %224 = vector.load %arg7[%c1_127, %c0_128, %c0_129] : memref<2x1x256xf32, #tpu.memory_space<vmem>>, vector<1x1x256xf32>
    %225 = vector.shape_cast %224 : vector<1x1x256xf32> to vector<1x256xf32>
    %226 = vector.broadcast %225 : vector<1x256xf32> to vector<8x256xf32>
    %227 = arith.addf %223, %226 : vector<8x256xf32>
    %228 = math.tanh %227 : vector<8x256xf32>
    %229 = vector.extract_strided_slice %228 {offsets = [0, 0], sizes = [8, 192], strides = [1, 1]} : vector<8x256xf32> to vector<8x192xf32>
    %cst_130 = arith.constant 5.000000e-01 : f32
    %230 = vector.broadcast %cst_130 : f32 to vector<8x192xf32>
    %231 = arith.mulf %230, %229 : vector<8x192xf32>
    %cst_131 = arith.constant 5.000000e-01 : f32
    %232 = vector.broadcast %cst_131 : f32 to vector<8x192xf32>
    %233 = arith.addf %231, %232 : vector<8x192xf32>
    %234 = vector.extract_strided_slice %233 {offsets = [0, 0], sizes = [8, 64], strides = [1, 1]} : vector<8x192xf32> to vector<8x64xf32>
    %235 = vector.extract_strided_slice %233 {offsets = [0, 64], sizes = [8, 64], strides = [1, 1]} : vector<8x192xf32> to vector<8x64xf32>
    %236 = vector.extract_strided_slice %233 {offsets = [0, 128], sizes = [8, 64], strides = [1, 1]} : vector<8x192xf32> to vector<8x64xf32>
    %237 = vector.extract_strided_slice %228 {offsets = [0, 192], sizes = [8, 64], strides = [1, 1]} : vector<8x256xf32> to vector<8x64xf32>
    %238 = arith.mulf %235, %179 : vector<8x64xf32>
    %239 = arith.mulf %234, %237 : vector<8x64xf32>
    %240 = arith.addf %238, %239 : vector<8x64xf32>
    %241 = math.tanh %240 : vector<8x64xf32>
    %242 = arith.mulf %236, %241 : vector<8x64xf32>
    %c0_132 = arith.constant 0 : index
    %c0_133 = arith.constant 0 : index
    %243 = vector.load %arg8[%c0_132, %c0_133] : memref<64x16xf32, #tpu.memory_space<vmem>>, vector<64x16xf32>
    %cst_134 = arith.constant dense<0.000000e+00> : vector<8x16xf32>
    %244 = tpu.matmul %242, %243, %cst_134 {dimension_numbers = #tpu.dot_dimension_numbers<[1], [0], [0], [1], [0, 0, 1, 1], [], []>} : vector<8x64xf32>, vector<64x16xf32>, vector<8x16xf32> -> vector<8x16xf32>
    %c0_135 = arith.constant 0 : index
    %c0_136 = arith.constant 0 : index
    %245 = vector.load %arg9[%c0_135, %c0_136] : memref<1x16xf32, #tpu.memory_space<vmem>>, vector<1x16xf32>
    %246 = vector.broadcast %245 : vector<1x16xf32> to vector<8x16xf32>
    %247 = arith.addf %244, %246 : vector<8x16xf32>
    %248 = math.tanh %247 : vector<8x16xf32>
    %249 = arith.index_cast %c3_i32 : i32 to index
    %c0_137 = arith.constant 0 : index
    %c0_138 = arith.constant 0 : index
    %250 = vector.load %arg10[%249, %c0_137, %c0_138] : memref<8x8x16xf32, #tpu.memory_space<vmem>>, vector<1x8x16xf32>
    %251 = vector.shape_cast %250 : vector<1x8x16xf32> to vector<8x16xf32>
    %252 = vector.shape_cast %248 : vector<8x16xf32> to vector<1x8x16xf32>
    tpu.vector_store %arg10[%249, %c0_137, %c0_138], %252 {strides = array<i32>} : memref<8x8x16xf32, #tpu.memory_space<vmem>>, vector<1x8x16xf32>,
    %c4_i32 = arith.constant 4 : i32
    %c0_139 = arith.constant 0 : index
    %c0_140 = arith.constant 0 : index
    %253 = vector.load %arg4[%c0_139, %c0_140] : memref<16x256xf32, #tpu.memory_space<vmem>>, vector<16x256xf32>
    %cst_141 = arith.constant dense<0.000000e+00> : vector<8x256xf32>
    %254 = tpu.matmul %248, %253, %cst_141 {dimension_numbers = #tpu.dot_dimension_numbers<[1], [0], [0], [1], [0, 0, 1, 1], [], []>} : vector<8x16xf32>, vector<16x256xf32>, vector<8x256xf32> -> vector<8x256xf32>
    %c0_142 = arith.constant 0 : index
    %c0_143 = arith.constant 0 : index
    %c0_144 = arith.constant 0 : index
    %255 = vector.load %arg6[%c0_142, %c0_143, %c0_144] : memref<2x64x256xf32, #tpu.memory_space<vmem>>, vector<1x64x256xf32>
    %256 = vector.shape_cast %255 : vector<1x64x256xf32> to vector<64x256xf32>
    %cst_145 = arith.constant dense<0.000000e+00> : vector<8x256xf32>
    %257 = tpu.matmul %216, %256, %cst_145 {dimension_numbers = #tpu.dot_dimension_numbers<[1], [0], [0], [1], [0, 0, 1, 1], [], []>} : vector<8x64xf32>, vector<64x256xf32>, vector<8x256xf32> -> vector<8x256xf32>
    %258 = arith.addf %254, %257 : vector<8x256xf32>
    %c0_146 = arith.constant 0 : index
    %c0_147 = arith.constant 0 : index
    %c0_148 = arith.constant 0 : index
    %259 = vector.load %arg7[%c0_146, %c0_147, %c0_148] : memref<2x1x256xf32, #tpu.memory_space<vmem>>, vector<1x1x256xf32>
    %260 = vector.shape_cast %259 : vector<1x1x256xf32> to vector<1x256xf32>
    %261 = vector.broadcast %260 : vector<1x256xf32> to vector<8x256xf32>
    %262 = arith.addf %258, %261 : vector<8x256xf32>
    %263 = math.tanh %262 : vector<8x256xf32>
    %264 = vector.extract_strided_slice %263 {offsets = [0, 0], sizes = [8, 192], strides = [1, 1]} : vector<8x256xf32> to vector<8x192xf32>
    %cst_149 = arith.constant 5.000000e-01 : f32
    %265 = vector.broadcast %cst_149 : f32 to vector<8x192xf32>
    %266 = arith.mulf %265, %264 : vector<8x192xf32>
    %cst_150 = arith.constant 5.000000e-01 : f32
    %267 = vector.broadcast %cst_150 : f32 to vector<8x192xf32>
    %268 = arith.addf %266, %267 : vector<8x192xf32>
    %269 = vector.extract_strided_slice %268 {offsets = [0, 0], sizes = [8, 64], strides = [1, 1]} : vector<8x192xf32> to vector<8x64xf32>
    %270 = vector.extract_strided_slice %268 {offsets = [0, 64], sizes = [8, 64], strides = [1, 1]} : vector<8x192xf32> to vector<8x64xf32>
    %271 = vector.extract_strided_slice %268 {offsets = [0, 128], sizes = [8, 64], strides = [1, 1]} : vector<8x192xf32> to vector<8x64xf32>
    %272 = vector.extract_strided_slice %263 {offsets = [0, 192], sizes = [8, 64], strides = [1, 1]} : vector<8x256xf32> to vector<8x64xf32>
    %273 = arith.mulf %270, %214 : vector<8x64xf32>
    %274 = arith.mulf %269, %272 : vector<8x64xf32>
    %275 = arith.addf %273, %274 : vector<8x64xf32>
    %276 = math.tanh %275 : vector<8x64xf32>
    %277 = arith.mulf %271, %276 : vector<8x64xf32>
    %c0_151 = arith.constant 0 : index
    %c0_152 = arith.constant 0 : index
    %c0_153 = arith.constant 0 : index
    %278 = vector.load %arg5[%c0_151, %c0_152, %c0_153] : memref<1x64x256xf32, #tpu.memory_space<vmem>>, vector<1x64x256xf32>
    %279 = vector.shape_cast %278 : vector<1x64x256xf32> to vector<64x256xf32>
    %cst_154 = arith.constant dense<0.000000e+00> : vector<8x256xf32>
    %280 = tpu.matmul %277, %279, %cst_154 {dimension_numbers = #tpu.dot_dimension_numbers<[1], [0], [0], [1], [0, 0, 1, 1], [], []>} : vector<8x64xf32>, vector<64x256xf32>, vector<8x256xf32> -> vector<8x256xf32>
    %c1_155 = arith.constant 1 : index
    %c0_156 = arith.constant 0 : index
    %c0_157 = arith.constant 0 : index
    %281 = vector.load %arg6[%c1_155, %c0_156, %c0_157] : memref<2x64x256xf32, #tpu.memory_space<vmem>>, vector<1x64x256xf32>
    %282 = vector.shape_cast %281 : vector<1x64x256xf32> to vector<64x256xf32>
    %cst_158 = arith.constant dense<0.000000e+00> : vector<8x256xf32>
    %283 = tpu.matmul %242, %282, %cst_158 {dimension_numbers = #tpu.dot_dimension_numbers<[1], [0], [0], [1], [0, 0, 1, 1], [], []>} : vector<8x64xf32>, vector<64x256xf32>, vector<8x256xf32> -> vector<8x256xf32>
    %284 = arith.addf %280, %283 : vector<8x256xf32>
    %c1_159 = arith.constant 1 : index
    %c0_160 = arith.constant 0 : index
    %c0_161 = arith.constant 0 : index
    %285 = vector.load %arg7[%c1_159, %c0_160, %c0_161] : memref<2x1x256xf32, #tpu.memory_space<vmem>>, vector<1x1x256xf32>
    %286 = vector.shape_cast %285 : vector<1x1x256xf32> to vector<1x256xf32>
    %287 = vector.broadcast %286 : vector<1x256xf32> to vector<8x256xf32>
    %288 = arith.addf %284, %287 : vector<8x256xf32>
    %289 = math.tanh %288 : vector<8x256xf32>
    %290 = vector.extract_strided_slice %289 {offsets = [0, 0], sizes = [8, 192], strides = [1, 1]} : vector<8x256xf32> to vector<8x192xf32>
    %cst_162 = arith.constant 5.000000e-01 : f32
    %291 = vector.broadcast %cst_162 : f32 to vector<8x192xf32>
    %292 = arith.mulf %291, %290 : vector<8x192xf32>
    %cst_163 = arith.constant 5.000000e-01 : f32
    %293 = vector.broadcast %cst_163 : f32 to vector<8x192xf32>
    %294 = arith.addf %292, %293 : vector<8x192xf32>
    %295 = vector.extract_strided_slice %294 {offsets = [0, 0], sizes = [8, 64], strides = [1, 1]} : vector<8x192xf32> to vector<8x64xf32>
    %296 = vector.extract_strided_slice %294 {offsets = [0, 64], sizes = [8, 64], strides = [1, 1]} : vector<8x192xf32> to vector<8x64xf32>
    %297 = vector.extract_strided_slice %294 {offsets = [0, 128], sizes = [8, 64], strides = [1, 1]} : vector<8x192xf32> to vector<8x64xf32>
    %298 = vector.extract_strided_slice %289 {offsets = [0, 192], sizes = [8, 64], strides = [1, 1]} : vector<8x256xf32> to vector<8x64xf32>
    %299 = arith.mulf %296, %240 : vector<8x64xf32>
    %300 = arith.mulf %295, %298 : vector<8x64xf32>
    %301 = arith.addf %299, %300 : vector<8x64xf32>
    %302 = math.tanh %301 : vector<8x64xf32>
    %303 = arith.mulf %297, %302 : vector<8x64xf32>
    %c0_164 = arith.constant 0 : index
    %c0_165 = arith.constant 0 : index
    %304 = vector.load %arg8[%c0_164, %c0_165] : memref<64x16xf32, #tpu.memory_space<vmem>>, vector<64x16xf32>
    %cst_166 = arith.constant dense<0.000000e+00> : vector<8x16xf32>
    %305 = tpu.matmul %303, %304, %cst_166 {dimension_numbers = #tpu.dot_dimension_numbers<[1], [0], [0], [1], [0, 0, 1, 1], [], []>} : vector<8x64xf32>, vector<64x16xf32>, vector<8x16xf32> -> vector<8x16xf32>
    %c0_167 = arith.constant 0 : index
    %c0_168 = arith.constant 0 : index
    %306 = vector.load %arg9[%c0_167, %c0_168] : memref<1x16xf32, #tpu.memory_space<vmem>>, vector<1x16xf32>
    %307 = vector.broadcast %306 : vector<1x16xf32> to vector<8x16xf32>
    %308 = arith.addf %305, %307 : vector<8x16xf32>
    %309 = math.tanh %308 : vector<8x16xf32>
    %310 = arith.index_cast %c4_i32 : i32 to index
    %c0_169 = arith.constant 0 : index
    %c0_170 = arith.constant 0 : index
    %311 = vector.load %arg10[%310, %c0_169, %c0_170] : memref<8x8x16xf32, #tpu.memory_space<vmem>>, vector<1x8x16xf32>
    %312 = vector.shape_cast %311 : vector<1x8x16xf32> to vector<8x16xf32>
    %313 = vector.shape_cast %309 : vector<8x16xf32> to vector<1x8x16xf32>
    tpu.vector_store %arg10[%310, %c0_169, %c0_170], %313 {strides = array<i32>} : memref<8x8x16xf32, #tpu.memory_space<vmem>>, vector<1x8x16xf32>,
    %c5_i32 = arith.constant 5 : i32
    %c0_171 = arith.constant 0 : index
    %c0_172 = arith.constant 0 : index
    %314 = vector.load %arg4[%c0_171, %c0_172] : memref<16x256xf32, #tpu.memory_space<vmem>>, vector<16x256xf32>
    %cst_173 = arith.constant dense<0.000000e+00> : vector<8x256xf32>
    %315 = tpu.matmul %309, %314, %cst_173 {dimension_numbers = #tpu.dot_dimension_numbers<[1], [0], [0], [1], [0, 0, 1, 1], [], []>} : vector<8x16xf32>, vector<16x256xf32>, vector<8x256xf32> -> vector<8x256xf32>
    %c0_174 = arith.constant 0 : index
    %c0_175 = arith.constant 0 : index
    %c0_176 = arith.constant 0 : index
    %316 = vector.load %arg6[%c0_174, %c0_175, %c0_176] : memref<2x64x256xf32, #tpu.memory_space<vmem>>, vector<1x64x256xf32>
    %317 = vector.shape_cast %316 : vector<1x64x256xf32> to vector<64x256xf32>
    %cst_177 = arith.constant dense<0.000000e+00> : vector<8x256xf32>
    %318 = tpu.matmul %277, %317, %cst_177 {dimension_numbers = #tpu.dot_dimension_numbers<[1], [0], [0], [1], [0, 0, 1, 1], [], []>} : vector<8x64xf32>, vector<64x256xf32>, vector<8x256xf32> -> vector<8x256xf32>
    %319 = arith.addf %315, %318 : vector<8x256xf32>
    %c0_178 = arith.constant 0 : index
    %c0_179 = arith.constant 0 : index
    %c0_180 = arith.constant 0 : index
    %320 = vector.load %arg7[%c0_178, %c0_179, %c0_180] : memref<2x1x256xf32, #tpu.memory_space<vmem>>, vector<1x1x256xf32>
    %321 = vector.shape_cast %320 : vector<1x1x256xf32> to vector<1x256xf32>
    %322 = vector.broadcast %321 : vector<1x256xf32> to vector<8x256xf32>
    %323 = arith.addf %319, %322 : vector<8x256xf32>
    %324 = math.tanh %323 : vector<8x256xf32>
    %325 = vector.extract_strided_slice %324 {offsets = [0, 0], sizes = [8, 192], strides = [1, 1]} : vector<8x256xf32> to vector<8x192xf32>
    %cst_181 = arith.constant 5.000000e-01 : f32
    %326 = vector.broadcast %cst_181 : f32 to vector<8x192xf32>
    %327 = arith.mulf %326, %325 : vector<8x192xf32>
    %cst_182 = arith.constant 5.000000e-01 : f32
    %328 = vector.broadcast %cst_182 : f32 to vector<8x192xf32>
    %329 = arith.addf %327, %328 : vector<8x192xf32>
    %330 = vector.extract_strided_slice %329 {offsets = [0, 0], sizes = [8, 64], strides = [1, 1]} : vector<8x192xf32> to vector<8x64xf32>
    %331 = vector.extract_strided_slice %329 {offsets = [0, 64], sizes = [8, 64], strides = [1, 1]} : vector<8x192xf32> to vector<8x64xf32>
    %332 = vector.extract_strided_slice %329 {offsets = [0, 128], sizes = [8, 64], strides = [1, 1]} : vector<8x192xf32> to vector<8x64xf32>
    %333 = vector.extract_strided_slice %324 {offsets = [0, 192], sizes = [8, 64], strides = [1, 1]} : vector<8x256xf32> to vector<8x64xf32>
    %334 = arith.mulf %331, %275 : vector<8x64xf32>
    %335 = arith.mulf %330, %333 : vector<8x64xf32>
    %336 = arith.addf %334, %335 : vector<8x64xf32>
    %337 = math.tanh %336 : vector<8x64xf32>
    %338 = arith.mulf %332, %337 : vector<8x64xf32>
    %c0_183 = arith.constant 0 : index
    %c0_184 = arith.constant 0 : index
    %c0_185 = arith.constant 0 : index
    %339 = vector.load %arg5[%c0_183, %c0_184, %c0_185] : memref<1x64x256xf32, #tpu.memory_space<vmem>>, vector<1x64x256xf32>
    %340 = vector.shape_cast %339 : vector<1x64x256xf32> to vector<64x256xf32>
    %cst_186 = arith.constant dense<0.000000e+00> : vector<8x256xf32>
    %341 = tpu.matmul %338, %340, %cst_186 {dimension_numbers = #tpu.dot_dimension_numbers<[1], [0], [0], [1], [0, 0, 1, 1], [], []>} : vector<8x64xf32>, vector<64x256xf32>, vector<8x256xf32> -> vector<8x256xf32>
    %c1_187 = arith.constant 1 : index
    %c0_188 = arith.constant 0 : index
    %c0_189 = arith.constant 0 : index
    %342 = vector.load %arg6[%c1_187, %c0_188, %c0_189] : memref<2x64x256xf32, #tpu.memory_space<vmem>>, vector<1x64x256xf32>
    %343 = vector.shape_cast %342 : vector<1x64x256xf32> to vector<64x256xf32>
    %cst_190 = arith.constant dense<0.000000e+00> : vector<8x256xf32>
    %344 = tpu.matmul %303, %343, %cst_190 {dimension_numbers = #tpu.dot_dimension_numbers<[1], [0], [0], [1], [0, 0, 1, 1], [], []>} : vector<8x64xf32>, vector<64x256xf32>, vector<8x256xf32> -> vector<8x256xf32>
    %345 = arith.addf %341, %344 : vector<8x256xf32>
    %c1_191 = arith.constant 1 : index
    %c0_192 = arith.constant 0 : index
    %c0_193 = arith.constant 0 : index
    %346 = vector.load %arg7[%c1_191, %c0_192, %c0_193] : memref<2x1x256xf32, #tpu.memory_space<vmem>>, vector<1x1x256xf32>
    %347 = vector.shape_cast %346 : vector<1x1x256xf32> to vector<1x256xf32>
    %348 = vector.broadcast %347 : vector<1x256xf32> to vector<8x256xf32>
    %349 = arith.addf %345, %348 : vector<8x256xf32>
    %350 = math.tanh %349 : vector<8x256xf32>
    %351 = vector.extract_strided_slice %350 {offsets = [0, 0], sizes = [8, 192], strides = [1, 1]} : vector<8x256xf32> to vector<8x192xf32>
    %cst_194 = arith.constant 5.000000e-01 : f32
    %352 = vector.broadcast %cst_194 : f32 to vector<8x192xf32>
    %353 = arith.mulf %352, %351 : vector<8x192xf32>
    %cst_195 = arith.constant 5.000000e-01 : f32
    %354 = vector.broadcast %cst_195 : f32 to vector<8x192xf32>
    %355 = arith.addf %353, %354 : vector<8x192xf32>
    %356 = vector.extract_strided_slice %355 {offsets = [0, 0], sizes = [8, 64], strides = [1, 1]} : vector<8x192xf32> to vector<8x64xf32>
    %357 = vector.extract_strided_slice %355 {offsets = [0, 64], sizes = [8, 64], strides = [1, 1]} : vector<8x192xf32> to vector<8x64xf32>
    %358 = vector.extract_strided_slice %355 {offsets = [0, 128], sizes = [8, 64], strides = [1, 1]} : vector<8x192xf32> to vector<8x64xf32>
    %359 = vector.extract_strided_slice %350 {offsets = [0, 192], sizes = [8, 64], strides = [1, 1]} : vector<8x256xf32> to vector<8x64xf32>
    %360 = arith.mulf %357, %301 : vector<8x64xf32>
    %361 = arith.mulf %356, %359 : vector<8x64xf32>
    %362 = arith.addf %360, %361 : vector<8x64xf32>
    %363 = math.tanh %362 : vector<8x64xf32>
    %364 = arith.mulf %358, %363 : vector<8x64xf32>
    %c0_196 = arith.constant 0 : index
    %c0_197 = arith.constant 0 : index
    %365 = vector.load %arg8[%c0_196, %c0_197] : memref<64x16xf32, #tpu.memory_space<vmem>>, vector<64x16xf32>
    %cst_198 = arith.constant dense<0.000000e+00> : vector<8x16xf32>
    %366 = tpu.matmul %364, %365, %cst_198 {dimension_numbers = #tpu.dot_dimension_numbers<[1], [0], [0], [1], [0, 0, 1, 1], [], []>} : vector<8x64xf32>, vector<64x16xf32>, vector<8x16xf32> -> vector<8x16xf32>
    %c0_199 = arith.constant 0 : index
    %c0_200 = arith.constant 0 : index
    %367 = vector.load %arg9[%c0_199, %c0_200] : memref<1x16xf32, #tpu.memory_space<vmem>>, vector<1x16xf32>
    %368 = vector.broadcast %367 : vector<1x16xf32> to vector<8x16xf32>
    %369 = arith.addf %366, %368 : vector<8x16xf32>
    %370 = math.tanh %369 : vector<8x16xf32>
    %371 = arith.index_cast %c5_i32 : i32 to index
    %c0_201 = arith.constant 0 : index
    %c0_202 = arith.constant 0 : index
    %372 = vector.load %arg10[%371, %c0_201, %c0_202] : memref<8x8x16xf32, #tpu.memory_space<vmem>>, vector<1x8x16xf32>
    %373 = vector.shape_cast %372 : vector<1x8x16xf32> to vector<8x16xf32>
    %374 = vector.shape_cast %370 : vector<8x16xf32> to vector<1x8x16xf32>
    tpu.vector_store %arg10[%371, %c0_201, %c0_202], %374 {strides = array<i32>} : memref<8x8x16xf32, #tpu.memory_space<vmem>>, vector<1x8x16xf32>,
    %c6_i32 = arith.constant 6 : i32
    %c0_203 = arith.constant 0 : index
    %c0_204 = arith.constant 0 : index
    %375 = vector.load %arg4[%c0_203, %c0_204] : memref<16x256xf32, #tpu.memory_space<vmem>>, vector<16x256xf32>
    %cst_205 = arith.constant dense<0.000000e+00> : vector<8x256xf32>
    %376 = tpu.matmul %370, %375, %cst_205 {dimension_numbers = #tpu.dot_dimension_numbers<[1], [0], [0], [1], [0, 0, 1, 1], [], []>} : vector<8x16xf32>, vector<16x256xf32>, vector<8x256xf32> -> vector<8x256xf32>
    %c0_206 = arith.constant 0 : index
    %c0_207 = arith.constant 0 : index
    %c0_208 = arith.constant 0 : index
    %377 = vector.load %arg6[%c0_206, %c0_207, %c0_208] : memref<2x64x256xf32, #tpu.memory_space<vmem>>, vector<1x64x256xf32>
    %378 = vector.shape_cast %377 : vector<1x64x256xf32> to vector<64x256xf32>
    %cst_209 = arith.constant dense<0.000000e+00> : vector<8x256xf32>
    %379 = tpu.matmul %338, %378, %cst_209 {dimension_numbers = #tpu.dot_dimension_numbers<[1], [0], [0], [1], [0, 0, 1, 1], [], []>} : vector<8x64xf32>, vector<64x256xf32>, vector<8x256xf32> -> vector<8x256xf32>
    %380 = arith.addf %376, %379 : vector<8x256xf32>
    %c0_210 = arith.constant 0 : index
    %c0_211 = arith.constant 0 : index
    %c0_212 = arith.constant 0 : index
    %381 = vector.load %arg7[%c0_210, %c0_211, %c0_212] : memref<2x1x256xf32, #tpu.memory_space<vmem>>, vector<1x1x256xf32>
    %382 = vector.shape_cast %381 : vector<1x1x256xf32> to vector<1x256xf32>
    %383 = vector.broadcast %382 : vector<1x256xf32> to vector<8x256xf32>
    %384 = arith.addf %380, %383 : vector<8x256xf32>
    %385 = math.tanh %384 : vector<8x256xf32>
    %386 = vector.extract_strided_slice %385 {offsets = [0, 0], sizes = [8, 192], strides = [1, 1]} : vector<8x256xf32> to vector<8x192xf32>
    %cst_213 = arith.constant 5.000000e-01 : f32
    %387 = vector.broadcast %cst_213 : f32 to vector<8x192xf32>
    %388 = arith.mulf %387, %386 : vector<8x192xf32>
    %cst_214 = arith.constant 5.000000e-01 : f32
    %389 = vector.broadcast %cst_214 : f32 to vector<8x192xf32>
    %390 = arith.addf %388, %389 : vector<8x192xf32>
    %391 = vector.extract_strided_slice %390 {offsets = [0, 0], sizes = [8, 64], strides = [1, 1]} : vector<8x192xf32> to vector<8x64xf32>
    %392 = vector.extract_strided_slice %390 {offsets = [0, 64], sizes = [8, 64], strides = [1, 1]} : vector<8x192xf32> to vector<8x64xf32>
    %393 = vector.extract_strided_slice %390 {offsets = [0, 128], sizes = [8, 64], strides = [1, 1]} : vector<8x192xf32> to vector<8x64xf32>
    %394 = vector.extract_strided_slice %385 {offsets = [0, 192], sizes = [8, 64], strides = [1, 1]} : vector<8x256xf32> to vector<8x64xf32>
    %395 = arith.mulf %392, %336 : vector<8x64xf32>
    %396 = arith.mulf %391, %394 : vector<8x64xf32>
    %397 = arith.addf %395, %396 : vector<8x64xf32>
    %398 = math.tanh %397 : vector<8x64xf32>
    %399 = arith.mulf %393, %398 : vector<8x64xf32>
    %c0_215 = arith.constant 0 : index
    %c0_216 = arith.constant 0 : index
    %c0_217 = arith.constant 0 : index
    %400 = vector.load %arg5[%c0_215, %c0_216, %c0_217] : memref<1x64x256xf32, #tpu.memory_space<vmem>>, vector<1x64x256xf32>
    %401 = vector.shape_cast %400 : vector<1x64x256xf32> to vector<64x256xf32>
    %cst_218 = arith.constant dense<0.000000e+00> : vector<8x256xf32>
    %402 = tpu.matmul %399, %401, %cst_218 {dimension_numbers = #tpu.dot_dimension_numbers<[1], [0], [0], [1], [0, 0, 1, 1], [], []>} : vector<8x64xf32>, vector<64x256xf32>, vector<8x256xf32> -> vector<8x256xf32>
    %c1_219 = arith.constant 1 : index
    %c0_220 = arith.constant 0 : index
    %c0_221 = arith.constant 0 : index
    %403 = vector.load %arg6[%c1_219, %c0_220, %c0_221] : memref<2x64x256xf32, #tpu.memory_space<vmem>>, vector<1x64x256xf32>
    %404 = vector.shape_cast %403 : vector<1x64x256xf32> to vector<64x256xf32>
    %cst_222 = arith.constant dense<0.000000e+00> : vector<8x256xf32>
    %405 = tpu.matmul %364, %404, %cst_222 {dimension_numbers = #tpu.dot_dimension_numbers<[1], [0], [0], [1], [0, 0, 1, 1], [], []>} : vector<8x64xf32>, vector<64x256xf32>, vector<8x256xf32> -> vector<8x256xf32>
    %406 = arith.addf %402, %405 : vector<8x256xf32>
    %c1_223 = arith.constant 1 : index
    %c0_224 = arith.constant 0 : index
    %c0_225 = arith.constant 0 : index
    %407 = vector.load %arg7[%c1_223, %c0_224, %c0_225] : memref<2x1x256xf32, #tpu.memory_space<vmem>>, vector<1x1x256xf32>
    %408 = vector.shape_cast %407 : vector<1x1x256xf32> to vector<1x256xf32>
    %409 = vector.broadcast %408 : vector<1x256xf32> to vector<8x256xf32>
    %410 = arith.addf %406, %409 : vector<8x256xf32>
    %411 = math.tanh %410 : vector<8x256xf32>
    %412 = vector.extract_strided_slice %411 {offsets = [0, 0], sizes = [8, 192], strides = [1, 1]} : vector<8x256xf32> to vector<8x192xf32>
    %cst_226 = arith.constant 5.000000e-01 : f32
    %413 = vector.broadcast %cst_226 : f32 to vector<8x192xf32>
    %414 = arith.mulf %413, %412 : vector<8x192xf32>
    %cst_227 = arith.constant 5.000000e-01 : f32
    %415 = vector.broadcast %cst_227 : f32 to vector<8x192xf32>
    %416 = arith.addf %414, %415 : vector<8x192xf32>
    %417 = vector.extract_strided_slice %416 {offsets = [0, 0], sizes = [8, 64], strides = [1, 1]} : vector<8x192xf32> to vector<8x64xf32>
    %418 = vector.extract_strided_slice %416 {offsets = [0, 64], sizes = [8, 64], strides = [1, 1]} : vector<8x192xf32> to vector<8x64xf32>
    %419 = vector.extract_strided_slice %416 {offsets = [0, 128], sizes = [8, 64], strides = [1, 1]} : vector<8x192xf32> to vector<8x64xf32>
    %420 = vector.extract_strided_slice %411 {offsets = [0, 192], sizes = [8, 64], strides = [1, 1]} : vector<8x256xf32> to vector<8x64xf32>
    %421 = arith.mulf %418, %362 : vector<8x64xf32>
    %422 = arith.mulf %417, %420 : vector<8x64xf32>
    %423 = arith.addf %421, %422 : vector<8x64xf32>
    %424 = math.tanh %423 : vector<8x64xf32>
    %425 = arith.mulf %419, %424 : vector<8x64xf32>
    %c0_228 = arith.constant 0 : index
    %c0_229 = arith.constant 0 : index
    %426 = vector.load %arg8[%c0_228, %c0_229] : memref<64x16xf32, #tpu.memory_space<vmem>>, vector<64x16xf32>
    %cst_230 = arith.constant dense<0.000000e+00> : vector<8x16xf32>
    %427 = tpu.matmul %425, %426, %cst_230 {dimension_numbers = #tpu.dot_dimension_numbers<[1], [0], [0], [1], [0, 0, 1, 1], [], []>} : vector<8x64xf32>, vector<64x16xf32>, vector<8x16xf32> -> vector<8x16xf32>
    %c0_231 = arith.constant 0 : index
    %c0_232 = arith.constant 0 : index
    %428 = vector.load %arg9[%c0_231, %c0_232] : memref<1x16xf32, #tpu.memory_space<vmem>>, vector<1x16xf32>
    %429 = vector.broadcast %428 : vector<1x16xf32> to vector<8x16xf32>
    %430 = arith.addf %427, %429 : vector<8x16xf32>
    %431 = math.tanh %430 : vector<8x16xf32>
    %432 = arith.index_cast %c6_i32 : i32 to index
    %c0_233 = arith.constant 0 : index
    %c0_234 = arith.constant 0 : index
    %433 = vector.load %arg10[%432, %c0_233, %c0_234] : memref<8x8x16xf32, #tpu.memory_space<vmem>>, vector<1x8x16xf32>
    %434 = vector.shape_cast %433 : vector<1x8x16xf32> to vector<8x16xf32>
    %435 = vector.shape_cast %431 : vector<8x16xf32> to vector<1x8x16xf32>
    tpu.vector_store %arg10[%432, %c0_233, %c0_234], %435 {strides = array<i32>} : memref<8x8x16xf32, #tpu.memory_space<vmem>>, vector<1x8x16xf32>,
    %c7_i32 = arith.constant 7 : i32
    %c0_235 = arith.constant 0 : index
    %c0_236 = arith.constant 0 : index
    %436 = vector.load %arg4[%c0_235, %c0_236] : memref<16x256xf32, #tpu.memory_space<vmem>>, vector<16x256xf32>
    %cst_237 = arith.constant dense<0.000000e+00> : vector<8x256xf32>
    %437 = tpu.matmul %431, %436, %cst_237 {dimension_numbers = #tpu.dot_dimension_numbers<[1], [0], [0], [1], [0, 0, 1, 1], [], []>} : vector<8x16xf32>, vector<16x256xf32>, vector<8x256xf32> -> vector<8x256xf32>
    %c0_238 = arith.constant 0 : index
    %c0_239 = arith.constant 0 : index
    %c0_240 = arith.constant 0 : index
    %438 = vector.load %arg6[%c0_238, %c0_239, %c0_240] : memref<2x64x256xf32, #tpu.memory_space<vmem>>, vector<1x64x256xf32>
    %439 = vector.shape_cast %438 : vector<1x64x256xf32> to vector<64x256xf32>
    %cst_241 = arith.constant dense<0.000000e+00> : vector<8x256xf32>
    %440 = tpu.matmul %399, %439, %cst_241 {dimension_numbers = #tpu.dot_dimension_numbers<[1], [0], [0], [1], [0, 0, 1, 1], [], []>} : vector<8x64xf32>, vector<64x256xf32>, vector<8x256xf32> -> vector<8x256xf32>
    %441 = arith.addf %437, %440 : vector<8x256xf32>
    %c0_242 = arith.constant 0 : index
    %c0_243 = arith.constant 0 : index
    %c0_244 = arith.constant 0 : index
    %442 = vector.load %arg7[%c0_242, %c0_243, %c0_244] : memref<2x1x256xf32, #tpu.memory_space<vmem>>, vector<1x1x256xf32>
    %443 = vector.shape_cast %442 : vector<1x1x256xf32> to vector<1x256xf32>
    %444 = vector.broadcast %443 : vector<1x256xf32> to vector<8x256xf32>
    %445 = arith.addf %441, %444 : vector<8x256xf32>
    %446 = math.tanh %445 : vector<8x256xf32>
    %447 = vector.extract_strided_slice %446 {offsets = [0, 0], sizes = [8, 192], strides = [1, 1]} : vector<8x256xf32> to vector<8x192xf32>
    %cst_245 = arith.constant 5.000000e-01 : f32
    %448 = vector.broadcast %cst_245 : f32 to vector<8x192xf32>
    %449 = arith.mulf %448, %447 : vector<8x192xf32>
    %cst_246 = arith.constant 5.000000e-01 : f32
    %450 = vector.broadcast %cst_246 : f32 to vector<8x192xf32>
    %451 = arith.addf %449, %450 : vector<8x192xf32>
    %452 = vector.extract_strided_slice %451 {offsets = [0, 0], sizes = [8, 64], strides = [1, 1]} : vector<8x192xf32> to vector<8x64xf32>
    %453 = vector.extract_strided_slice %451 {offsets = [0, 64], sizes = [8, 64], strides = [1, 1]} : vector<8x192xf32> to vector<8x64xf32>
    %454 = vector.extract_strided_slice %451 {offsets = [0, 128], sizes = [8, 64], strides = [1, 1]} : vector<8x192xf32> to vector<8x64xf32>
    %455 = vector.extract_strided_slice %446 {offsets = [0, 192], sizes = [8, 64], strides = [1, 1]} : vector<8x256xf32> to vector<8x64xf32>
    %456 = arith.mulf %453, %397 : vector<8x64xf32>
    %457 = arith.mulf %452, %455 : vector<8x64xf32>
    %458 = arith.addf %456, %457 : vector<8x64xf32>
    %459 = math.tanh %458 : vector<8x64xf32>
    %460 = arith.mulf %454, %459 : vector<8x64xf32>
    %c0_247 = arith.constant 0 : index
    %c0_248 = arith.constant 0 : index
    %c0_249 = arith.constant 0 : index
    %461 = vector.load %arg5[%c0_247, %c0_248, %c0_249] : memref<1x64x256xf32, #tpu.memory_space<vmem>>, vector<1x64x256xf32>
    %462 = vector.shape_cast %461 : vector<1x64x256xf32> to vector<64x256xf32>
    %cst_250 = arith.constant dense<0.000000e+00> : vector<8x256xf32>
    %463 = tpu.matmul %460, %462, %cst_250 {dimension_numbers = #tpu.dot_dimension_numbers<[1], [0], [0], [1], [0, 0, 1, 1], [], []>} : vector<8x64xf32>, vector<64x256xf32>, vector<8x256xf32> -> vector<8x256xf32>
    %c1_251 = arith.constant 1 : index
    %c0_252 = arith.constant 0 : index
    %c0_253 = arith.constant 0 : index
    %464 = vector.load %arg6[%c1_251, %c0_252, %c0_253] : memref<2x64x256xf32, #tpu.memory_space<vmem>>, vector<1x64x256xf32>
    %465 = vector.shape_cast %464 : vector<1x64x256xf32> to vector<64x256xf32>
    %cst_254 = arith.constant dense<0.000000e+00> : vector<8x256xf32>
    %466 = tpu.matmul %425, %465, %cst_254 {dimension_numbers = #tpu.dot_dimension_numbers<[1], [0], [0], [1], [0, 0, 1, 1], [], []>} : vector<8x64xf32>, vector<64x256xf32>, vector<8x256xf32> -> vector<8x256xf32>
    %467 = arith.addf %463, %466 : vector<8x256xf32>
    %c1_255 = arith.constant 1 : index
    %c0_256 = arith.constant 0 : index
    %c0_257 = arith.constant 0 : index
    %468 = vector.load %arg7[%c1_255, %c0_256, %c0_257] : memref<2x1x256xf32, #tpu.memory_space<vmem>>, vector<1x1x256xf32>
    %469 = vector.shape_cast %468 : vector<1x1x256xf32> to vector<1x256xf32>
    %470 = vector.broadcast %469 : vector<1x256xf32> to vector<8x256xf32>
    %471 = arith.addf %467, %470 : vector<8x256xf32>
    %472 = math.tanh %471 : vector<8x256xf32>
    %473 = vector.extract_strided_slice %472 {offsets = [0, 0], sizes = [8, 192], strides = [1, 1]} : vector<8x256xf32> to vector<8x192xf32>
    %cst_258 = arith.constant 5.000000e-01 : f32
    %474 = vector.broadcast %cst_258 : f32 to vector<8x192xf32>
    %475 = arith.mulf %474, %473 : vector<8x192xf32>
    %cst_259 = arith.constant 5.000000e-01 : f32
    %476 = vector.broadcast %cst_259 : f32 to vector<8x192xf32>
    %477 = arith.addf %475, %476 : vector<8x192xf32>
    %478 = vector.extract_strided_slice %477 {offsets = [0, 0], sizes = [8, 64], strides = [1, 1]} : vector<8x192xf32> to vector<8x64xf32>
    %479 = vector.extract_strided_slice %477 {offsets = [0, 64], sizes = [8, 64], strides = [1, 1]} : vector<8x192xf32> to vector<8x64xf32>
    %480 = vector.extract_strided_slice %477 {offsets = [0, 128], sizes = [8, 64], strides = [1, 1]} : vector<8x192xf32> to vector<8x64xf32>
    %481 = vector.extract_strided_slice %472 {offsets = [0, 192], sizes = [8, 64], strides = [1, 1]} : vector<8x256xf32> to vector<8x64xf32>
    %482 = arith.mulf %479, %423 : vector<8x64xf32>
    %483 = arith.mulf %478, %481 : vector<8x64xf32>
    %484 = arith.addf %482, %483 : vector<8x64xf32>
    %485 = math.tanh %484 : vector<8x64xf32>
    %486 = arith.mulf %480, %485 : vector<8x64xf32>
    %c0_260 = arith.constant 0 : index
    %c0_261 = arith.constant 0 : index
    %487 = vector.load %arg8[%c0_260, %c0_261] : memref<64x16xf32, #tpu.memory_space<vmem>>, vector<64x16xf32>
    %cst_262 = arith.constant dense<0.000000e+00> : vector<8x16xf32>
    %488 = tpu.matmul %486, %487, %cst_262 {dimension_numbers = #tpu.dot_dimension_numbers<[1], [0], [0], [1], [0, 0, 1, 1], [], []>} : vector<8x64xf32>, vector<64x16xf32>, vector<8x16xf32> -> vector<8x16xf32>
    %c0_263 = arith.constant 0 : index
    %c0_264 = arith.constant 0 : index
    %489 = vector.load %arg9[%c0_263, %c0_264] : memref<1x16xf32, #tpu.memory_space<vmem>>, vector<1x16xf32>
    %490 = vector.broadcast %489 : vector<1x16xf32> to vector<8x16xf32>
    %491 = arith.addf %488, %490 : vector<8x16xf32>
    %492 = math.tanh %491 : vector<8x16xf32>
    %493 = arith.index_cast %c7_i32 : i32 to index
    %c0_265 = arith.constant 0 : index
    %c0_266 = arith.constant 0 : index
    %494 = vector.load %arg10[%493, %c0_265, %c0_266] : memref<8x8x16xf32, #tpu.memory_space<vmem>>, vector<1x8x16xf32>
    %495 = vector.shape_cast %494 : vector<1x8x16xf32> to vector<8x16xf32>
    %496 = vector.shape_cast %492 : vector<8x16xf32> to vector<1x8x16xf32>
    tpu.vector_store %arg10[%493, %c0_265, %c0_266], %496 {strides = array<i32>} : memref<8x8x16xf32, #tpu.memory_space<vmem>>, vector<1x8x16xf32>,
    %c8_i32 = arith.constant 8 : i32
    return
  }
  func.func @transform_0(%arg0: i32) -> (i32, i32, i32) {
    %c0_i32 = arith.constant 0 : i32
    %c0_i32_0 = arith.constant 0 : i32
    %c0_i32_1 = arith.constant 0 : i32
    %c0_i32_2 = arith.constant 0 : i32
    return %c0_i32, %c0_i32_0, %c0_i32_1 : i32, i32, i32
  }
  func.func @transform_1(%arg0: i32) -> (i32, i32, i32) {
    %c0_i32 = arith.constant 0 : i32
    %c0_i32_0 = arith.constant 0 : i32
    %c0_i32_1 = arith.constant 0 : i32
    %c0_i32_2 = arith.constant 0 : i32
    return %c0_i32, %c0_i32_0, %c0_i32_1 : i32, i32, i32
  }
  func.func @transform_2(%arg0: i32) -> (i32, i32) {
    %c0_i32 = arith.constant 0 : i32
    %c0_i32_0 = arith.constant 0 : i32
    %c0_i32_1 = arith.constant 0 : i32
    return %c0_i32, %c0_i32_0 : i32, i32
  }
  func.func @transform_3(%arg0: i32) -> (i32, i32) {
    %c0_i32 = arith.constant 0 : i32
    %c0_i32_0 = arith.constant 0 : i32
    %c0_i32_1 = arith.constant 0 : i32
    return %c0_i32, %c0_i32_0 : i32, i32
  }
  func.func @transform_4(%arg0: i32) -> (i32, i32, i32) {
    %c0_i32 = arith.constant 0 : i32
    %c0_i32_0 = arith.constant 0 : i32
    %c0_i32_1 = arith.constant 0 : i32
    %c0_i32_2 = arith.constant 0 : i32
    return %c0_i32, %c0_i32_0, %c0_i32_1 : i32, i32, i32
  }
  func.func @transform_5(%arg0: i32) -> (i32, i32, i32) {
    %c0_i32 = arith.constant 0 : i32
    %c0_i32_0 = arith.constant 0 : i32
    %c0_i32_1 = arith.constant 0 : i32
    %c0_i32_2 = arith.constant 0 : i32
    return %c0_i32, %c0_i32_0, %c0_i32_1 : i32, i32, i32
  }
  func.func @transform_6(%arg0: i32) -> (i32, i32, i32) {
    %c0_i32 = arith.constant 0 : i32
    %c0_i32_0 = arith.constant 0 : i32
    %c0_i32_1 = arith.constant 0 : i32
    %c0_i32_2 = arith.constant 0 : i32
    return %c0_i32, %c0_i32_0, %c0_i32_1 : i32, i32, i32
  }
  func.func @transform_7(%arg0: i32) -> (i32, i32) {
    %c0_i32 = arith.constant 0 : i32
    %c0_i32_0 = arith.constant 0 : i32
    %c0_i32_1 = arith.constant 0 : i32
    return %c0_i32, %c0_i32_0 : i32, i32
  }
  func.func @transform_8(%arg0: i32) -> (i32, i32) {
    %c0_i32 = arith.constant 0 : i32
    %c0_i32_0 = arith.constant 0 : i32
    %c0_i32_1 = arith.constant 0 : i32
    return %c0_i32, %c0_i32_0 : i32, i32
  }
  func.func @transform_9(%arg0: i32) -> (i32, i32, i32) {
    %c0_i32 = arith.constant 0 : i32
    %c0_i32_0 = arith.constant 0 : i32
    %c0_i32_1 = arith.constant 0 : i32
    %c0_i32_2 = arith.constant 0 : i32
    return %c0_i32, %c0_i32_0, %c0_i32_1 : i32, i32, i32
  }
}

</mosaic_0001>

<llo_original>
// kernel: tpu_custom_call.1
$region0: #{tpu_custom_call.1}
  #allocation0 [shape = 'u32[]', space=smem, size = 0x4, offset = 0x4, fixed_abs, tag = 'smem constant byte address 0x4 - core index']
  #allocation1 [shape = 'u32[72,128]{1,0:T(1,128)}', space=vmem, size = 0x9000, scoped, tag = 'internal scratch']
  %s0 = inlined_call_operand.vmem [shape: f32[2,8,64], index: 0, kind: input, shape index: {}]
  %s1 = inlined_call_operand.vmem [shape: f32[2,8,64], index: 1, kind: input, shape index: {}]
  %s2 = inlined_call_operand.vmem [shape: f32[8,16], index: 2, kind: input, shape index: {}]
  %s3 = inlined_call_operand.vmem [shape: f32[16,256], index: 3, kind: input, shape index: {}]
  %s4 = inlined_call_operand.hbm [shape: f32[1,64,256], index: 4, kind: input, shape index: {}]
  %s5 = inlined_call_operand.hbm [shape: f32[2,64,256], index: 5, kind: input, shape index: {}]
  %s6 = inlined_call_operand.vmem [shape: f32[2,1,256], index: 6, kind: input, shape index: {}]
  %s7 = inlined_call_operand.vmem [shape: f32[64,16], index: 7, kind: input, shape index: {}]
  %s8 = inlined_call_operand.vmem [shape: f32[1,16], index: 8, kind: input, shape index: {}]
  %s9 = inlined_call_operand.hbm [shape: f32[8,8,16], index: 9, kind: output, shape index: {}]
  %s10 = sld [smem:[#allocation0]]
  $region54: #{tpu_custom_call.1} parent=0
    _
  %s12 = ssub.s32 1, %s10
  %s13 = scalar_select 0, %s12, %s10
  $region1: #{tpu_custom_call.1} parent=0
    #allocation2 [shape = 'u8[65536]{0}', space=vmem, size = 0x10000, scoped, tag = 'input window, operand 4, single buffered']
    #allocation3 [shape = 's32[1]{0}', space=sflag, size = 0x4, scoped, tag = 'scoped memory for tpu_custom_call.1']
    #allocation4 [shape = 's32[1]{0}', space=sflag, size = 0x4, scoped, tag = 'scoped memory for tpu_custom_call.1']
    #allocation5 [shape = 'u8[131072]{0}', space=vmem, size = 0x20000, scoped, tag = 'input window, operand 5, single buffered']
    #allocation6 [shape = 's32[1]{0}', space=sflag, size = 0x4, scoped, tag = 'scoped memory for tpu_custom_call.1']
    #allocation7 [shape = 'u8[32768]{0}', space=vmem, size = 0x8000, scoped, tag = 'output window, operand 0, single buffered']
    %14 = vsyncpa [#allocation3], 0
    %15 = vsyncpa [#allocation6], 0
    %16 = vsyncpa [#allocation4], 0
    // Predicated region
    $region2: #{tpu_custom_call.1} parent=1 // pred_check
      _
    $region3: #{tpu_custom_call.1} parent=1 // pred_check_branch
      %18 = sbr.rel (0) target = $region5
    $region4: #{tpu_custom_call.1} parent=1 // pred_region
      _
    $region5: #{tpu_custom_call.1} parent=1 // pred_fallthru
      _
    // Predicated region
    $region6: #{tpu_custom_call.1} parent=1 // pred_check
      _
    $region7: #{tpu_custom_call.1} parent=1 // pred_check_branch
      %20 = sbr.rel (0) target = $region9
    $region8: #{tpu_custom_call.1} parent=1 // pred_region
      _
    $region9: #{tpu_custom_call.1} parent=1 // pred_fallthru
      _
    // Predicated region
    $region10: #{tpu_custom_call.1} parent=1 // pred_check
      _
    $region11: #{tpu_custom_call.1} parent=1 // pred_check_branch
      %22 = sbr.rel (0) target = $region13
    $region12: #{tpu_custom_call.1} parent=1 // pred_region
      _
    $region13: #{tpu_custom_call.1} parent=1 // pred_fallthru
      _
    // Predicated region
    $region14: #{tpu_custom_call.1} parent=1 // pred_check
      _
    $region15: #{tpu_custom_call.1} parent=1 // pred_check_branch
      %24 = sbr.rel (0) target = $region17
    $region16: #{tpu_custom_call.1} parent=1 // pred_region
      _
    $region17: #{tpu_custom_call.1} parent=1 // pred_fallthru
      _
    // Predicated region
    $region18: #{tpu_custom_call.1} parent=1 // pred_check
      _
    $region19: #{tpu_custom_call.1} parent=1 // pred_check_branch
      %26 = sbr.rel (0) target = $region21
    $region20: #{tpu_custom_call.1} parent=1 // pred_region
      %28 = vsyncadd [#allocation3], 0
      %s29 = sshll.u32 %s4, 4
      %s30 = int_to_ptr.hbm [resolvable:$true] %s29
      %s31 = sshll.u32 [#allocation2], 4
      %s32 = int_to_ptr.vmem [resolvable:$true] %s31
      %37 = dma.hbm_to_vmem [thread:$0]  %s30, 2048, %s32, [#allocation3], 256, 256, 16
    $region21: #{tpu_custom_call.1} parent=1 // pred_fallthru
      _
    // Predicated region
    $region22: #{tpu_custom_call.1} parent=1 // pred_check
      _
    $region23: #{tpu_custom_call.1} parent=1 // pred_check_branch
      %39 = sbr.rel (0) target = $region25
    $region24: #{tpu_custom_call.1} parent=1 // pred_region
      %41 = vsyncadd [#allocation6], 0
      %s42 = sshll.u32 %s5, 4
      %s43 = int_to_ptr.hbm [resolvable:$true] %s42
      %s44 = sshll.u32 [#allocation5], 4
      %s45 = int_to_ptr.vmem [resolvable:$true] %s44
      %50 = dma.hbm_to_vmem [thread:$0]  %s43, 4096, %s45, [#allocation6], 256, 256, 16
    $region25: #{tpu_custom_call.1} parent=1 // pred_fallthru
      _
    // Predicated region
    $region26: #{tpu_custom_call.1} parent=1 // pred_check
      _
    $region27: #{tpu_custom_call.1} parent=1 // pred_check_branch
      %52 = sbr.rel (0) target = $region29
    $region28: #{tpu_custom_call.1} parent=1 // pred_region
      _
    $region29: #{tpu_custom_call.1} parent=1 // pred_fallthru
      _
    // Predicated region
    $region30: #{tpu_custom_call.1} parent=1 // pred_check
      _
    $region31: #{tpu_custom_call.1} parent=1 // pred_check_branch
      %54 = sbr.rel (0) target = $region33
    $region32: #{tpu_custom_call.1} parent=1 // pred_region
      _
    $region33: #{tpu_custom_call.1} parent=1 // pred_fallthru
      _
    // Predicated region
    $region34: #{tpu_custom_call.1} parent=1 // pred_check
      _
    $region35: #{tpu_custom_call.1} parent=1 // pred_check_branch
      %56 = sbr.rel (0) target = $region37
    $region36: #{tpu_custom_call.1} parent=1 // pred_region
      _
    $region37: #{tpu_custom_call.1} parent=1 // pred_fallthru
      _
    // Predicated region
    $region38: #{tpu_custom_call.1} parent=1 // pred_check
      _
    $region39: #{tpu_custom_call.1} parent=1 // pred_check_branch
      %58 = sbr.rel (0) target = $region41
    $region40: #{tpu_custom_call.1} parent=1 // pred_region
      %60 = dma.done [#allocation3], 2048
    $region41: #{tpu_custom_call.1} parent=1 // pred_fallthru
      _
    // Predicated region
    $region42: #{tpu_custom_call.1} parent=1 // pred_check
      _
    $region43: #{tpu_custom_call.1} parent=1 // pred_check_branch
      %62 = sbr.rel (0) target = $region45
    $region44: #{tpu_custom_call.1} parent=1 // pred_region
      %64 = dma.done [#allocation6], 4096
    $region45: #{tpu_custom_call.1} parent=1 // pred_fallthru
      _
    %v65 = vld [vmem:[%s0] sm:$0xff]
    %s66 = scalar_lea.vmem %s0, 8
    %v67 = vld [vmem:[%s66] sm:$0xff]
    %v68 = vld [vmem:[%s1] sm:$0xff]
    %s69 = scalar_lea.vmem %s1, 8
    %v70 = vld [vmem:[%s69] sm:$0xff]
    %v71 = vld [vmem:[%s2] sm:$0xff]
    %v72 = vld [vmem:[%s3] sm:$0xff]
    %v73 = vld [vmem:[%s3 + $0x8] sm:$0xff]
    %v74 = vld [vmem:[%s3 + $0x10] sm:$0xff]
    %v75 = vld [vmem:[%s3 + $0x18] sm:$0xff]
    %v76 = vld [vmem:[#allocation5] sm:$0xff]
    %v77 = vld [vmem:[#allocation5 + $0x8] sm:$0xff]
    %v78 = vld [vmem:[#allocation5 + $0x10] sm:$0xff]
    %v79 = vld [vmem:[#allocation5 + $0x18] sm:$0xff]
    %v80 = vld [vmem:[#allocation5 + $0x20] sm:$0xff]
    %v81 = vld [vmem:[#allocation5 + $0x28] sm:$0xff]
    %v82 = vld [vmem:[#allocation5 + $0x30] sm:$0xff]
    %v83 = vld [vmem:[#allocation5 + $0x38] sm:$0xff]
    %v84 = vld [vmem:[#allocation5 + $0x40] sm:$0xff]
    %v85 = vld [vmem:[#allocation5 + $0x48] sm:$0xff]
    %v86 = vld [vmem:[#allocation5 + $0x50] sm:$0xff]
    %v87 = vld [vmem:[#allocation5 + $0x58] sm:$0xff]
    %v88 = vld [vmem:[#allocation5 + $0x60] sm:$0xff]
    %v89 = vld [vmem:[#allocation5 + $0x68] sm:$0xff]
    %v90 = vld [vmem:[#allocation5 + $0x70] sm:$0xff]
    %v91 = vld [vmem:[#allocation5 + $0x78] sm:$0xff]
    %vm92 = vcmask 523264
    %v94 = vsel %vm92, %v65, 0
    %96 = vmatpush.msra.mxu0 0.0
    %97 = vmatpush.msra.mxu0 0.0
    %98 = vmatpush.msra.mxu0 0.0
    %99 = vmatpush.msra.mxu0 0.0
    %100 = vmatpush.msra.mxu0 0.0
    %101 = vmatpush.msra.mxu0 0.0
    %102 = vmatpush.msra.mxu0 0.0
    %103 = vmatpush.msra.mxu0 0.0
    %104 = vmatpush.msra.mxu0 %v90
    %105 = vmatpush.msra.mxu0 %v88
    %106 = vmatpush.msra.mxu0 %v86
    %107 = vmatpush.msra.mxu0 %v84
    %108 = vmatpush.msra.mxu0 %v82
    %109 = vmatpush.msra.mxu0 %v80
    %110 = vmatpush.msra.mxu0 %v78
    %111 = vmatpush.msra.mxu0 %v76
    %112 = vmatmul.f32.gmra.mxu0 %v94
    %v113 = vpop.f32.mrf.mxu0
    %v114 = vadd.f32 0.0, %v113
    %115 = vdwg.mxu0
    %116 = vmatpush.msra.mxu0 0.0
    %117 = vmatpush.msra.mxu0 0.0
    %118 = vmatpush.msra.mxu0 0.0
    %119 = vmatpush.msra.mxu0 0.0
    %120 = vmatpush.msra.mxu0 0.0
    %121 = vmatpush.msra.mxu0 0.0
    %122 = vmatpush.msra.mxu0 0.0
    %123 = vmatpush.msra.mxu0 0.0
    %124 = vmatpush.msra.mxu0 %v91
    %125 = vmatpush.msra.mxu0 %v89
    %126 = vmatpush.msra.mxu0 %v87
    %127 = vmatpush.msra.mxu0 %v85
    %128 = vmatpush.msra.mxu0 %v83
    %129 = vmatpush.msra.mxu0 %v81
    %130 = vmatpush.msra.mxu0 %v79
    %131 = vmatpush.msra.mxu0 %v77
    %132 = vmatmul.f32.gmra.mxu0 %v94
    %v133 = vpop.f32.mrf.mxu0
    %v134 = vadd.f32 0.0, %v133
    %135 = vdwg.mxu0
    %vm136 = vcmask 130048
    %v138 = vsel %vm136, %v71, 0
    %140 = vmatpush.msra.mxu0 0.0
    %141 = vmatpush.msra.mxu0 0.0
    %142 = vmatpush.msra.mxu0 0.0
    %143 = vmatpush.msra.mxu0 0.0
    %144 = vmatpush.msra.mxu0 0.0
    %145 = vmatpush.msra.mxu0 0.0
    %146 = vmatpush.msra.mxu0 0.0
    %147 = vmatpush.msra.mxu0 0.0
    %148 = vmatpush.msra.mxu0 0.0
    %149 = vmatpush.msra.mxu0 0.0
    %150 = vmatpush.msra.mxu0 0.0
    %151 = vmatpush.msra.mxu0 0.0
    %152 = vmatpush.msra.mxu0 0.0
    %153 = vmatpush.msra.mxu0 0.0
    %154 = vmatpush.msra.mxu0 %v74
    %155 = vmatpush.msra.mxu0 %v72
    %156 = vmatmul.f32.gmra.mxu0 %v138
    %v157 = vpop.f32.mrf.mxu0
    %v158 = vadd.f32 %v114, %v157
    %159 = vdwg.mxu0
    %160 = vmatpush.msra.mxu0 0.0
    %161 = vmatpush.msra.mxu0 0.0
    %162 = vmatpush.msra.mxu0 0.0
    %163 = vmatpush.msra.mxu0 0.0
    %164 = vmatpush.msra.mxu0 0.0
    %165 = vmatpush.msra.mxu0 0.0
    %166 = vmatpush.msra.mxu0 0.0
    %167 = vmatpush.msra.mxu0 0.0
    %168 = vmatpush.msra.mxu0 0.0
    %169 = vmatpush.msra.mxu0 0.0
    %170 = vmatpush.msra.mxu0 0.0
    %171 = vmatpush.msra.mxu0 0.0
    %172 = vmatpush.msra.mxu0 0.0
    %173 = vmatpush.msra.mxu0 0.0
    %174 = vmatpush.msra.mxu0 %v75
    %175 = vmatpush.msra.mxu0 %v73
    %176 = vmatmul.f32.gmra.mxu0 %v138
    %v177 = vpop.f32.mrf.mxu0
    %v178 = vadd.f32 %v134, %v177
    %179 = vdwg.mxu0
    %v180 = vld [vmem:[%s6] sm:$0x3]
    %v182 = vperm.slane %v180, 0
    %v183 = vperm.slane %v180, 1
    %v186 = vadd.f32 %v158, %v182
    %v187 = vadd.f32 %v178, %v183
    %v188 = vtanh.pop %v186
    %v189 = vtanh.pop %v187
    %v190 = vmul.f32 %v188, 0.5
    %v191 = vmul.f32 %v189, 0.5
    %v192 = vadd.f32 %v190, 0.5
    %v193 = vadd.f32 %v191, 0.5
    %195 = vrot.lane.b32.xlu0 %v68, 64
    %v196 = vpop.permute.xlu0 %195
    %v198 = vmul.f32 %v192, %v196
    %200 = vrot.lane.b32.xlu0 %v189, 64
    %v201 = vpop.permute.xlu0 %200
    %v203 = vmul.f32 %v192, %v201
    %205 = vrot.lane.b32.xlu0 %v203, 64
    %v206 = vpop.permute.xlu0 %205
    %v208 = vadd.f32 %v198, %v206
    %v209 = vtanh.pop %v208
    %211 = vrot.lane.b32.xlu0 %v209, 64
    %v212 = vpop.permute.xlu0 %211
    %v214 = vmul.f32 %v193, %v212
    %v215 = vld [vmem:[#allocation2] sm:$0xff]
    %v216 = vld [vmem:[#allocation2 + $0x8] sm:$0xff]
    %v217 = vld [vmem:[#allocation2 + $0x10] sm:$0xff]
    %v218 = vld [vmem:[#allocation2 + $0x18] sm:$0xff]
    %v219 = vld [vmem:[#allocation2 + $0x20] sm:$0xff]
    %v220 = vld [vmem:[#allocation2 + $0x28] sm:$0xff]
    %v221 = vld [vmem:[#allocation2 + $0x30] sm:$0xff]
    %v222 = vld [vmem:[#allocation2 + $0x38] sm:$0xff]
    %v223 = vld [vmem:[#allocation2 + $0x40] sm:$0xff]
    %v224 = vld [vmem:[#allocation2 + $0x48] sm:$0xff]
    %v225 = vld [vmem:[#allocation2 + $0x50] sm:$0xff]
    %v226 = vld [vmem:[#allocation2 + $0x58] sm:$0xff]
    %v227 = vld [vmem:[#allocation2 + $0x60] sm:$0xff]
    %v228 = vld [vmem:[#allocation2 + $0x68] sm:$0xff]
    %v229 = vld [vmem:[#allocation2 + $0x70] sm:$0xff]
    %v230 = vld [vmem:[#allocation2 + $0x78] sm:$0xff]
    %s231 = scalar_lea.vmem [#allocation5], 128
    %v232 = vld [vmem:[%s231] sm:$0xff]
    %v233 = vld [vmem:[%s231 + $0x8] sm:$0xff]
    %v234 = vld [vmem:[%s231 + $0x10] sm:$0xff]
    %v235 = vld [vmem:[%s231 + $0x18] sm:$0xff]
    %v236 = vld [vmem:[%s231 + $0x20] sm:$0xff]
    %v237 = vld [vmem:[%s231 + $0x28] sm:$0xff]
    %v238 = vld [vmem:[%s231 + $0x30] sm:$0xff]
    %v239 = vld [vmem:[%s231 + $0x38] sm:$0xff]
    %v240 = vld [vmem:[%s231 + $0x40] sm:$0xff]
    %v241 = vld [vmem:[%s231 + $0x48] sm:$0xff]
    %v242 = vld [vmem:[%s231 + $0x50] sm:$0xff]
    %v243 = vld [vmem:[%s231 + $0x58] sm:$0xff]
    %v244 = vld [vmem:[%s231 + $0x60] sm:$0xff]
    %v245 = vld [vmem:[%s231 + $0x68] sm:$0xff]
    %v246 = vld [vmem:[%s231 + $0x70] sm:$0xff]
    %v247 = vld [vmem:[%s231 + $0x78] sm:$0xff]
    %v249 = vsel %vm92, %v67, 0
    %251 = vmatpush.msra.mxu0 0.0
    %252 = vmatpush.msra.mxu0 0.0
    %253 = vmatpush.msra.mxu0 0.0
    %254 = vmatpush.msra.mxu0 0.0
    %255 = vmatpush.msra.mxu0 0.0
    %256 = vmatpush.msra.mxu0 0.0
    %257 = vmatpush.msra.mxu0 0.0
    %258 = vmatpush.msra.mxu0 0.0
    %259 = vmatpush.msra.mxu0 %v246
    %260 = vmatpush.msra.mxu0 %v244
    %261 = vmatpush.msra.mxu0 %v242
    %262 = vmatpush.msra.mxu0 %v240
    %263 = vmatpush.msra.mxu0 %v238
    %264 = vmatpush.msra.mxu0 %v236
    %265 = vmatpush.msra.mxu0 %v234
    %266 = vmatpush.msra.mxu0 %v232
    %267 = vmatmul.f32.gmra.mxu0 %v249
    %v268 = vpop.f32.mrf.mxu0
    %v269 = vadd.f32 0.0, %v268
    %270 = vdwg.mxu0
    %271 = vmatpush.msra.mxu0 0.0
    %272 = vmatpush.msra.mxu0 0.0
    %273 = vmatpush.msra.mxu0 0.0
    %274 = vmatpush.msra.mxu0 0.0
    %275 = vmatpush.msra.mxu0 0.0
    %276 = vmatpush.msra.mxu0 0.0
    %277 = vmatpush.msra.mxu0 0.0
    %278 = vmatpush.msra.mxu0 0.0
    %279 = vmatpush.msra.mxu0 %v247
    %280 = vmatpush.msra.mxu0 %v245
    %281 = vmatpush.msra.mxu0 %v243
    %282 = vmatpush.msra.mxu0 %v241
    %283 = vmatpush.msra.mxu0 %v239
    %284 = vmatpush.msra.mxu0 %v237
    %285 = vmatpush.msra.mxu0 %v235
    %286 = vmatpush.msra.mxu0 %v233
    %287 = vmatmul.f32.gmra.mxu0 %v249
    %v288 = vpop.f32.mrf.mxu0
    %v289 = vadd.f32 0.0, %v288
    %290 = vdwg.mxu0
    %v292 = vsel %vm92, %v214, 0
    %294 = vmatpush.msra.mxu0 0.0
    %295 = vmatpush.msra.mxu0 0.0
    %296 = vmatpush.msra.mxu0 0.0
    %297 = vmatpush.msra.mxu0 0.0
    %298 = vmatpush.msra.mxu0 0.0
    %299 = vmatpush.msra.mxu0 0.0
    %300 = vmatpush.msra.mxu0 0.0
    %301 = vmatpush.msra.mxu0 0.0
    %302 = vmatpush.msra.mxu0 %v229
    %303 = vmatpush.msra.mxu0 %v227
    %304 = vmatpush.msra.mxu0 %v225
    %305 = vmatpush.msra.mxu0 %v223
    %306 = vmatpush.msra.mxu0 %v221
    %307 = vmatpush.msra.mxu0 %v219
    %308 = vmatpush.msra.mxu0 %v217
    %309 = vmatpush.msra.mxu0 %v215
    %310 = vmatmul.f32.gmra.mxu0 %v292
    %v311 = vpop.f32.mrf.mxu0
    %v312 = vadd.f32 %v269, %v311
    %313 = vdwg.mxu0
    %314 = vmatpush.msra.mxu0 0.0
    %315 = vmatpush.msra.mxu0 0.0
    %316 = vmatpush.msra.mxu0 0.0
    %317 = vmatpush.msra.mxu0 0.0
    %318 = vmatpush.msra.mxu0 0.0
    %319 = vmatpush.msra.mxu0 0.0
    %320 = vmatpush.msra.mxu0 0.0
    %321 = vmatpush.msra.mxu0 0.0
    %322 = vmatpush.msra.mxu0 %v230
    %323 = vmatpush.msra.mxu0 %v228
    %324 = vmatpush.msra.mxu0 %v226
    %325 = vmatpush.msra.mxu0 %v224
    %326 = vmatpush.msra.mxu0 %v222
    %327 = vmatpush.msra.mxu0 %v220
    %328 = vmatpush.msra.mxu0 %v218
    %329 = vmatpush.msra.mxu0 %v216
    %330 = vmatmul.f32.gmra.mxu0 %v292
    %v331 = vpop.f32.mrf.mxu0
    %v332 = vadd.f32 %v289, %v331
    %333 = vdwg.mxu0
    %s334 = scalar_lea.vmem %s6, 2
    %v335 = vld [vmem:[%s334] sm:$0x3]
    %v337 = vperm.slane %v335, 0
    %v338 = vperm.slane %v335, 1
    %v341 = vadd.f32 %v312, %v337
    %v342 = vadd.f32 %v332, %v338
    %v343 = vtanh.pop %v341
    %v344 = vtanh.pop %v342
    %v345 = vmul.f32 %v343, 0.5
    %v346 = vmul.f32 %v344, 0.5
    %v347 = vadd.f32 %v345, 0.5
    %v348 = vadd.f32 %v346, 0.5
    %350 = vrot.lane.b32.xlu0 %v70, 64
    %v351 = vpop.permute.xlu0 %350
    %v353 = vmul.f32 %v347, %v351
    %355 = vrot.lane.b32.xlu0 %v344, 64
    %v356 = vpop.permute.xlu0 %355
    %v358 = vmul.f32 %v347, %v356
    %360 = vrot.lane.b32.xlu0 %v358, 64
    %v361 = vpop.permute.xlu0 %360
    %v363 = vadd.f32 %v353, %v361
    %v364 = vtanh.pop %v363
    %366 = vrot.lane.b32.xlu0 %v364, 64
    %v367 = vpop.permute.xlu0 %366
    %v369 = vmul.f32 %v348, %v367
    %v370 = vld [vmem:[%s7] sm:$0xff]
    %v371 = vld [vmem:[%s7 + $0x8] sm:$0xff]
    %v372 = vld [vmem:[%s7 + $0x10] sm:$0xff]
    %v373 = vld [vmem:[%s7 + $0x18] sm:$0xff]
    %v374 = vld [vmem:[%s7 + $0x20] sm:$0xff]
    %v375 = vld [vmem:[%s7 + $0x28] sm:$0xff]
    %v376 = vld [vmem:[%s7 + $0x30] sm:$0xff]
    %v377 = vld [vmem:[%s7 + $0x38] sm:$0xff]
    %v378 = vld [vmem:[%s8] sm:$0x1]
    %v380 = vperm.slane %v378, 0
    %v383 = vsel %vm92, %v369, 0
    %385 = vmatpush.msra.mxu0 0.0
    %386 = vmatpush.msra.mxu0 0.0
    %387 = vmatpush.msra.mxu0 0.0
    %388 = vmatpush.msra.mxu0 0.0
    %389 = vmatpush.msra.mxu0 0.0
    %390 = vmatpush.msra.mxu0 0.0
    %391 = vmatpush.msra.mxu0 0.0
    %392 = vmatpush.msra.mxu0 0.0
    %393 = vmatpush.msra.mxu0 %v377
    %394 = vmatpush.msra.mxu0 %v376
    %395 = vmatpush.msra.mxu0 %v375
    %396 = vmatpush.msra.mxu0 %v374
    %397 = vmatpush.msra.mxu0 %v373
    %398 = vmatpush.msra.mxu0 %v372
    %399 = vmatpush.msra.mxu0 %v371
    %400 = vmatpush.msra.mxu0 %v370
    %401 = vmatmul.f32.gmra.mxu0 %v383
    %v402 = vpop.f32.mrf.mxu0
    %v403 = vadd.f32 %v380, %v402
    %404 = vdwg.mxu0
    %v405 = vtanh.pop %v403
    %406 = vst.msk [vmem:[#allocation7] sm:$0xff] %vm136, %v405
    %v407 = vld [vmem:[%s3] sm:$0xff]
    %v408 = vld [vmem:[%s3 + $0x8] sm:$0xff]
    %v409 = vld [vmem:[%s3 + $0x10] sm:$0xff]
    %v410 = vld [vmem:[%s3 + $0x18] sm:$0xff]
    %v411 = vld [vmem:[#allocation5] sm:$0xff]
    %v412 = vld [vmem:[#allocation5 + $0x8] sm:$0xff]
    %v413 = vld [vmem:[#allocation5 + $0x10] sm:$0xff]
    %v414 = vld [vmem:[#allocation5 + $0x18] sm:$0xff]
    %v415 = vld [vmem:[#allocation5 + $0x20] sm:$0xff]
    %v416 = vld [vmem:[#allocation5 + $0x28] sm:$0xff]
    %v417 = vld [vmem:[#allocation5 + $0x30] sm:$0xff]
    %v418 = vld [vmem:[#allocation5 + $0x38] sm:$0xff]
    %v419 = vld [vmem:[#allocation5 + $0x40] sm:$0xff]
    %v420 = vld [vmem:[#allocation5 + $0x48] sm:$0xff]
    %v421 = vld [vmem:[#allocation5 + $0x50] sm:$0xff]
    %v422 = vld [vmem:[#allocation5 + $0x58] sm:$0xff]
    %v423 = vld [vmem:[#allocation5 + $0x60] sm:$0xff]
    %v424 = vld [vmem:[#allocation5 + $0x68] sm:$0xff]
    %v425 = vld [vmem:[#allocation5 + $0x70] sm:$0xff]
    %v426 = vld [vmem:[#allocation5 + $0x78] sm:$0xff]
    %427 = vmatpush.msra.mxu0 0.0
    %428 = vmatpush.msra.mxu0 0.0
    %429 = vmatpush.msra.mxu0 0.0
    %430 = vmatpush.msra.mxu0 0.0
    %431 = vmatpush.msra.mxu0 0.0
    %432 = vmatpush.msra.mxu0 0.0
    %433 = vmatpush.msra.mxu0 0.0
    %434 = vmatpush.msra.mxu0 0.0
    %435 = vmatpush.msra.mxu0 %v425
    %436 = vmatpush.msra.mxu0 %v423
    %437 = vmatpush.msra.mxu0 %v421
    %438 = vmatpush.msra.mxu0 %v419
    %439 = vmatpush.msra.mxu0 %v417
    %440 = vmatpush.msra.mxu0 %v415
    %441 = vmatpush.msra.mxu0 %v413
    %442 = vmatpush.msra.mxu0 %v411
    %443 = vmatmul.f32.gmra.mxu0 %v292
    %v444 = vpop.f32.mrf.mxu0
    %v445 = vadd.f32 0.0, %v444
    %446 = vdwg.mxu0
    %447 = vmatpush.msra.mxu0 0.0
    %448 = vmatpush.msra.mxu0 0.0
    %449 = vmatpush.msra.mxu0 0.0
    %450 = vmatpush.msra.mxu0 0.0
    %451 = vmatpush.msra.mxu0 0.0
    %452 = vmatpush.msra.mxu0 0.0
    %453 = vmatpush.msra.mxu0 0.0
    %454 = vmatpush.msra.mxu0 0.0
    %455 = vmatpush.msra.mxu0 %v426
    %456 = vmatpush.msra.mxu0 %v424
    %457 = vmatpush.msra.mxu0 %v422
    %458 = vmatpush.msra.mxu0 %v420
    %459 = vmatpush.msra.mxu0 %v418
    %460 = vmatpush.msra.mxu0 %v416
    %461 = vmatpush.msra.mxu0 %v414
    %462 = vmatpush.msra.mxu0 %v412
    %463 = vmatmul.f32.gmra.mxu0 %v292
    %v464 = vpop.f32.mrf.mxu0
    %v465 = vadd.f32 0.0, %v464
    %466 = vdwg.mxu0
    %v468 = vsel %vm136, %v405, 0
    %470 = vmatpush.msra.mxu0 0.0
    %471 = vmatpush.msra.mxu0 0.0
    %472 = vmatpush.msra.mxu0 0.0
    %473 = vmatpush.msra.mxu0 0.0
    %474 = vmatpush.msra.mxu0 0.0
    %475 = vmatpush.msra.mxu0 0.0
    %476 = vmatpush.msra.mxu0 0.0
    %477 = vmatpush.msra.mxu0 0.0
    %478 = vmatpush.msra.mxu0 0.0
    %479 = vmatpush.msra.mxu0 0.0
    %480 = vmatpush.msra.mxu0 0.0
    %481 = vmatpush.msra.mxu0 0.0
    %482 = vmatpush.msra.mxu0 0.0
    %483 = vmatpush.msra.mxu0 0.0
    %484 = vmatpush.msra.mxu0 %v409
    %485 = vmatpush.msra.mxu0 %v407
    %486 = vmatmul.f32.gmra.mxu0 %v468
    %v487 = vpop.f32.mrf.mxu0
    %v488 = vadd.f32 %v445, %v487
    %489 = vdwg.mxu0
    %490 = vmatpush.msra.mxu0 0.0
    %491 = vmatpush.msra.mxu0 0.0
    %492 = vmatpush.msra.mxu0 0.0
    %493 = vmatpush.msra.mxu0 0.0
    %494 = vmatpush.msra.mxu0 0.0
    %495 = vmatpush.msra.mxu0 0.0
    %496 = vmatpush.msra.mxu0 0.0
    %497 = vmatpush.msra.mxu0 0.0
    %498 = vmatpush.msra.mxu0 0.0
    %499 = vmatpush.msra.mxu0 0.0
    %500 = vmatpush.msra.mxu0 0.0
    %501 = vmatpush.msra.mxu0 0.0
    %502 = vmatpush.msra.mxu0 0.0
    %503 = vmatpush.msra.mxu0 0.0
    %504 = vmatpush.msra.mxu0 %v410
    %505 = vmatpush.msra.mxu0 %v408
    %506 = vmatmul.f32.gmra.mxu0 %v468
    %v507 = vpop.f32.mrf.mxu0
    %v508 = vadd.f32 %v465, %v507
    %509 = vdwg.mxu0
    %v510 = vld [vmem:[%s6] sm:$0x3]
    %v512 = vperm.slane %v510, 0
    %v513 = vperm.slane %v510, 1
    %v516 = vadd.f32 %v488, %v512
    %v517 = vadd.f32 %v508, %v513
    %v518 = vtanh.pop %v516
    %v519 = vtanh.pop %v517
    %v520 = vmul.f32 %v518, 0.5
    %v521 = vmul.f32 %v519, 0.5
    %v522 = vadd.f32 %v520, 0.5
    %v523 = vadd.f32 %v521, 0.5
    %v524 = vmul.f32 %v522, %v208
    %526 = vrot.lane.b32.xlu0 %v519, 64
    %v527 = vpop.permute.xlu0 %526
    %v529 = vmul.f32 %v522, %v527
    %531 = vrot.lane.b32.xlu0 %v529, 64
    %v532 = vpop.permute.xlu0 %531
    %v534 = vadd.f32 %v524, %v532
    %v535 = vtanh.pop %v534
    %537 = vrot.lane.b32.xlu0 %v535, 64
    %v538 = vpop.permute.xlu0 %537
    %v540 = vmul.f32 %v523, %v538
    %v541 = vld [vmem:[#allocation2] sm:$0xff]
    %v542 = vld [vmem:[#allocation2 + $0x8] sm:$0xff]
    %v543 = vld [vmem:[#allocation2 + $0x10] sm:$0xff]
    %v544 = vld [vmem:[#allocation2 + $0x18] sm:$0xff]
    %v545 = vld [vmem:[#allocation2 + $0x20] sm:$0xff]
    %v546 = vld [vmem:[#allocation2 + $0x28] sm:$0xff]
    %v547 = vld [vmem:[#allocation2 + $0x30] sm:$0xff]
    %v548 = vld [vmem:[#allocation2 + $0x38] sm:$0xff]
    %v549 = vld [vmem:[#allocation2 + $0x40] sm:$0xff]
    %v550 = vld [vmem:[#allocation2 + $0x48] sm:$0xff]
    %v551 = vld [vmem:[#allocation2 + $0x50] sm:$0xff]
    %v552 = vld [vmem:[#allocation2 + $0x58] sm:$0xff]
    %v553 = vld [vmem:[#allocation2 + $0x60] sm:$0xff]
    %v554 = vld [vmem:[#allocation2 + $0x68] sm:$0xff]
    %v555 = vld [vmem:[#allocation2 + $0x70] sm:$0xff]
    %v556 = vld [vmem:[#allocation2 + $0x78] sm:$0xff]
    %v557 = vld [vmem:[%s231] sm:$0xff]
    %v558 = vld [vmem:[%s231 + $0x8] sm:$0xff]
    %v559 = vld [vmem:[%s231 + $0x10] sm:$0xff]
    %v560 = vld [vmem:[%s231 + $0x18] sm:$0xff]
    %v561 = vld [vmem:[%s231 + $0x20] sm:$0xff]
    %v562 = vld [vmem:[%s231 + $0x28] sm:$0xff]
    %v563 = vld [vmem:[%s231 + $0x30] sm:$0xff]
    %v564 = vld [vmem:[%s231 + $0x38] sm:$0xff]
    %v565 = vld [vmem:[%s231 + $0x40] sm:$0xff]
    %v566 = vld [vmem:[%s231 + $0x48] sm:$0xff]
    %v567 = vld [vmem:[%s231 + $0x50] sm:$0xff]
    %v568 = vld [vmem:[%s231 + $0x58] sm:$0xff]
    %v569 = vld [vmem:[%s231 + $0x60] sm:$0xff]
    %v570 = vld [vmem:[%s231 + $0x68] sm:$0xff]
    %v571 = vld [vmem:[%s231 + $0x70] sm:$0xff]
    %v572 = vld [vmem:[%s231 + $0x78] sm:$0xff]
    %573 = vmatpush.msra.mxu0 0.0
    %574 = vmatpush.msra.mxu0 0.0
    %575 = vmatpush.msra.mxu0 0.0
    %576 = vmatpush.msra.mxu0 0.0
    %577 = vmatpush.msra.mxu0 0.0
    %578 = vmatpush.msra.mxu0 0.0
    %579 = vmatpush.msra.mxu0 0.0
    %580 = vmatpush.msra.mxu0 0.0
    %581 = vmatpush.msra.mxu0 %v571
    %582 = vmatpush.msra.mxu0 %v569
    %583 = vmatpush.msra.mxu0 %v567
    %584 = vmatpush.msra.mxu0 %v565
    %585 = vmatpush.msra.mxu0 %v563
    %586 = vmatpush.msra.mxu0 %v561
    %587 = vmatpush.msra.mxu0 %v559
    %588 = vmatpush.msra.mxu0 %v557
    %589 = vmatmul.f32.gmra.mxu0 %v383
    %v590 = vpop.f32.mrf.mxu0
    %v591 = vadd.f32 0.0, %v590
    %592 = vdwg.mxu0
    %593 = vmatpush.msra.mxu0 0.0
    %594 = vmatpush.msra.mxu0 0.0
    %595 = vmatpush.msra.mxu0 0.0
    %596 = vmatpush.msra.mxu0 0.0
    %597 = vmatpush.msra.mxu0 0.0
    %598 = vmatpush.msra.mxu0 0.0
    %599 = vmatpush.msra.mxu0 0.0
    %600 = vmatpush.msra.mxu0 0.0
    %601 = vmatpush.msra.mxu0 %v572
    %602 = vmatpush.msra.mxu0 %v570
    %603 = vmatpush.msra.mxu0 %v568
    %604 = vmatpush.msra.mxu0 %v566
    %605 = vmatpush.msra.mxu0 %v564
    %606 = vmatpush.msra.mxu0 %v562
    %607 = vmatpush.msra.mxu0 %v560
    %608 = vmatpush.msra.mxu0 %v558
    %609 = vmatmul.f32.gmra.mxu0 %v383
    %v610 = vpop.f32.mrf.mxu0
    %v611 = vadd.f32 0.0, %v610
    %612 = vdwg.mxu0
    %v614 = vsel %vm92, %v540, 0
    %616 = vmatpush.msra.mxu0 0.0
    %617 = vmatpush.msra.mxu0 0.0
    %618 = vmatpush.msra.mxu0 0.0
    %619 = vmatpush.msra.mxu0 0.0
    %620 = vmatpush.msra.mxu0 0.0
    %621 = vmatpush.msra.mxu0 0.0
    %622 = vmatpush.msra.mxu0 0.0
    %623 = vmatpush.msra.mxu0 0.0
    %624 = vmatpush.msra.mxu0 %v555
    %625 = vmatpush.msra.mxu0 %v553
    %626 = vmatpush.msra.mxu0 %v551
    %627 = vmatpush.msra.mxu0 %v549
    %628 = vmatpush.msra.mxu0 %v547
    %629 = vmatpush.msra.mxu0 %v545
    %630 = vmatpush.msra.mxu0 %v543
    %631 = vmatpush.msra.mxu0 %v541
    %632 = vmatmul.f32.gmra.mxu0 %v614
    %v633 = vpop.f32.mrf.mxu0
    %v634 = vadd.f32 %v591, %v633
    %635 = vdwg.mxu0
    %636 = vmatpush.msra.mxu0 0.0
    %637 = vmatpush.msra.mxu0 0.0
    %638 = vmatpush.msra.mxu0 0.0
    %639 = vmatpush.msra.mxu0 0.0
    %640 = vmatpush.msra.mxu0 0.0
    %641 = vmatpush.msra.mxu0 0.0
    %642 = vmatpush.msra.mxu0 0.0
    %643 = vmatpush.msra.mxu0 0.0
    %644 = vmatpush.msra.mxu0 %v556
    %645 = vmatpush.msra.mxu0 %v554
    %646 = vmatpush.msra.mxu0 %v552
    %647 = vmatpush.msra.mxu0 %v550
    %648 = vmatpush.msra.mxu0 %v548
    %649 = vmatpush.msra.mxu0 %v546
    %650 = vmatpush.msra.mxu0 %v544
    %651 = vmatpush.msra.mxu0 %v542
    %652 = vmatmul.f32.gmra.mxu0 %v614
    %v653 = vpop.f32.mrf.mxu0
    %v654 = vadd.f32 %v611, %v653
    %655 = vdwg.mxu0
    %v656 = vld [vmem:[%s334] sm:$0x3]
    %v658 = vperm.slane %v656, 0
    %v659 = vperm.slane %v656, 1
    %v662 = vadd.f32 %v634, %v658
    %v663 = vadd.f32 %v654, %v659
    %v664 = vtanh.pop %v662
    %v665 = vtanh.pop %v663
    %v666 = vmul.f32 %v664, 0.5
    %v667 = vmul.f32 %v665, 0.5
    %v668 = vadd.f32 %v666, 0.5
    %v669 = vadd.f32 %v667, 0.5
    %v670 = vmul.f32 %v668, %v363
    %672 = vrot.lane.b32.xlu0 %v665, 64
    %v673 = vpop.permute.xlu0 %672
    %v675 = vmul.f32 %v668, %v673
    %677 = vrot.lane.b32.xlu0 %v675, 64
    %v678 = vpop.permute.xlu0 %677
    %v680 = vadd.f32 %v670, %v678
    %v681 = vtanh.pop %v680
    %683 = vrot.lane.b32.xlu0 %v681, 64
    %v684 = vpop.permute.xlu0 %683
    %v686 = vmul.f32 %v669, %v684
    %v687 = vld [vmem:[%s7] sm:$0xff]
    %v688 = vld [vmem:[%s7 + $0x8] sm:$0xff]
    %v689 = vld [vmem:[%s7 + $0x10] sm:$0xff]
    %v690 = vld [vmem:[%s7 + $0x18] sm:$0xff]
    %v691 = vld [vmem:[%s7 + $0x20] sm:$0xff]
    %v692 = vld [vmem:[%s7 + $0x28] sm:$0xff]
    %v693 = vld [vmem:[%s7 + $0x30] sm:$0xff]
    %v694 = vld [vmem:[%s7 + $0x38] sm:$0xff]
    %v695 = vld [vmem:[%s8] sm:$0x1]
    %v697 = vperm.slane %v695, 0
    %v700 = vsel %vm92, %v686, 0
    %702 = vmatpush.msra.mxu0 0.0
    %703 = vmatpush.msra.mxu0 0.0
    %704 = vmatpush.msra.mxu0 0.0
    %705 = vmatpush.msra.mxu0 0.0
    %706 = vmatpush.msra.mxu0 0.0
    %707 = vmatpush.msra.mxu0 0.0
    %708 = vmatpush.msra.mxu0 0.0
    %709 = vmatpush.msra.mxu0 0.0
    %710 = vmatpush.msra.mxu0 %v694
    %711 = vmatpush.msra.mxu0 %v693
    %712 = vmatpush.msra.mxu0 %v692
    %713 = vmatpush.msra.mxu0 %v691
    %714 = vmatpush.msra.mxu0 %v690
    %715 = vmatpush.msra.mxu0 %v689
    %716 = vmatpush.msra.mxu0 %v688
    %717 = vmatpush.msra.mxu0 %v687
    %718 = vmatmul.f32.gmra.mxu0 %v700
    %v719 = vpop.f32.mrf.mxu0
    %v720 = vadd.f32 %v697, %v719
    %721 = vdwg.mxu0
    %v722 = vtanh.pop %v720
    %s723 = scalar_lea.vmem [#allocation7], 8
    %724 = vst.msk [vmem:[%s723] sm:$0xff] %vm136, %v722
    %v725 = vld [vmem:[%s3] sm:$0xff]
    %v726 = vld [vmem:[%s3 + $0x8] sm:$0xff]
    %v727 = vld [vmem:[%s3 + $0x10] sm:$0xff]
    %v728 = vld [vmem:[%s3 + $0x18] sm:$0xff]
    %v729 = vld [vmem:[#allocation5] sm:$0xff]
    %v730 = vld [vmem:[#allocation5 + $0x8] sm:$0xff]
    %v731 = vld [vmem:[#allocation5 + $0x10] sm:$0xff]
    %v732 = vld [vmem:[#allocation5 + $0x18] sm:$0xff]
    %v733 = vld [vmem:[#allocation5 + $0x20] sm:$0xff]
    %v734 = vld [vmem:[#allocation5 + $0x28] sm:$0xff]
    %v735 = vld [vmem:[#allocation5 + $0x30] sm:$0xff]
    %v736 = vld [vmem:[#allocation5 + $0x38] sm:$0xff]
    %v737 = vld [vmem:[#allocation5 + $0x40] sm:$0xff]
    %v738 = vld [vmem:[#allocation5 + $0x48] sm:$0xff]
    %v739 = vld [vmem:[#allocation5 + $0x50] sm:$0xff]
    %v740 = vld [vmem:[#allocation5 + $0x58] sm:$0xff]
    %v741 = vld [vmem:[#allocation5 + $0x60] sm:$0xff]
    %v742 = vld [vmem:[#allocation5 + $0x68] sm:$0xff]
    %v743 = vld [vmem:[#allocation5 + $0x70] sm:$0xff]
    %v744 = vld [vmem:[#allocation5 + $0x78] sm:$0xff]
    %745 = vmatpush.msra.mxu0 0.0
    %746 = vmatpush.msra.mxu0 0.0
    %747 = vmatpush.msra.mxu0 0.0
    %748 = vmatpush.msra.mxu0 0.0
    %749 = vmatpush.msra.mxu0 0.0
    %750 = vmatpush.msra.mxu0 0.0
    %751 = vmatpush.msra.mxu0 0.0
    %752 = vmatpush.msra.mxu0 0.0
    %753 = vmatpush.msra.mxu0 %v743
    %754 = vmatpush.msra.mxu0 %v741
    %755 = vmatpush.msra.mxu0 %v739
    %756 = vmatpush.msra.mxu0 %v737
    %757 = vmatpush.msra.mxu0 %v735
    %758 = vmatpush.msra.mxu0 %v733
    %759 = vmatpush.msra.mxu0 %v731
    %760 = vmatpush.msra.mxu0 %v729
    %761 = vmatmul.f32.gmra.mxu0 %v614
    %v762 = vpop.f32.mrf.mxu0
    %v763 = vadd.f32 0.0, %v762
    %764 = vdwg.mxu0
    %765 = vmatpush.msra.mxu0 0.0
    %766 = vmatpush.msra.mxu0 0.0
    %767 = vmatpush.msra.mxu0 0.0
    %768 = vmatpush.msra.mxu0 0.0
    %769 = vmatpush.msra.mxu0 0.0
    %770 = vmatpush.msra.mxu0 0.0
    %771 = vmatpush.msra.mxu0 0.0
    %772 = vmatpush.msra.mxu0 0.0
    %773 = vmatpush.msra.mxu0 %v744
    %774 = vmatpush.msra.mxu0 %v742
    %775 = vmatpush.msra.mxu0 %v740
    %776 = vmatpush.msra.mxu0 %v738
    %777 = vmatpush.msra.mxu0 %v736
    %778 = vmatpush.msra.mxu0 %v734
    %779 = vmatpush.msra.mxu0 %v732
    %780 = vmatpush.msra.mxu0 %v730
    %781 = vmatmul.f32.gmra.mxu0 %v614
    %v782 = vpop.f32.mrf.mxu0
    %v783 = vadd.f32 0.0, %v782
    %784 = vdwg.mxu0
    %v786 = vsel %vm136, %v722, 0
    %788 = vmatpush.msra.mxu0 0.0
    %789 = vmatpush.msra.mxu0 0.0
    %790 = vmatpush.msra.mxu0 0.0
    %791 = vmatpush.msra.mxu0 0.0
    %792 = vmatpush.msra.mxu0 0.0
    %793 = vmatpush.msra.mxu0 0.0
    %794 = vmatpush.msra.mxu0 0.0
    %795 = vmatpush.msra.mxu0 0.0
    %796 = vmatpush.msra.mxu0 0.0
    %797 = vmatpush.msra.mxu0 0.0
    %798 = vmatpush.msra.mxu0 0.0
    %799 = vmatpush.msra.mxu0 0.0
    %800 = vmatpush.msra.mxu0 0.0
    %801 = vmatpush.msra.mxu0 0.0
    %802 = vmatpush.msra.mxu0 %v727
    %803 = vmatpush.msra.mxu0 %v725
    %804 = vmatmul.f32.gmra.mxu0 %v786
    %v805 = vpop.f32.mrf.mxu0
    %v806 = vadd.f32 %v763, %v805
    %807 = vdwg.mxu0
    %808 = vmatpush.msra.mxu0 0.0
    %809 = vmatpush.msra.mxu0 0.0
    %810 = vmatpush.msra.mxu0 0.0
    %811 = vmatpush.msra.mxu0 0.0
    %812 = vmatpush.msra.mxu0 0.0
    %813 = vmatpush.msra.mxu0 0.0
    %814 = vmatpush.msra.mxu0 0.0
    %815 = vmatpush.msra.mxu0 0.0
    %816 = vmatpush.msra.mxu0 0.0
    %817 = vmatpush.msra.mxu0 0.0
    %818 = vmatpush.msra.mxu0 0.0
    %819 = vmatpush.msra.mxu0 0.0
    %820 = vmatpush.msra.mxu0 0.0
    %821 = vmatpush.msra.mxu0 0.0
    %822 = vmatpush.msra.mxu0 %v728
    %823 = vmatpush.msra.mxu0 %v726
    %824 = vmatmul.f32.gmra.mxu0 %v786
    %v825 = vpop.f32.mrf.mxu0
    %v826 = vadd.f32 %v783, %v825
    %827 = vdwg.mxu0
    %v828 = vld [vmem:[%s6] sm:$0x3]
    %v830 = vperm.slane %v828, 0
    %v831 = vperm.slane %v828, 1
    %v834 = vadd.f32 %v806, %v830
    %v835 = vadd.f32 %v826, %v831
    %v836 = vtanh.pop %v834
    %v837 = vtanh.pop %v835
    %v838 = vmul.f32 %v836, 0.5
    %v839 = vmul.f32 %v837, 0.5
    %v840 = vadd.f32 %v838, 0.5
    %v841 = vadd.f32 %v839, 0.5
    %v842 = vmul.f32 %v840, %v534
    %844 = vrot.lane.b32.xlu0 %v837, 64
    %v845 = vpop.permute.xlu0 %844
    %v847 = vmul.f32 %v840, %v845
    %849 = vrot.lane.b32.xlu0 %v847, 64
    %v850 = vpop.permute.xlu0 %849
    %v852 = vadd.f32 %v842, %v850
    %v853 = vtanh.pop %v852
    %855 = vrot.lane.b32.xlu0 %v853, 64
    %v856 = vpop.permute.xlu0 %855
    %v858 = vmul.f32 %v841, %v856
    %v859 = vld [vmem:[#allocation2] sm:$0xff]
    %v860 = vld [vmem:[#allocation2 + $0x8] sm:$0xff]
    %v861 = vld [vmem:[#allocation2 + $0x10] sm:$0xff]
    %v862 = vld [vmem:[#allocation2 + $0x18] sm:$0xff]
    %v863 = vld [vmem:[#allocation2 + $0x20] sm:$0xff]
    %v864 = vld [vmem:[#allocation2 + $0x28] sm:$0xff]
    %v865 = vld [vmem:[#allocation2 + $0x30] sm:$0xff]
    %v866 = vld [vmem:[#allocation2 + $0x38] sm:$0xff]
    %v867 = vld [vmem:[#allocation2 + $0x40] sm:$0xff]
    %v868 = vld [vmem:[#allocation2 + $0x48] sm:$0xff]
    %v869 = vld [vmem:[#allocation2 + $0x50] sm:$0xff]
    %v870 = vld [vmem:[#allocation2 + $0x58] sm:$0xff]
    %v871 = vld [vmem:[#allocation2 + $0x60] sm:$0xff]
    %v872 = vld [vmem:[#allocation2 + $0x68] sm:$0xff]
    %v873 = vld [vmem:[#allocation2 + $0x70] sm:$0xff]
    %v874 = vld [vmem:[#allocation2 + $0x78] sm:$0xff]
    %v875 = vld [vmem:[%s231] sm:$0xff]
    %v876 = vld [vmem:[%s231 + $0x8] sm:$0xff]
    %v877 = vld [vmem:[%s231 + $0x10] sm:$0xff]
    %v878 = vld [vmem:[%s231 + $0x18] sm:$0xff]
    %v879 = vld [vmem:[%s231 + $0x20] sm:$0xff]
    %v880 = vld [vmem:[%s231 + $0x28] sm:$0xff]
    %v881 = vld [vmem:[%s231 + $0x30] sm:$0xff]
    %v882 = vld [vmem:[%s231 + $0x38] sm:$0xff]
    %v883 = vld [vmem:[%s231 + $0x40] sm:$0xff]
    %v884 = vld [vmem:[%s231 + $0x48] sm:$0xff]
    %v885 = vld [vmem:[%s231 + $0x50] sm:$0xff]
    %v886 = vld [vmem:[%s231 + $0x58] sm:$0xff]
    %v887 = vld [vmem:[%s231 + $0x60] sm:$0xff]
    %v888 = vld [vmem:[%s231 + $0x68] sm:$0xff]
    %v889 = vld [vmem:[%s231 + $0x70] sm:$0xff]
    %v890 = vld [vmem:[%s231 + $0x78] sm:$0xff]
    %891 = vmatpush.msra.mxu0 0.0
    %892 = vmatpush.msra.mxu0 0.0
    %893 = vmatpush.msra.mxu0 0.0
    %894 = vmatpush.msra.mxu0 0.0
    %895 = vmatpush.msra.mxu0 0.0
    %896 = vmatpush.msra.mxu0 0.0
    %897 = vmatpush.msra.mxu0 0.0
    %898 = vmatpush.msra.mxu0 0.0
    %899 = vmatpush.msra.mxu0 %v889
    %900 = vmatpush.msra.mxu0 %v887
    %901 = vmatpush.msra.mxu0 %v885
    %902 = vmatpush.msra.mxu0 %v883
    %903 = vmatpush.msra.mxu0 %v881
    %904 = vmatpush.msra.mxu0 %v879
    %905 = vmatpush.msra.mxu0 %v877
    %906 = vmatpush.msra.mxu0 %v875
    %907 = vmatmul.f32.gmra.mxu0 %v700
    %v908 = vpop.f32.mrf.mxu0
    %v909 = vadd.f32 0.0, %v908
    %910 = vdwg.mxu0
    %911 = vmatpush.msra.mxu0 0.0
    %912 = vmatpush.msra.mxu0 0.0
    %913 = vmatpush.msra.mxu0 0.0
    %914 = vmatpush.msra.mxu0 0.0
    %915 = vmatpush.msra.mxu0 0.0
    %916 = vmatpush.msra.mxu0 0.0
    %917 = vmatpush.msra.mxu0 0.0
    %918 = vmatpush.msra.mxu0 0.0
    %919 = vmatpush.msra.mxu0 %v890
    %920 = vmatpush.msra.mxu0 %v888
    %921 = vmatpush.msra.mxu0 %v886
    %922 = vmatpush.msra.mxu0 %v884
    %923 = vmatpush.msra.mxu0 %v882
    %924 = vmatpush.msra.mxu0 %v880
    %925 = vmatpush.msra.mxu0 %v878
    %926 = vmatpush.msra.mxu0 %v876
    %927 = vmatmul.f32.gmra.mxu0 %v700
    %v928 = vpop.f32.mrf.mxu0
    %v929 = vadd.f32 0.0, %v928
    %930 = vdwg.mxu0
    %v932 = vsel %vm92, %v858, 0
    %934 = vmatpush.msra.mxu0 0.0
    %935 = vmatpush.msra.mxu0 0.0
    %936 = vmatpush.msra.mxu0 0.0
    %937 = vmatpush.msra.mxu0 0.0
    %938 = vmatpush.msra.mxu0 0.0
    %939 = vmatpush.msra.mxu0 0.0
    %940 = vmatpush.msra.mxu0 0.0
    %941 = vmatpush.msra.mxu0 0.0
    %942 = vmatpush.msra.mxu0 %v873
    %943 = vmatpush.msra.mxu0 %v871
    %944 = vmatpush.msra.mxu0 %v869
    %945 = vmatpush.msra.mxu0 %v867
    %946 = vmatpush.msra.mxu0 %v865
    %947 = vmatpush.msra.mxu0 %v863
    %948 = vmatpush.msra.mxu0 %v861
    %949 = vmatpush.msra.mxu0 %v859
    %950 = vmatmul.f32.gmra.mxu0 %v932
    %v951 = vpop.f32.mrf.mxu0
    %v952 = vadd.f32 %v909, %v951
    %953 = vdwg.mxu0
    %954 = vmatpush.msra.mxu0 0.0
    %955 = vmatpush.msra.mxu0 0.0
    %956 = vmatpush.msra.mxu0 0.0
    %957 = vmatpush.msra.mxu0 0.0
    %958 = vmatpush.msra.mxu0 0.0
    %959 = vmatpush.msra.mxu0 0.0
    %960 = vmatpush.msra.mxu0 0.0
    %961 = vmatpush.msra.mxu0 0.0
    %962 = vmatpush.msra.mxu0 %v874
    %963 = vmatpush.msra.mxu0 %v872
    %964 = vmatpush.msra.mxu0 %v870
    %965 = vmatpush.msra.mxu0 %v868
    %966 = vmatpush.msra.mxu0 %v866
    %967 = vmatpush.msra.mxu0 %v864
    %968 = vmatpush.msra.mxu0 %v862
    %969 = vmatpush.msra.mxu0 %v860
    %970 = vmatmul.f32.gmra.mxu0 %v932
    %v971 = vpop.f32.mrf.mxu0
    %v972 = vadd.f32 %v929, %v971
    %973 = vdwg.mxu0
    %v974 = vld [vmem:[%s334] sm:$0x3]
    %v976 = vperm.slane %v974, 0
    %v977 = vperm.slane %v974, 1
    %v980 = vadd.f32 %v952, %v976
    %v981 = vadd.f32 %v972, %v977
    %v982 = vtanh.pop %v980
    %v983 = vtanh.pop %v981
    %v984 = vmul.f32 %v982, 0.5
    %v985 = vmul.f32 %v983, 0.5
    %v986 = vadd.f32 %v984, 0.5
    %v987 = vadd.f32 %v985, 0.5
    %v988 = vmul.f32 %v986, %v680
    %990 = vrot.lane.b32.xlu0 %v983, 64
    %v991 = vpop.permute.xlu0 %990
    %v993 = vmul.f32 %v986, %v991
    %995 = vrot.lane.b32.xlu0 %v993, 64
    %v996 = vpop.permute.xlu0 %995
    %v998 = vadd.f32 %v988, %v996
    %v999 = vtanh.pop %v998
    %1001 = vrot.lane.b32.xlu0 %v999, 64
    %v1002 = vpop.permute.xlu0 %1001
    %v1004 = vmul.f32 %v987, %v1002
    %v1005 = vld [vmem:[%s7] sm:$0xff]
    %v1006 = vld [vmem:[%s7 + $0x8] sm:$0xff]
    %v1007 = vld [vmem:[%s7 + $0x10] sm:$0xff]
    %v1008 = vld [vmem:[%s7 + $0x18] sm:$0xff]
    %v1009 = vld [vmem:[%s7 + $0x20] sm:$0xff]
    %v1010 = vld [vmem:[%s7 + $0x28] sm:$0xff]
    %v1011 = vld [vmem:[%s7 + $0x30] sm:$0xff]
    %v1012 = vld [vmem:[%s7 + $0x38] sm:$0xff]
    %v1013 = vld [vmem:[%s8] sm:$0x1]
    %v1015 = vperm.slane %v1013, 0
    %v1018 = vsel %vm92, %v1004, 0
    %1020 = vmatpush.msra.mxu0 0.0
    %1021 = vmatpush.msra.mxu0 0.0
    %1022 = vmatpush.msra.mxu0 0.0
    %1023 = vmatpush.msra.mxu0 0.0
    %1024 = vmatpush.msra.mxu0 0.0
    %1025 = vmatpush.msra.mxu0 0.0
    %1026 = vmatpush.msra.mxu0 0.0
    %1027 = vmatpush.msra.mxu0 0.0
    %1028 = vmatpush.msra.mxu0 %v1012
    %1029 = vmatpush.msra.mxu0 %v1011
    %1030 = vmatpush.msra.mxu0 %v1010
    %1031 = vmatpush.msra.mxu0 %v1009
    %1032 = vmatpush.msra.mxu0 %v1008
    %1033 = vmatpush.msra.mxu0 %v1007
    %1034 = vmatpush.msra.mxu0 %v1006
    %1035 = vmatpush.msra.mxu0 %v1005
    %1036 = vmatmul.f32.gmra.mxu0 %v1018
    %v1037 = vpop.f32.mrf.mxu0
    %v1038 = vadd.f32 %v1015, %v1037
    %1039 = vdwg.mxu0
    %v1040 = vtanh.pop %v1038
    %s1041 = scalar_lea.vmem [#allocation7], 16
    %1042 = vst.msk [vmem:[%s1041] sm:$0xff] %vm136, %v1040
    %v1043 = vld [vmem:[%s3] sm:$0xff]
    %v1044 = vld [vmem:[%s3 + $0x8] sm:$0xff]
    %v1045 = vld [vmem:[%s3 + $0x10] sm:$0xff]
    %v1046 = vld [vmem:[%s3 + $0x18] sm:$0xff]
    %v1047 = vld [vmem:[#allocation5] sm:$0xff]
    %v1048 = vld [vmem:[#allocation5 + $0x8] sm:$0xff]
    %v1049 = vld [vmem:[#allocation5 + $0x10] sm:$0xff]
    %v1050 = vld [vmem:[#allocation5 + $0x18] sm:$0xff]
    %v1051 = vld [vmem:[#allocation5 + $0x20] sm:$0xff]
    %v1052 = vld [vmem:[#allocation5 + $0x28] sm:$0xff]
    %v1053 = vld [vmem:[#allocation5 + $0x30] sm:$0xff]
    %v1054 = vld [vmem:[#allocation5 + $0x38] sm:$0xff]
    %v1055 = vld [vmem:[#allocation5 + $0x40] sm:$0xff]
    %v1056 = vld [vmem:[#allocation5 + $0x48] sm:$0xff]
    %v1057 = vld [vmem:[#allocation5 + $0x50] sm:$0xff]
    %v1058 = vld [vmem:[#allocation5 + $0x58] sm:$0xff]
    %v1059 = vld [vmem:[#allocation5 + $0x60] sm:$0xff]
    %v1060 = vld [vmem:[#allocation5 + $0x68] sm:$0xff]
    %v1061 = vld [vmem:[#allocation5 + $0x70] sm:$0xff]
    %v1062 = vld [vmem:[#allocation5 + $0x78] sm:$0xff]
    %1063 = vmatpush.msra.mxu0 0.0
    %1064 = vmatpush.msra.mxu0 0.0
    %1065 = vmatpush.msra.mxu0 0.0
    %1066 = vmatpush.msra.mxu0 0.0
    %1067 = vmatpush.msra.mxu0 0.0
    %1068 = vmatpush.msra.mxu0 0.0
    %1069 = vmatpush.msra.mxu0 0.0
    %1070 = vmatpush.msra.mxu0 0.0
    %1071 = vmatpush.msra.mxu0 %v1061
    %1072 = vmatpush.msra.mxu0 %v1059
    %1073 = vmatpush.msra.mxu0 %v1057
    %1074 = vmatpush.msra.mxu0 %v1055
    %1075 = vmatpush.msra.mxu0 %v1053
    %1076 = vmatpush.msra.mxu0 %v1051
    %1077 = vmatpush.msra.mxu0 %v1049
    %1078 = vmatpush.msra.mxu0 %v1047
    %1079 = vmatmul.f32.gmra.mxu0 %v932
    %v1080 = vpop.f32.mrf.mxu0
    %v1081 = vadd.f32 0.0, %v1080
    %1082 = vdwg.mxu0
    %1083 = vmatpush.msra.mxu0 0.0
    %1084 = vmatpush.msra.mxu0 0.0
    %1085 = vmatpush.msra.mxu0 0.0
    %1086 = vmatpush.msra.mxu0 0.0
    %1087 = vmatpush.msra.mxu0 0.0
    %1088 = vmatpush.msra.mxu0 0.0
    %1089 = vmatpush.msra.mxu0 0.0
    %1090 = vmatpush.msra.mxu0 0.0
    %1091 = vmatpush.msra.mxu0 %v1062
    %1092 = vmatpush.msra.mxu0 %v1060
    %1093 = vmatpush.msra.mxu0 %v1058
    %1094 = vmatpush.msra.mxu0 %v1056
    %1095 = vmatpush.msra.mxu0 %v1054
    %1096 = vmatpush.msra.mxu0 %v1052
    %1097 = vmatpush.msra.mxu0 %v1050
    %1098 = vmatpush.msra.mxu0 %v1048
    %1099 = vmatmul.f32.gmra.mxu0 %v932
    %v1100 = vpop.f32.mrf.mxu0
    %v1101 = vadd.f32 0.0, %v1100
    %1102 = vdwg.mxu0
    %v1104 = vsel %vm136, %v1040, 0
    %1106 = vmatpush.msra.mxu0 0.0
    %1107 = vmatpush.msra.mxu0 0.0
    %1108 = vmatpush.msra.mxu0 0.0
    %1109 = vmatpush.msra.mxu0 0.0
    %1110 = vmatpush.msra.mxu0 0.0
    %1111 = vmatpush.msra.mxu0 0.0
    %1112 = vmatpush.msra.mxu0 0.0
    %1113 = vmatpush.msra.mxu0 0.0
    %1114 = vmatpush.msra.mxu0 0.0
    %1115 = vmatpush.msra.mxu0 0.0
    %1116 = vmatpush.msra.mxu0 0.0
    %1117 = vmatpush.msra.mxu0 0.0
    %1118 = vmatpush.msra.mxu0 0.0
    %1119 = vmatpush.msra.mxu0 0.0
    %1120 = vmatpush.msra.mxu0 %v1045
    %1121 = vmatpush.msra.mxu0 %v1043
    %1122 = vmatmul.f32.gmra.mxu0 %v1104
    %v1123 = vpop.f32.mrf.mxu0
    %v1124 = vadd.f32 %v1081, %v1123
    %1125 = vdwg.mxu0
    %1126 = vmatpush.msra.mxu0 0.0
    %1127 = vmatpush.msra.mxu0 0.0
    %1128 = vmatpush.msra.mxu0 0.0
    %1129 = vmatpush.msra.mxu0 0.0
    %1130 = vmatpush.msra.mxu0 0.0
    %1131 = vmatpush.msra.mxu0 0.0
    %1132 = vmatpush.msra.mxu0 0.0
    %1133 = vmatpush.msra.mxu0 0.0
    %1134 = vmatpush.msra.mxu0 0.0
    %1135 = vmatpush.msra.mxu0 0.0
    %1136 = vmatpush.msra.mxu0 0.0
    %1137 = vmatpush.msra.mxu0 0.0
    %1138 = vmatpush.msra.mxu0 0.0
    %1139 = vmatpush.msra.mxu0 0.0
    %1140 = vmatpush.msra.mxu0 %v1046
    %1141 = vmatpush.msra.mxu0 %v1044
    %1142 = vmatmul.f32.gmra.mxu0 %v1104
    %v1143 = vpop.f32.mrf.mxu0
    %v1144 = vadd.f32 %v1101, %v1143
    %1145 = vdwg.mxu0
    %v1146 = vld [vmem:[%s6] sm:$0x3]
    %v1148 = vperm.slane %v1146, 0
    %v1149 = vperm.slane %v1146, 1
    %v1152 = vadd.f32 %v1124, %v1148
    %v1153 = vadd.f32 %v1144, %v1149
    %v1154 = vtanh.pop %v1152
    %v1155 = vtanh.pop %v1153
    %v1156 = vmul.f32 %v1154, 0.5
    %v1157 = vmul.f32 %v1155, 0.5
    %v1158 = vadd.f32 %v1156, 0.5
    %v1159 = vadd.f32 %v1157, 0.5
    %v1160 = vmul.f32 %v1158, %v852
    %1162 = vrot.lane.b32.xlu0 %v1155, 64
    %v1163 = vpop.permute.xlu0 %1162
    %v1165 = vmul.f32 %v1158, %v1163
    %1167 = vrot.lane.b32.xlu0 %v1165, 64
    %v1168 = vpop.permute.xlu0 %1167
    %v1170 = vadd.f32 %v1160, %v1168
    %v1171 = vtanh.pop %v1170
    %1173 = vrot.lane.b32.xlu0 %v1171, 64
    %v1174 = vpop.permute.xlu0 %1173
    %v1176 = vmul.f32 %v1159, %v1174
    %v1177 = vld [vmem:[#allocation2] sm:$0xff]
    %v1178 = vld [vmem:[#allocation2 + $0x8] sm:$0xff]
    %v1179 = vld [vmem:[#allocation2 + $0x10] sm:$0xff]
    %v1180 = vld [vmem:[#allocation2 + $0x18] sm:$0xff]
    %v1181 = vld [vmem:[#allocation2 + $0x20] sm:$0xff]
    %v1182 = vld [vmem:[#allocation2 + $0x28] sm:$0xff]
    %v1183 = vld [vmem:[#allocation2 + $0x30] sm:$0xff]
    %v1184 = vld [vmem:[#allocation2 + $0x38] sm:$0xff]
    %v1185 = vld [vmem:[#allocation2 + $0x40] sm:$0xff]
    %v1186 = vld [vmem:[#allocation2 + $0x48] sm:$0xff]
    %v1187 = vld [vmem:[#allocation2 + $0x50] sm:$0xff]
    %v1188 = vld [vmem:[#allocation2 + $0x58] sm:$0xff]
    %v1189 = vld [vmem:[#allocation2 + $0x60] sm:$0xff]
    %v1190 = vld [vmem:[#allocation2 + $0x68] sm:$0xff]
    %v1191 = vld [vmem:[#allocation2 + $0x70] sm:$0xff]
    %v1192 = vld [vmem:[#allocation2 + $0x78] sm:$0xff]
    %v1193 = vld [vmem:[%s231] sm:$0xff]
    %v1194 = vld [vmem:[%s231 + $0x8] sm:$0xff]
    %v1195 = vld [vmem:[%s231 + $0x10] sm:$0xff]
    %v1196 = vld [vmem:[%s231 + $0x18] sm:$0xff]
    %v1197 = vld [vmem:[%s231 + $0x20] sm:$0xff]
    %v1198 = vld [vmem:[%s231 + $0x28] sm:$0xff]
    %v1199 = vld [vmem:[%s231 + $0x30] sm:$0xff]
    %v1200 = vld [vmem:[%s231 + $0x38] sm:$0xff]
    %v1201 = vld [vmem:[%s231 + $0x40] sm:$0xff]
    %v1202 = vld [vmem:[%s231 + $0x48] sm:$0xff]
    %v1203 = vld [vmem:[%s231 + $0x50] sm:$0xff]
    %v1204 = vld [vmem:[%s231 + $0x58] sm:$0xff]
    %v1205 = vld [vmem:[%s231 + $0x60] sm:$0xff]
    %v1206 = vld [vmem:[%s231 + $0x68] sm:$0xff]
    %v1207 = vld [vmem:[%s231 + $0x70] sm:$0xff]
    %v1208 = vld [vmem:[%s231 + $0x78] sm:$0xff]
    %1209 = vmatpush.msra.mxu0 0.0
    %1210 = vmatpush.msra.mxu0 0.0
    %1211 = vmatpush.msra.mxu0 0.0
    %1212 = vmatpush.msra.mxu0 0.0
    %1213 = vmatpush.msra.mxu0 0.0
    %1214 = vmatpush.msra.mxu0 0.0
    %1215 = vmatpush.msra.mxu0 0.0
    %1216 = vmatpush.msra.mxu0 0.0
    %1217 = vmatpush.msra.mxu0 %v1207
    %1218 = vmatpush.msra.mxu0 %v1205
    %1219 = vmatpush.msra.mxu0 %v1203
    %1220 = vmatpush.msra.mxu0 %v1201
    %1221 = vmatpush.msra.mxu0 %v1199
    %1222 = vmatpush.msra.mxu0 %v1197
    %1223 = vmatpush.msra.mxu0 %v1195
    %1224 = vmatpush.msra.mxu0 %v1193
    %1225 = vmatmul.f32.gmra.mxu0 %v1018
    %v1226 = vpop.f32.mrf.mxu0
    %v1227 = vadd.f32 0.0, %v1226
    %1228 = vdwg.mxu0
    %1229 = vmatpush.msra.mxu0 0.0
    %1230 = vmatpush.msra.mxu0 0.0
    %1231 = vmatpush.msra.mxu0 0.0
    %1232 = vmatpush.msra.mxu0 0.0
    %1233 = vmatpush.msra.mxu0 0.0
    %1234 = vmatpush.msra.mxu0 0.0
    %1235 = vmatpush.msra.mxu0 0.0
    %1236 = vmatpush.msra.mxu0 0.0
    %1237 = vmatpush.msra.mxu0 %v1208
    %1238 = vmatpush.msra.mxu0 %v1206
    %1239 = vmatpush.msra.mxu0 %v1204
    %1240 = vmatpush.msra.mxu0 %v1202
    %1241 = vmatpush.msra.mxu0 %v1200
    %1242 = vmatpush.msra.mxu0 %v1198
    %1243 = vmatpush.msra.mxu0 %v1196
    %1244 = vmatpush.msra.mxu0 %v1194
    %1245 = vmatmul.f32.gmra.mxu0 %v1018
    %v1246 = vpop.f32.mrf.mxu0
    %v1247 = vadd.f32 0.0, %v1246
    %1248 = vdwg.mxu0
    %v1250 = vsel %vm92, %v1176, 0
    %1252 = vmatpush.msra.mxu0 0.0
    %1253 = vmatpush.msra.mxu0 0.0
    %1254 = vmatpush.msra.mxu0 0.0
    %1255 = vmatpush.msra.mxu0 0.0
    %1256 = vmatpush.msra.mxu0 0.0
    %1257 = vmatpush.msra.mxu0 0.0
    %1258 = vmatpush.msra.mxu0 0.0
    %1259 = vmatpush.msra.mxu0 0.0
    %1260 = vmatpush.msra.mxu0 %v1191
    %1261 = vmatpush.msra.mxu0 %v1189
    %1262 = vmatpush.msra.mxu0 %v1187
    %1263 = vmatpush.msra.mxu0 %v1185
    %1264 = vmatpush.msra.mxu0 %v1183
    %1265 = vmatpush.msra.mxu0 %v1181
    %1266 = vmatpush.msra.mxu0 %v1179
    %1267 = vmatpush.msra.mxu0 %v1177
    %1268 = vmatmul.f32.gmra.mxu0 %v1250
    %v1269 = vpop.f32.mrf.mxu0
    %v1270 = vadd.f32 %v1227, %v1269
    %1271 = vdwg.mxu0
    %1272 = vmatpush.msra.mxu0 0.0
    %1273 = vmatpush.msra.mxu0 0.0
    %1274 = vmatpush.msra.mxu0 0.0
    %1275 = vmatpush.msra.mxu0 0.0
    %1276 = vmatpush.msra.mxu0 0.0
    %1277 = vmatpush.msra.mxu0 0.0
    %1278 = vmatpush.msra.mxu0 0.0
    %1279 = vmatpush.msra.mxu0 0.0
    %1280 = vmatpush.msra.mxu0 %v1192
    %1281 = vmatpush.msra.mxu0 %v1190
    %1282 = vmatpush.msra.mxu0 %v1188
    %1283 = vmatpush.msra.mxu0 %v1186
    %1284 = vmatpush.msra.mxu0 %v1184
    %1285 = vmatpush.msra.mxu0 %v1182
    %1286 = vmatpush.msra.mxu0 %v1180
    %1287 = vmatpush.msra.mxu0 %v1178
    %1288 = vmatmul.f32.gmra.mxu0 %v1250
    %v1289 = vpop.f32.mrf.mxu0
    %v1290 = vadd.f32 %v1247, %v1289
    %1291 = vdwg.mxu0
    %v1292 = vld [vmem:[%s334] sm:$0x3]
    %v1294 = vperm.slane %v1292, 0
    %v1295 = vperm.slane %v1292, 1
    %v1298 = vadd.f32 %v1270, %v1294
    %v1299 = vadd.f32 %v1290, %v1295
    %v1300 = vtanh.pop %v1298
    %v1301 = vtanh.pop %v1299
    %v1302 = vmul.f32 %v1300, 0.5
    %v1303 = vmul.f32 %v1301, 0.5
    %v1304 = vadd.f32 %v1302, 0.5
    %v1305 = vadd.f32 %v1303, 0.5
    %v1306 = vmul.f32 %v1304, %v998
    %1308 = vrot.lane.b32.xlu0 %v1301, 64
    %v1309 = vpop.permute.xlu0 %1308
    %v1311 = vmul.f32 %v1304, %v1309
    %1313 = vrot.lane.b32.xlu0 %v1311, 64
    %v1314 = vpop.permute.xlu0 %1313
    %v1316 = vadd.f32 %v1306, %v1314
    %v1317 = vtanh.pop %v1316
    %1319 = vrot.lane.b32.xlu0 %v1317, 64
    %v1320 = vpop.permute.xlu0 %1319
    %v1322 = vmul.f32 %v1305, %v1320
    %v1323 = vld [vmem:[%s7] sm:$0xff]
    %v1324 = vld [vmem:[%s7 + $0x8] sm:$0xff]
    %v1325 = vld [vmem:[%s7 + $0x10] sm:$0xff]
    %v1326 = vld [vmem:[%s7 + $0x18] sm:$0xff]
    %v1327 = vld [vmem:[%s7 + $0x20] sm:$0xff]
    %v1328 = vld [vmem:[%s7 + $0x28] sm:$0xff]
    %v1329 = vld [vmem:[%s7 + $0x30] sm:$0xff]
    %v1330 = vld [vmem:[%s7 + $0x38] sm:$0xff]
    %v1331 = vld [vmem:[%s8] sm:$0x1]
    %v1333 = vperm.slane %v1331, 0
    %v1336 = vsel %vm92, %v1322, 0
    %1338 = vmatpush.msra.mxu0 0.0
    %1339 = vmatpush.msra.mxu0 0.0
    %1340 = vmatpush.msra.mxu0 0.0
    %1341 = vmatpush.msra.mxu0 0.0
    %1342 = vmatpush.msra.mxu0 0.0
    %1343 = vmatpush.msra.mxu0 0.0
    %1344 = vmatpush.msra.mxu0 0.0
    %1345 = vmatpush.msra.mxu0 0.0
    %1346 = vmatpush.msra.mxu0 %v1330
    %1347 = vmatpush.msra.mxu0 %v1329
    %1348 = vmatpush.msra.mxu0 %v1328
    %1349 = vmatpush.msra.mxu0 %v1327
    %1350 = vmatpush.msra.mxu0 %v1326
    %1351 = vmatpush.msra.mxu0 %v1325
    %1352 = vmatpush.msra.mxu0 %v1324
    %1353 = vmatpush.msra.mxu0 %v1323
    %1354 = vmatmul.f32.gmra.mxu0 %v1336
    %v1355 = vpop.f32.mrf.mxu0
    %v1356 = vadd.f32 %v1333, %v1355
    %1357 = vdwg.mxu0
    %v1358 = vtanh.pop %v1356
    %s1359 = scalar_lea.vmem [#allocation7], 24
    %1360 = vst.msk [vmem:[%s1359] sm:$0xff] %vm136, %v1358
    %v1361 = vld [vmem:[%s3] sm:$0xff]
    %v1362 = vld [vmem:[%s3 + $0x8] sm:$0xff]
    %v1363 = vld [vmem:[%s3 + $0x10] sm:$0xff]
    %v1364 = vld [vmem:[%s3 + $0x18] sm:$0xff]
    %v1365 = vld [vmem:[#allocation5] sm:$0xff]
    %v1366 = vld [vmem:[#allocation5 + $0x8] sm:$0xff]
    %v1367 = vld [vmem:[#allocation5 + $0x10] sm:$0xff]
    %v1368 = vld [vmem:[#allocation5 + $0x18] sm:$0xff]
    %v1369 = vld [vmem:[#allocation5 + $0x20] sm:$0xff]
    %v1370 = vld [vmem:[#allocation5 + $0x28] sm:$0xff]
    %v1371 = vld [vmem:[#allocation5 + $0x30] sm:$0xff]
    %v1372 = vld [vmem:[#allocation5 + $0x38] sm:$0xff]
    %v1373 = vld [vmem:[#allocation5 + $0x40] sm:$0xff]
    %v1374 = vld [vmem:[#allocation5 + $0x48] sm:$0xff]
    %v1375 = vld [vmem:[#allocation5 + $0x50] sm:$0xff]
    %v1376 = vld [vmem:[#allocation5 + $0x58] sm:$0xff]
    %v1377 = vld [vmem:[#allocation5 + $0x60] sm:$0xff]
    %v1378 = vld [vmem:[#allocation5 + $0x68] sm:$0xff]
    %v1379 = vld [vmem:[#allocation5 + $0x70] sm:$0xff]
    %v1380 = vld [vmem:[#allocation5 + $0x78] sm:$0xff]
    %1381 = vmatpush.msra.mxu0 0.0
    %1382 = vmatpush.msra.mxu0 0.0
    %1383 = vmatpush.msra.mxu0 0.0
    %1384 = vmatpush.msra.mxu0 0.0
    %1385 = vmatpush.msra.mxu0 0.0
    %1386 = vmatpush.msra.mxu0 0.0
    %1387 = vmatpush.msra.mxu0 0.0
    %1388 = vmatpush.msra.mxu0 0.0
    %1389 = vmatpush.msra.mxu0 %v1379
    %1390 = vmatpush.msra.mxu0 %v1377
    %1391 = vmatpush.msra.mxu0 %v1375
    %1392 = vmatpush.msra.mxu0 %v1373
    %1393 = vmatpush.msra.mxu0 %v1371
    %1394 = vmatpush.msra.mxu0 %v1369
    %1395 = vmatpush.msra.mxu0 %v1367
    %1396 = vmatpush.msra.mxu0 %v1365
    %1397 = vmatmul.f32.gmra.mxu0 %v1250
    %v1398 = vpop.f32.mrf.mxu0
    %v1399 = vadd.f32 0.0, %v1398
    %1400 = vdwg.mxu0
    %1401 = vmatpush.msra.mxu0 0.0
    %1402 = vmatpush.msra.mxu0 0.0
    %1403 = vmatpush.msra.mxu0 0.0
    %1404 = vmatpush.msra.mxu0 0.0
    %1405 = vmatpush.msra.mxu0 0.0
    %1406 = vmatpush.msra.mxu0 0.0
    %1407 = vmatpush.msra.mxu0 0.0
    %1408 = vmatpush.msra.mxu0 0.0
    %1409 = vmatpush.msra.mxu0 %v1380
    %1410 = vmatpush.msra.mxu0 %v1378
    %1411 = vmatpush.msra.mxu0 %v1376
    %1412 = vmatpush.msra.mxu0 %v1374
    %1413 = vmatpush.msra.mxu0 %v1372
    %1414 = vmatpush.msra.mxu0 %v1370
    %1415 = vmatpush.msra.mxu0 %v1368
    %1416 = vmatpush.msra.mxu0 %v1366
    %1417 = vmatmul.f32.gmra.mxu0 %v1250
    %v1418 = vpop.f32.mrf.mxu0
    %v1419 = vadd.f32 0.0, %v1418
    %1420 = vdwg.mxu0
    %v1422 = vsel %vm136, %v1358, 0
    %1424 = vmatpush.msra.mxu0 0.0
    %1425 = vmatpush.msra.mxu0 0.0
    %1426 = vmatpush.msra.mxu0 0.0
    %1427 = vmatpush.msra.mxu0 0.0
    %1428 = vmatpush.msra.mxu0 0.0
    %1429 = vmatpush.msra.mxu0 0.0
    %1430 = vmatpush.msra.mxu0 0.0
    %1431 = vmatpush.msra.mxu0 0.0
    %1432 = vmatpush.msra.mxu0 0.0
    %1433 = vmatpush.msra.mxu0 0.0
    %1434 = vmatpush.msra.mxu0 0.0
    %1435 = vmatpush.msra.mxu0 0.0
    %1436 = vmatpush.msra.mxu0 0.0
    %1437 = vmatpush.msra.mxu0 0.0
    %1438 = vmatpush.msra.mxu0 %v1363
    %1439 = vmatpush.msra.mxu0 %v1361
    %1440 = vmatmul.f32.gmra.mxu0 %v1422
    %v1441 = vpop.f32.mrf.mxu0
    %v1442 = vadd.f32 %v1399, %v1441
    %1443 = vdwg.mxu0
    %1444 = vmatpush.msra.mxu0 0.0
    %1445 = vmatpush.msra.mxu0 0.0
    %1446 = vmatpush.msra.mxu0 0.0
    %1447 = vmatpush.msra.mxu0 0.0
    %1448 = vmatpush.msra.mxu0 0.0
    %1449 = vmatpush.msra.mxu0 0.0
    %1450 = vmatpush.msra.mxu0 0.0
    %1451 = vmatpush.msra.mxu0 0.0
    %1452 = vmatpush.msra.mxu0 0.0
    %1453 = vmatpush.msra.mxu0 0.0
    %1454 = vmatpush.msra.mxu0 0.0
    %1455 = vmatpush.msra.mxu0 0.0
    %1456 = vmatpush.msra.mxu0 0.0
    %1457 = vmatpush.msra.mxu0 0.0
    %1458 = vmatpush.msra.mxu0 %v1364
    %1459 = vmatpush.msra.mxu0 %v1362
    %1460 = vmatmul.f32.gmra.mxu0 %v1422
    %v1461 = vpop.f32.mrf.mxu0
    %v1462 = vadd.f32 %v1419, %v1461
    %1463 = vdwg.mxu0
    %v1464 = vld [vmem:[%s6] sm:$0x3]
    %v1466 = vperm.slane %v1464, 0
    %v1467 = vperm.slane %v1464, 1
    %v1470 = vadd.f32 %v1442, %v1466
    %v1471 = vadd.f32 %v1462, %v1467
    %v1472 = vtanh.pop %v1470
    %v1473 = vtanh.pop %v1471
    %v1474 = vmul.f32 %v1472, 0.5
    %v1475 = vmul.f32 %v1473, 0.5
    %v1476 = vadd.f32 %v1474, 0.5
    %v1477 = vadd.f32 %v1475, 0.5
    %v1478 = vmul.f32 %v1476, %v1170
    %1480 = vrot.lane.b32.xlu0 %v1473, 64
    %v1481 = vpop.permute.xlu0 %1480
    %v1483 = vmul.f32 %v1476, %v1481
    %1485 = vrot.lane.b32.xlu0 %v1483, 64
    %v1486 = vpop.permute.xlu0 %1485
    %v1488 = vadd.f32 %v1478, %v1486
    %v1489 = vtanh.pop %v1488
    %1491 = vrot.lane.b32.xlu0 %v1489, 64
    %v1492 = vpop.permute.xlu0 %1491
    %v1494 = vmul.f32 %v1477, %v1492
    %v1495 = vld [vmem:[#allocation2] sm:$0xff]
    %v1496 = vld [vmem:[#allocation2 + $0x8] sm:$0xff]
    %v1497 = vld [vmem:[#allocation2 + $0x10] sm:$0xff]
    %v1498 = vld [vmem:[#allocation2 + $0x18] sm:$0xff]
    %v1499 = vld [vmem:[#allocation2 + $0x20] sm:$0xff]
    %v1500 = vld [vmem:[#allocation2 + $0x28] sm:$0xff]
    %v1501 = vld [vmem:[#allocation2 + $0x30] sm:$0xff]
    %v1502 = vld [vmem:[#allocation2 + $0x38] sm:$0xff]
    %v1503 = vld [vmem:[#allocation2 + $0x40] sm:$0xff]
    %v1504 = vld [vmem:[#allocation2 + $0x48] sm:$0xff]
    %v1505 = vld [vmem:[#allocation2 + $0x50] sm:$0xff]
    %v1506 = vld [vmem:[#allocation2 + $0x58] sm:$0xff]
    %v1507 = vld [vmem:[#allocation2 + $0x60] sm:$0xff]
    %v1508 = vld [vmem:[#allocation2 + $0x68] sm:$0xff]
    %v1509 = vld [vmem:[#allocation2 + $0x70] sm:$0xff]
    %v1510 = vld [vmem:[#allocation2 + $0x78] sm:$0xff]
    %v1511 = vld [vmem:[%s231] sm:$0xff]
    %v1512 = vld [vmem:[%s231 + $0x8] sm:$0xff]
    %v1513 = vld [vmem:[%s231 + $0x10] sm:$0xff]
    %v1514 = vld [vmem:[%s231 + $0x18] sm:$0xff]
    %v1515 = vld [vmem:[%s231 + $0x20] sm:$0xff]
    %v1516 = vld [vmem:[%s231 + $0x28] sm:$0xff]
    %v1517 = vld [vmem:[%s231 + $0x30] sm:$0xff]
    %v1518 = vld [vmem:[%s231 + $0x38] sm:$0xff]
    %v1519 = vld [vmem:[%s231 + $0x40] sm:$0xff]
    %v1520 = vld [vmem:[%s231 + $0x48] sm:$0xff]
    %v1521 = vld [vmem:[%s231 + $0x50] sm:$0xff]
    %v1522 = vld [vmem:[%s231 + $0x58] sm:$0xff]
    %v1523 = vld [vmem:[%s231 + $0x60] sm:$0xff]
    %v1524 = vld [vmem:[%s231 + $0x68] sm:$0xff]
    %v1525 = vld [vmem:[%s231 + $0x70] sm:$0xff]
    %v1526 = vld [vmem:[%s231 + $0x78] sm:$0xff]
    %1527 = vmatpush.msra.mxu0 0.0
    %1528 = vmatpush.msra.mxu0 0.0
    %1529 = vmatpush.msra.mxu0 0.0
    %1530 = vmatpush.msra.mxu0 0.0
    %1531 = vmatpush.msra.mxu0 0.0
    %1532 = vmatpush.msra.mxu0 0.0
    %1533 = vmatpush.msra.mxu0 0.0
    %1534 = vmatpush.msra.mxu0 0.0
    %1535 = vmatpush.msra.mxu0 %v1525
    %1536 = vmatpush.msra.mxu0 %v1523
    %1537 = vmatpush.msra.mxu0 %v1521
    %1538 = vmatpush.msra.mxu0 %v1519
    %1539 = vmatpush.msra.mxu0 %v1517
    %1540 = vmatpush.msra.mxu0 %v1515
    %1541 = vmatpush.msra.mxu0 %v1513
    %1542 = vmatpush.msra.mxu0 %v1511
    %1543 = vmatmul.f32.gmra.mxu0 %v1336
    %v1544 = vpop.f32.mrf.mxu0
    %v1545 = vadd.f32 0.0, %v1544
    %1546 = vdwg.mxu0
    %1547 = vmatpush.msra.mxu0 0.0
    %1548 = vmatpush.msra.mxu0 0.0
    %1549 = vmatpush.msra.mxu0 0.0
    %1550 = vmatpush.msra.mxu0 0.0
    %1551 = vmatpush.msra.mxu0 0.0
    %1552 = vmatpush.msra.mxu0 0.0
    %1553 = vmatpush.msra.mxu0 0.0
    %1554 = vmatpush.msra.mxu0 0.0
    %1555 = vmatpush.msra.mxu0 %v1526
    %1556 = vmatpush.msra.mxu0 %v1524
    %1557 = vmatpush.msra.mxu0 %v1522
    %1558 = vmatpush.msra.mxu0 %v1520
    %1559 = vmatpush.msra.mxu0 %v1518
    %1560 = vmatpush.msra.mxu0 %v1516
    %1561 = vmatpush.msra.mxu0 %v1514
    %1562 = vmatpush.msra.mxu0 %v1512
    %1563 = vmatmul.f32.gmra.mxu0 %v1336
    %v1564 = vpop.f32.mrf.mxu0
    %v1565 = vadd.f32 0.0, %v1564
    %1566 = vdwg.mxu0
    %v1568 = vsel %vm92, %v1494, 0
    %1570 = vmatpush.msra.mxu0 0.0
    %1571 = vmatpush.msra.mxu0 0.0
    %1572 = vmatpush.msra.mxu0 0.0
    %1573 = vmatpush.msra.mxu0 0.0
    %1574 = vmatpush.msra.mxu0 0.0
    %1575 = vmatpush.msra.mxu0 0.0
    %1576 = vmatpush.msra.mxu0 0.0
    %1577 = vmatpush.msra.mxu0 0.0
    %1578 = vmatpush.msra.mxu0 %v1509
    %1579 = vmatpush.msra.mxu0 %v1507
    %1580 = vmatpush.msra.mxu0 %v1505
    %1581 = vmatpush.msra.mxu0 %v1503
    %1582 = vmatpush.msra.mxu0 %v1501
    %1583 = vmatpush.msra.mxu0 %v1499
    %1584 = vmatpush.msra.mxu0 %v1497
    %1585 = vmatpush.msra.mxu0 %v1495
    %1586 = vmatmul.f32.gmra.mxu0 %v1568
    %v1587 = vpop.f32.mrf.mxu0
    %v1588 = vadd.f32 %v1545, %v1587
    %1589 = vdwg.mxu0
    %1590 = vmatpush.msra.mxu0 0.0
    %1591 = vmatpush.msra.mxu0 0.0
    %1592 = vmatpush.msra.mxu0 0.0
    %1593 = vmatpush.msra.mxu0 0.0
    %1594 = vmatpush.msra.mxu0 0.0
    %1595 = vmatpush.msra.mxu0 0.0
    %1596 = vmatpush.msra.mxu0 0.0
    %1597 = vmatpush.msra.mxu0 0.0
    %1598 = vmatpush.msra.mxu0 %v1510
    %1599 = vmatpush.msra.mxu0 %v1508
    %1600 = vmatpush.msra.mxu0 %v1506
    %1601 = vmatpush.msra.mxu0 %v1504
    %1602 = vmatpush.msra.mxu0 %v1502
    %1603 = vmatpush.msra.mxu0 %v1500
    %1604 = vmatpush.msra.mxu0 %v1498
    %1605 = vmatpush.msra.mxu0 %v1496
    %1606 = vmatmul.f32.gmra.mxu0 %v1568
    %v1607 = vpop.f32.mrf.mxu0
    %v1608 = vadd.f32 %v1565, %v1607
    %1609 = vdwg.mxu0
    %v1610 = vld [vmem:[%s334] sm:$0x3]
    %v1612 = vperm.slane %v1610, 0
    %v1613 = vperm.slane %v1610, 1
    %v1616 = vadd.f32 %v1588, %v1612
    %v1617 = vadd.f32 %v1608, %v1613
    %v1618 = vtanh.pop %v1616
    %v1619 = vtanh.pop %v1617
    %v1620 = vmul.f32 %v1618, 0.5
    %v1621 = vmul.f32 %v1619, 0.5
    %v1622 = vadd.f32 %v1620, 0.5
    %v1623 = vadd.f32 %v1621, 0.5
    %v1624 = vmul.f32 %v1622, %v1316
    %1626 = vrot.lane.b32.xlu0 %v1619, 64
    %v1627 = vpop.permute.xlu0 %1626
    %v1629 = vmul.f32 %v1622, %v1627
    %1631 = vrot.lane.b32.xlu0 %v1629, 64
    %v1632 = vpop.permute.xlu0 %1631
    %v1634 = vadd.f32 %v1624, %v1632
    %v1635 = vtanh.pop %v1634
    %1637 = vrot.lane.b32.xlu0 %v1635, 64
    %v1638 = vpop.permute.xlu0 %1637
    %v1640 = vmul.f32 %v1623, %v1638
    %v1641 = vld [vmem:[%s7] sm:$0xff]
    %v1642 = vld [vmem:[%s7 + $0x8] sm:$0xff]
    %v1643 = vld [vmem:[%s7 + $0x10] sm:$0xff]
    %v1644 = vld [vmem:[%s7 + $0x18] sm:$0xff]
    %v1645 = vld [vmem:[%s7 + $0x20] sm:$0xff]
    %v1646 = vld [vmem:[%s7 + $0x28] sm:$0xff]
    %v1647 = vld [vmem:[%s7 + $0x30] sm:$0xff]
    %v1648 = vld [vmem:[%s7 + $0x38] sm:$0xff]
    %v1649 = vld [vmem:[%s8] sm:$0x1]
    %v1651 = vperm.slane %v1649, 0
    %v1654 = vsel %vm92, %v1640, 0
    %1656 = vmatpush.msra.mxu0 0.0
    %1657 = vmatpush.msra.mxu0 0.0
    %1658 = vmatpush.msra.mxu0 0.0
    %1659 = vmatpush.msra.mxu0 0.0
    %1660 = vmatpush.msra.mxu0 0.0
    %1661 = vmatpush.msra.mxu0 0.0
    %1662 = vmatpush.msra.mxu0 0.0
    %1663 = vmatpush.msra.mxu0 0.0
    %1664 = vmatpush.msra.mxu0 %v1648
    %1665 = vmatpush.msra.mxu0 %v1647
    %1666 = vmatpush.msra.mxu0 %v1646
    %1667 = vmatpush.msra.mxu0 %v1645
    %1668 = vmatpush.msra.mxu0 %v1644
    %1669 = vmatpush.msra.mxu0 %v1643
    %1670 = vmatpush.msra.mxu0 %v1642
    %1671 = vmatpush.msra.mxu0 %v1641
    %1672 = vmatmul.f32.gmra.mxu0 %v1654
    %v1673 = vpop.f32.mrf.mxu0
    %v1674 = vadd.f32 %v1651, %v1673
    %1675 = vdwg.mxu0
    %v1676 = vtanh.pop %v1674
    %s1677 = scalar_lea.vmem [#allocation7], 32
    %1678 = vst.msk [vmem:[%s1677] sm:$0xff] %vm136, %v1676
    %v1679 = vld [vmem:[%s3] sm:$0xff]
    %v1680 = vld [vmem:[%s3 + $0x8] sm:$0xff]
    %v1681 = vld [vmem:[%s3 + $0x10] sm:$0xff]
    %v1682 = vld [vmem:[%s3 + $0x18] sm:$0xff]
    %v1683 = vld [vmem:[#allocation5] sm:$0xff]
    %v1684 = vld [vmem:[#allocation5 + $0x8] sm:$0xff]
    %v1685 = vld [vmem:[#allocation5 + $0x10] sm:$0xff]
    %v1686 = vld [vmem:[#allocation5 + $0x18] sm:$0xff]
    %v1687 = vld [vmem:[#allocation5 + $0x20] sm:$0xff]
    %v1688 = vld [vmem:[#allocation5 + $0x28] sm:$0xff]
    %v1689 = vld [vmem:[#allocation5 + $0x30] sm:$0xff]
    %v1690 = vld [vmem:[#allocation5 + $0x38] sm:$0xff]
    %v1691 = vld [vmem:[#allocation5 + $0x40] sm:$0xff]
    %v1692 = vld [vmem:[#allocation5 + $0x48] sm:$0xff]
    %v1693 = vld [vmem:[#allocation5 + $0x50] sm:$0xff]
    %v1694 = vld [vmem:[#allocation5 + $0x58] sm:$0xff]
    %v1695 = vld [vmem:[#allocation5 + $0x60] sm:$0xff]
    %v1696 = vld [vmem:[#allocation5 + $0x68] sm:$0xff]
    %v1697 = vld [vmem:[#allocation5 + $0x70] sm:$0xff]
    %v1698 = vld [vmem:[#allocation5 + $0x78] sm:$0xff]
    %1699 = vmatpush.msra.mxu0 0.0
    %1700 = vmatpush.msra.mxu0 0.0
    %1701 = vmatpush.msra.mxu0 0.0
    %1702 = vmatpush.msra.mxu0 0.0
    %1703 = vmatpush.msra.mxu0 0.0
    %1704 = vmatpush.msra.mxu0 0.0
    %1705 = vmatpush.msra.mxu0 0.0
    %1706 = vmatpush.msra.mxu0 0.0
    %1707 = vmatpush.msra.mxu0 %v1697
    %1708 = vmatpush.msra.mxu0 %v1695
    %1709 = vmatpush.msra.mxu0 %v1693
    %1710 = vmatpush.msra.mxu0 %v1691
    %1711 = vmatpush.msra.mxu0 %v1689
    %1712 = vmatpush.msra.mxu0 %v1687
    %1713 = vmatpush.msra.mxu0 %v1685
    %1714 = vmatpush.msra.mxu0 %v1683
    %1715 = vmatmul.f32.gmra.mxu0 %v1568
    %v1716 = vpop.f32.mrf.mxu0
    %v1717 = vadd.f32 0.0, %v1716
    %1718 = vdwg.mxu0
    %1719 = vmatpush.msra.mxu0 0.0
    %1720 = vmatpush.msra.mxu0 0.0
    %1721 = vmatpush.msra.mxu0 0.0
    %1722 = vmatpush.msra.mxu0 0.0
    %1723 = vmatpush.msra.mxu0 0.0
    %1724 = vmatpush.msra.mxu0 0.0
    %1725 = vmatpush.msra.mxu0 0.0
    %1726 = vmatpush.msra.mxu0 0.0
    %1727 = vmatpush.msra.mxu0 %v1698
    %1728 = vmatpush.msra.mxu0 %v1696
    %1729 = vmatpush.msra.mxu0 %v1694
    %1730 = vmatpush.msra.mxu0 %v1692
    %1731 = vmatpush.msra.mxu0 %v1690
    %1732 = vmatpush.msra.mxu0 %v1688
    %1733 = vmatpush.msra.mxu0 %v1686
    %1734 = vmatpush.msra.mxu0 %v1684
    %1735 = vmatmul.f32.gmra.mxu0 %v1568
    %v1736 = vpop.f32.mrf.mxu0
    %v1737 = vadd.f32 0.0, %v1736
    %1738 = vdwg.mxu0
    %v1740 = vsel %vm136, %v1676, 0
    %1742 = vmatpush.msra.mxu0 0.0
    %1743 = vmatpush.msra.mxu0 0.0
    %1744 = vmatpush.msra.mxu0 0.0
    %1745 = vmatpush.msra.mxu0 0.0
    %1746 = vmatpush.msra.mxu0 0.0
    %1747 = vmatpush.msra.mxu0 0.0
    %1748 = vmatpush.msra.mxu0 0.0
    %1749 = vmatpush.msra.mxu0 0.0
    %1750 = vmatpush.msra.mxu0 0.0
    %1751 = vmatpush.msra.mxu0 0.0
    %1752 = vmatpush.msra.mxu0 0.0
    %1753 = vmatpush.msra.mxu0 0.0
    %1754 = vmatpush.msra.mxu0 0.0
    %1755 = vmatpush.msra.mxu0 0.0
    %1756 = vmatpush.msra.mxu0 %v1681
    %1757 = vmatpush.msra.mxu0 %v1679
    %1758 = vmatmul.f32.gmra.mxu0 %v1740
    %v1759 = vpop.f32.mrf.mxu0
    %v1760 = vadd.f32 %v1717, %v1759
    %1761 = vdwg.mxu0
    %1762 = vmatpush.msra.mxu0 0.0
    %1763 = vmatpush.msra.mxu0 0.0
    %1764 = vmatpush.msra.mxu0 0.0
    %1765 = vmatpush.msra.mxu0 0.0
    %1766 = vmatpush.msra.mxu0 0.0
    %1767 = vmatpush.msra.mxu0 0.0
    %1768 = vmatpush.msra.mxu0 0.0
    %1769 = vmatpush.msra.mxu0 0.0
    %1770 = vmatpush.msra.mxu0 0.0
    %1771 = vmatpush.msra.mxu0 0.0
    %1772 = vmatpush.msra.mxu0 0.0
    %1773 = vmatpush.msra.mxu0 0.0
    %1774 = vmatpush.msra.mxu0 0.0
    %1775 = vmatpush.msra.mxu0 0.0
    %1776 = vmatpush.msra.mxu0 %v1682
    %1777 = vmatpush.msra.mxu0 %v1680
    %1778 = vmatmul.f32.gmra.mxu0 %v1740
    %v1779 = vpop.f32.mrf.mxu0
    %v1780 = vadd.f32 %v1737, %v1779
    %1781 = vdwg.mxu0
    %v1782 = vld [vmem:[%s6] sm:$0x3]
    %v1784 = vperm.slane %v1782, 0
    %v1785 = vperm.slane %v1782, 1
    %v1788 = vadd.f32 %v1760, %v1784
    %v1789 = vadd.f32 %v1780, %v1785
    %v1790 = vtanh.pop %v1788
    %v1791 = vtanh.pop %v1789
    %v1792 = vmul.f32 %v1790, 0.5
    %v1793 = vmul.f32 %v1791, 0.5
    %v1794 = vadd.f32 %v1792, 0.5
    %v1795 = vadd.f32 %v1793, 0.5
    %v1796 = vmul.f32 %v1794, %v1488
    %1798 = vrot.lane.b32.xlu0 %v1791, 64
    %v1799 = vpop.permute.xlu0 %1798
    %v1801 = vmul.f32 %v1794, %v1799
    %1803 = vrot.lane.b32.xlu0 %v1801, 64
    %v1804 = vpop.permute.xlu0 %1803
    %v1806 = vadd.f32 %v1796, %v1804
    %v1807 = vtanh.pop %v1806
    %1809 = vrot.lane.b32.xlu0 %v1807, 64
    %v1810 = vpop.permute.xlu0 %1809
    %v1812 = vmul.f32 %v1795, %v1810
    %v1813 = vld [vmem:[#allocation2] sm:$0xff]
    %v1814 = vld [vmem:[#allocation2 + $0x8] sm:$0xff]
    %v1815 = vld [vmem:[#allocation2 + $0x10] sm:$0xff]
    %v1816 = vld [vmem:[#allocation2 + $0x18] sm:$0xff]
    %v1817 = vld [vmem:[#allocation2 + $0x20] sm:$0xff]
    %v1818 = vld [vmem:[#allocation2 + $0x28] sm:$0xff]
    %v1819 = vld [vmem:[#allocation2 + $0x30] sm:$0xff]
    %v1820 = vld [vmem:[#allocation2 + $0x38] sm:$0xff]
    %v1821 = vld [vmem:[#allocation2 + $0x40] sm:$0xff]
    %v1822 = vld [vmem:[#allocation2 + $0x48] sm:$0xff]
    %v1823 = vld [vmem:[#allocation2 + $0x50] sm:$0xff]
    %v1824 = vld [vmem:[#allocation2 + $0x58] sm:$0xff]
    %v1825 = vld [vmem:[#allocation2 + $0x60] sm:$0xff]
    %v1826 = vld [vmem:[#allocation2 + $0x68] sm:$0xff]
    %v1827 = vld [vmem:[#allocation2 + $0x70] sm:$0xff]
    %v1828 = vld [vmem:[#allocation2 + $0x78] sm:$0xff]
    %v1829 = vld [vmem:[%s231] sm:$0xff]
    %v1830 = vld [vmem:[%s231 + $0x8] sm:$0xff]
    %v1831 = vld [vmem:[%s231 + $0x10] sm:$0xff]
    %v1832 = vld [vmem:[%s231 + $0x18] sm:$0xff]
    %v1833 = vld [vmem:[%s231 + $0x20] sm:$0xff]
    %v1834 = vld [vmem:[%s231 + $0x28] sm:$0xff]
    %v1835 = vld [vmem:[%s231 + $0x30] sm:$0xff]
    %v1836 = vld [vmem:[%s231 + $0x38] sm:$0xff]
    %v1837 = vld [vmem:[%s231 + $0x40] sm:$0xff]
    %v1838 = vld [vmem:[%s231 + $0x48] sm:$0xff]
    %v1839 = vld [vmem:[%s231 + $0x50] sm:$0xff]
    %v1840 = vld [vmem:[%s231 + $0x58] sm:$0xff]
    %v1841 = vld [vmem:[%s231 + $0x60] sm:$0xff]
    %v1842 = vld [vmem:[%s231 + $0x68] sm:$0xff]
    %v1843 = vld [vmem:[%s231 + $0x70] sm:$0xff]
    %v1844 = vld [vmem:[%s231 + $0x78] sm:$0xff]
    %1845 = vmatpush.msra.mxu0 0.0
    %1846 = vmatpush.msra.mxu0 0.0
    %1847 = vmatpush.msra.mxu0 0.0
    %1848 = vmatpush.msra.mxu0 0.0
    %1849 = vmatpush.msra.mxu0 0.0
    %1850 = vmatpush.msra.mxu0 0.0
    %1851 = vmatpush.msra.mxu0 0.0
    %1852 = vmatpush.msra.mxu0 0.0
    %1853 = vmatpush.msra.mxu0 %v1843
    %1854 = vmatpush.msra.mxu0 %v1841
    %1855 = vmatpush.msra.mxu0 %v1839
    %1856 = vmatpush.msra.mxu0 %v1837
    %1857 = vmatpush.msra.mxu0 %v1835
    %1858 = vmatpush.msra.mxu0 %v1833
    %1859 = vmatpush.msra.mxu0 %v1831
    %1860 = vmatpush.msra.mxu0 %v1829
    %1861 = vmatmul.f32.gmra.mxu0 %v1654
    %v1862 = vpop.f32.mrf.mxu0
    %v1863 = vadd.f32 0.0, %v1862
    %1864 = vdwg.mxu0
    %1865 = vmatpush.msra.mxu0 0.0
    %1866 = vmatpush.msra.mxu0 0.0
    %1867 = vmatpush.msra.mxu0 0.0
    %1868 = vmatpush.msra.mxu0 0.0
    %1869 = vmatpush.msra.mxu0 0.0
    %1870 = vmatpush.msra.mxu0 0.0
    %1871 = vmatpush.msra.mxu0 0.0
    %1872 = vmatpush.msra.mxu0 0.0
    %1873 = vmatpush.msra.mxu0 %v1844
    %1874 = vmatpush.msra.mxu0 %v1842
    %1875 = vmatpush.msra.mxu0 %v1840
    %1876 = vmatpush.msra.mxu0 %v1838
    %1877 = vmatpush.msra.mxu0 %v1836
    %1878 = vmatpush.msra.mxu0 %v1834
    %1879 = vmatpush.msra.mxu0 %v1832
    %1880 = vmatpush.msra.mxu0 %v1830
    %1881 = vmatmul.f32.gmra.mxu0 %v1654
    %v1882 = vpop.f32.mrf.mxu0
    %v1883 = vadd.f32 0.0, %v1882
    %1884 = vdwg.mxu0
    %v1886 = vsel %vm92, %v1812, 0
    %1888 = vmatpush.msra.mxu0 0.0
    %1889 = vmatpush.msra.mxu0 0.0
    %1890 = vmatpush.msra.mxu0 0.0
    %1891 = vmatpush.msra.mxu0 0.0
    %1892 = vmatpush.msra.mxu0 0.0
    %1893 = vmatpush.msra.mxu0 0.0
    %1894 = vmatpush.msra.mxu0 0.0
    %1895 = vmatpush.msra.mxu0 0.0
    %1896 = vmatpush.msra.mxu0 %v1827
    %1897 = vmatpush.msra.mxu0 %v1825
    %1898 = vmatpush.msra.mxu0 %v1823
    %1899 = vmatpush.msra.mxu0 %v1821
    %1900 = vmatpush.msra.mxu0 %v1819
    %1901 = vmatpush.msra.mxu0 %v1817
    %1902 = vmatpush.msra.mxu0 %v1815
    %1903 = vmatpush.msra.mxu0 %v1813
    %1904 = vmatmul.f32.gmra.mxu0 %v1886
    %v1905 = vpop.f32.mrf.mxu0
    %v1906 = vadd.f32 %v1863, %v1905
    %1907 = vdwg.mxu0
    %1908 = vmatpush.msra.mxu0 0.0
    %1909 = vmatpush.msra.mxu0 0.0
    %1910 = vmatpush.msra.mxu0 0.0
    %1911 = vmatpush.msra.mxu0 0.0
    %1912 = vmatpush.msra.mxu0 0.0
    %1913 = vmatpush.msra.mxu0 0.0
    %1914 = vmatpush.msra.mxu0 0.0
    %1915 = vmatpush.msra.mxu0 0.0
    %1916 = vmatpush.msra.mxu0 %v1828
    %1917 = vmatpush.msra.mxu0 %v1826
    %1918 = vmatpush.msra.mxu0 %v1824
    %1919 = vmatpush.msra.mxu0 %v1822
    %1920 = vmatpush.msra.mxu0 %v1820
    %1921 = vmatpush.msra.mxu0 %v1818
    %1922 = vmatpush.msra.mxu0 %v1816
    %1923 = vmatpush.msra.mxu0 %v1814
    %1924 = vmatmul.f32.gmra.mxu0 %v1886
    %v1925 = vpop.f32.mrf.mxu0
    %v1926 = vadd.f32 %v1883, %v1925
    %1927 = vdwg.mxu0
    %v1928 = vld [vmem:[%s334] sm:$0x3]
    %v1930 = vperm.slane %v1928, 0
    %v1931 = vperm.slane %v1928, 1
    %v1934 = vadd.f32 %v1906, %v1930
    %v1935 = vadd.f32 %v1926, %v1931
    %v1936 = vtanh.pop %v1934
    %v1937 = vtanh.pop %v1935
    %v1938 = vmul.f32 %v1936, 0.5
    %v1939 = vmul.f32 %v1937, 0.5
    %v1940 = vadd.f32 %v1938, 0.5
    %v1941 = vadd.f32 %v1939, 0.5
    %v1942 = vmul.f32 %v1940, %v1634
    %1944 = vrot.lane.b32.xlu0 %v1937, 64
    %v1945 = vpop.permute.xlu0 %1944
    %v1947 = vmul.f32 %v1940, %v1945
    %1949 = vrot.lane.b32.xlu0 %v1947, 64
    %v1950 = vpop.permute.xlu0 %1949
    %v1952 = vadd.f32 %v1942, %v1950
    %v1953 = vtanh.pop %v1952
    %1955 = vrot.lane.b32.xlu0 %v1953, 64
    %v1956 = vpop.permute.xlu0 %1955
    %v1958 = vmul.f32 %v1941, %v1956
    %v1959 = vld [vmem:[%s7] sm:$0xff]
    %v1960 = vld [vmem:[%s7 + $0x8] sm:$0xff]
    %v1961 = vld [vmem:[%s7 + $0x10] sm:$0xff]
    %v1962 = vld [vmem:[%s7 + $0x18] sm:$0xff]
    %v1963 = vld [vmem:[%s7 + $0x20] sm:$0xff]
    %v1964 = vld [vmem:[%s7 + $0x28] sm:$0xff]
    %v1965 = vld [vmem:[%s7 + $0x30] sm:$0xff]
    %v1966 = vld [vmem:[%s7 + $0x38] sm:$0xff]
    %v1967 = vld [vmem:[%s8] sm:$0x1]
    %v1969 = vperm.slane %v1967, 0
    %v1972 = vsel %vm92, %v1958, 0
    %1974 = vmatpush.msra.mxu0 0.0
    %1975 = vmatpush.msra.mxu0 0.0
    %1976 = vmatpush.msra.mxu0 0.0
    %1977 = vmatpush.msra.mxu0 0.0
    %1978 = vmatpush.msra.mxu0 0.0
    %1979 = vmatpush.msra.mxu0 0.0
    %1980 = vmatpush.msra.mxu0 0.0
    %1981 = vmatpush.msra.mxu0 0.0
    %1982 = vmatpush.msra.mxu0 %v1966
    %1983 = vmatpush.msra.mxu0 %v1965
    %1984 = vmatpush.msra.mxu0 %v1964
    %1985 = vmatpush.msra.mxu0 %v1963
    %1986 = vmatpush.msra.mxu0 %v1962
    %1987 = vmatpush.msra.mxu0 %v1961
    %1988 = vmatpush.msra.mxu0 %v1960
    %1989 = vmatpush.msra.mxu0 %v1959
    %1990 = vmatmul.f32.gmra.mxu0 %v1972
    %v1991 = vpop.f32.mrf.mxu0
    %v1992 = vadd.f32 %v1969, %v1991
    %1993 = vdwg.mxu0
    %v1994 = vtanh.pop %v1992
    %s1995 = scalar_lea.vmem [#allocation7], 40
    %1996 = vst.msk [vmem:[%s1995] sm:$0xff] %vm136, %v1994
    %v1997 = vld [vmem:[%s3] sm:$0xff]
    %v1998 = vld [vmem:[%s3 + $0x8] sm:$0xff]
    %v1999 = vld [vmem:[%s3 + $0x10] sm:$0xff]
    %v2000 = vld [vmem:[%s3 + $0x18] sm:$0xff]
    %v2001 = vld [vmem:[#allocation5] sm:$0xff]
    %v2002 = vld [vmem:[#allocation5 + $0x8] sm:$0xff]
    %v2003 = vld [vmem:[#allocation5 + $0x10] sm:$0xff]
    %v2004 = vld [vmem:[#allocation5 + $0x18] sm:$0xff]
    %v2005 = vld [vmem:[#allocation5 + $0x20] sm:$0xff]
    %v2006 = vld [vmem:[#allocation5 + $0x28] sm:$0xff]
    %v2007 = vld [vmem:[#allocation5 + $0x30] sm:$0xff]
    %v2008 = vld [vmem:[#allocation5 + $0x38] sm:$0xff]
    %v2009 = vld [vmem:[#allocation5 + $0x40] sm:$0xff]
    %v2010 = vld [vmem:[#allocation5 + $0x48] sm:$0xff]
    %v2011 = vld [vmem:[#allocation5 + $0x50] sm:$0xff]
    %v2012 = vld [vmem:[#allocation5 + $0x58] sm:$0xff]
    %v2013 = vld [vmem:[#allocation5 + $0x60] sm:$0xff]
    %v2014 = vld [vmem:[#allocation5 + $0x68] sm:$0xff]
    %v2015 = vld [vmem:[#allocation5 + $0x70] sm:$0xff]
    %v2016 = vld [vmem:[#allocation5 + $0x78] sm:$0xff]
    %2017 = vmatpush.msra.mxu0 0.0
    %2018 = vmatpush.msra.mxu0 0.0
    %2019 = vmatpush.msra.mxu0 0.0
    %2020 = vmatpush.msra.mxu0 0.0
    %2021 = vmatpush.msra.mxu0 0.0
    %2022 = vmatpush.msra.mxu0 0.0
    %2023 = vmatpush.msra.mxu0 0.0
    %2024 = vmatpush.msra.mxu0 0.0
    %2025 = vmatpush.msra.mxu0 %v2015
    %2026 = vmatpush.msra.mxu0 %v2013
    %2027 = vmatpush.msra.mxu0 %v2011
    %2028 = vmatpush.msra.mxu0 %v2009
    %2029 = vmatpush.msra.mxu0 %v2007
    %2030 = vmatpush.msra.mxu0 %v2005
    %2031 = vmatpush.msra.mxu0 %v2003
    %2032 = vmatpush.msra.mxu0 %v2001
    %2033 = vmatmul.f32.gmra.mxu0 %v1886
    %v2034 = vpop.f32.mrf.mxu0
    %v2035 = vadd.f32 0.0, %v2034
    %2036 = vdwg.mxu0
    %2037 = vmatpush.msra.mxu0 0.0
    %2038 = vmatpush.msra.mxu0 0.0
    %2039 = vmatpush.msra.mxu0 0.0
    %2040 = vmatpush.msra.mxu0 0.0
    %2041 = vmatpush.msra.mxu0 0.0
    %2042 = vmatpush.msra.mxu0 0.0
    %2043 = vmatpush.msra.mxu0 0.0
    %2044 = vmatpush.msra.mxu0 0.0
    %2045 = vmatpush.msra.mxu0 %v2016
    %2046 = vmatpush.msra.mxu0 %v2014
    %2047 = vmatpush.msra.mxu0 %v2012
    %2048 = vmatpush.msra.mxu0 %v2010
    %2049 = vmatpush.msra.mxu0 %v2008
    %2050 = vmatpush.msra.mxu0 %v2006
    %2051 = vmatpush.msra.mxu0 %v2004
    %2052 = vmatpush.msra.mxu0 %v2002
    %2053 = vmatmul.f32.gmra.mxu0 %v1886
    %v2054 = vpop.f32.mrf.mxu0
    %v2055 = vadd.f32 0.0, %v2054
    %2056 = vdwg.mxu0
    %v2058 = vsel %vm136, %v1994, 0
    %2060 = vmatpush.msra.mxu0 0.0
    %2061 = vmatpush.msra.mxu0 0.0
    %2062 = vmatpush.msra.mxu0 0.0
    %2063 = vmatpush.msra.mxu0 0.0
    %2064 = vmatpush.msra.mxu0 0.0
    %2065 = vmatpush.msra.mxu0 0.0
    %2066 = vmatpush.msra.mxu0 0.0
    %2067 = vmatpush.msra.mxu0 0.0
    %2068 = vmatpush.msra.mxu0 0.0
    %2069 = vmatpush.msra.mxu0 0.0
    %2070 = vmatpush.msra.mxu0 0.0
    %2071 = vmatpush.msra.mxu0 0.0
    %2072 = vmatpush.msra.mxu0 0.0
    %2073 = vmatpush.msra.mxu0 0.0
    %2074 = vmatpush.msra.mxu0 %v1999
    %2075 = vmatpush.msra.mxu0 %v1997
    %2076 = vmatmul.f32.gmra.mxu0 %v2058
    %v2077 = vpop.f32.mrf.mxu0
    %v2078 = vadd.f32 %v2035, %v2077
    %2079 = vdwg.mxu0
    %2080 = vmatpush.msra.mxu0 0.0
    %2081 = vmatpush.msra.mxu0 0.0
    %2082 = vmatpush.msra.mxu0 0.0
    %2083 = vmatpush.msra.mxu0 0.0
    %2084 = vmatpush.msra.mxu0 0.0
    %2085 = vmatpush.msra.mxu0 0.0
    %2086 = vmatpush.msra.mxu0 0.0
    %2087 = vmatpush.msra.mxu0 0.0
    %2088 = vmatpush.msra.mxu0 0.0
    %2089 = vmatpush.msra.mxu0 0.0
    %2090 = vmatpush.msra.mxu0 0.0
    %2091 = vmatpush.msra.mxu0 0.0
    %2092 = vmatpush.msra.mxu0 0.0
    %2093 = vmatpush.msra.mxu0 0.0
    %2094 = vmatpush.msra.mxu0 %v2000
    %2095 = vmatpush.msra.mxu0 %v1998
    %2096 = vmatmul.f32.gmra.mxu0 %v2058
    %v2097 = vpop.f32.mrf.mxu0
    %v2098 = vadd.f32 %v2055, %v2097
    %2099 = vdwg.mxu0
    %v2100 = vld [vmem:[%s6] sm:$0x3]
    %v2102 = vperm.slane %v2100, 0
    %v2103 = vperm.slane %v2100, 1
    %v2106 = vadd.f32 %v2078, %v2102
    %v2107 = vadd.f32 %v2098, %v2103
    %v2108 = vtanh.pop %v2106
    %v2109 = vtanh.pop %v2107
    %v2110 = vmul.f32 %v2108, 0.5
    %v2111 = vmul.f32 %v2109, 0.5
    %v2112 = vadd.f32 %v2110, 0.5
    %v2113 = vadd.f32 %v2111, 0.5
    %v2114 = vmul.f32 %v2112, %v1806
    %2116 = vrot.lane.b32.xlu0 %v2109, 64
    %v2117 = vpop.permute.xlu0 %2116
    %v2119 = vmul.f32 %v2112, %v2117
    %2121 = vrot.lane.b32.xlu0 %v2119, 64
    %v2122 = vpop.permute.xlu0 %2121
    %v2124 = vadd.f32 %v2114, %v2122
    %v2125 = vtanh.pop %v2124
    %2127 = vrot.lane.b32.xlu0 %v2125, 64
    %v2128 = vpop.permute.xlu0 %2127
    %v2130 = vmul.f32 %v2113, %v2128
    %v2131 = vld [vmem:[#allocation2] sm:$0xff]
    %v2132 = vld [vmem:[#allocation2 + $0x8] sm:$0xff]
    %v2133 = vld [vmem:[#allocation2 + $0x10] sm:$0xff]
    %v2134 = vld [vmem:[#allocation2 + $0x18] sm:$0xff]
    %v2135 = vld [vmem:[#allocation2 + $0x20] sm:$0xff]
    %v2136 = vld [vmem:[#allocation2 + $0x28] sm:$0xff]
    %v2137 = vld [vmem:[#allocation2 + $0x30] sm:$0xff]
    %v2138 = vld [vmem:[#allocation2 + $0x38] sm:$0xff]
    %v2139 = vld [vmem:[#allocation2 + $0x40] sm:$0xff]
    %v2140 = vld [vmem:[#allocation2 + $0x48] sm:$0xff]
    %v2141 = vld [vmem:[#allocation2 + $0x50] sm:$0xff]
    %v2142 = vld [vmem:[#allocation2 + $0x58] sm:$0xff]
    %v2143 = vld [vmem:[#allocation2 + $0x60] sm:$0xff]
    %v2144 = vld [vmem:[#allocation2 + $0x68] sm:$0xff]
    %v2145 = vld [vmem:[#allocation2 + $0x70] sm:$0xff]
    %v2146 = vld [vmem:[#allocation2 + $0x78] sm:$0xff]
    %v2147 = vld [vmem:[%s231] sm:$0xff]
    %v2148 = vld [vmem:[%s231 + $0x8] sm:$0xff]
    %v2149 = vld [vmem:[%s231 + $0x10] sm:$0xff]
    %v2150 = vld [vmem:[%s231 + $0x18] sm:$0xff]
    %v2151 = vld [vmem:[%s231 + $0x20] sm:$0xff]
    %v2152 = vld [vmem:[%s231 + $0x28] sm:$0xff]
    %v2153 = vld [vmem:[%s231 + $0x30] sm:$0xff]
    %v2154 = vld [vmem:[%s231 + $0x38] sm:$0xff]
    %v2155 = vld [vmem:[%s231 + $0x40] sm:$0xff]
    %v2156 = vld [vmem:[%s231 + $0x48] sm:$0xff]
    %v2157 = vld [vmem:[%s231 + $0x50] sm:$0xff]
    %v2158 = vld [vmem:[%s231 + $0x58] sm:$0xff]
    %v2159 = vld [vmem:[%s231 + $0x60] sm:$0xff]
    %v2160 = vld [vmem:[%s231 + $0x68] sm:$0xff]
    %v2161 = vld [vmem:[%s231 + $0x70] sm:$0xff]
    %v2162 = vld [vmem:[%s231 + $0x78] sm:$0xff]
    %2163 = vmatpush.msra.mxu0 0.0
    %2164 = vmatpush.msra.mxu0 0.0
    %2165 = vmatpush.msra.mxu0 0.0
    %2166 = vmatpush.msra.mxu0 0.0
    %2167 = vmatpush.msra.mxu0 0.0
    %2168 = vmatpush.msra.mxu0 0.0
    %2169 = vmatpush.msra.mxu0 0.0
    %2170 = vmatpush.msra.mxu0 0.0
    %2171 = vmatpush.msra.mxu0 %v2161
    %2172 = vmatpush.msra.mxu0 %v2159
    %2173 = vmatpush.msra.mxu0 %v2157
    %2174 = vmatpush.msra.mxu0 %v2155
    %2175 = vmatpush.msra.mxu0 %v2153
    %2176 = vmatpush.msra.mxu0 %v2151
    %2177 = vmatpush.msra.mxu0 %v2149
    %2178 = vmatpush.msra.mxu0 %v2147
    %2179 = vmatmul.f32.gmra.mxu0 %v1972
    %v2180 = vpop.f32.mrf.mxu0
    %v2181 = vadd.f32 0.0, %v2180
    %2182 = vdwg.mxu0
    %2183 = vmatpush.msra.mxu0 0.0
    %2184 = vmatpush.msra.mxu0 0.0
    %2185 = vmatpush.msra.mxu0 0.0
    %2186 = vmatpush.msra.mxu0 0.0
    %2187 = vmatpush.msra.mxu0 0.0
    %2188 = vmatpush.msra.mxu0 0.0
    %2189 = vmatpush.msra.mxu0 0.0
    %2190 = vmatpush.msra.mxu0 0.0
    %2191 = vmatpush.msra.mxu0 %v2162
    %2192 = vmatpush.msra.mxu0 %v2160
    %2193 = vmatpush.msra.mxu0 %v2158
    %2194 = vmatpush.msra.mxu0 %v2156
    %2195 = vmatpush.msra.mxu0 %v2154
    %2196 = vmatpush.msra.mxu0 %v2152
    %2197 = vmatpush.msra.mxu0 %v2150
    %2198 = vmatpush.msra.mxu0 %v2148
    %2199 = vmatmul.f32.gmra.mxu0 %v1972
    %v2200 = vpop.f32.mrf.mxu0
    %v2201 = vadd.f32 0.0, %v2200
    %2202 = vdwg.mxu0
    %v2204 = vsel %vm92, %v2130, 0
    %2206 = vmatpush.msra.mxu0 0.0
    %2207 = vmatpush.msra.mxu0 0.0
    %2208 = vmatpush.msra.mxu0 0.0
    %2209 = vmatpush.msra.mxu0 0.0
    %2210 = vmatpush.msra.mxu0 0.0
    %2211 = vmatpush.msra.mxu0 0.0
    %2212 = vmatpush.msra.mxu0 0.0
    %2213 = vmatpush.msra.mxu0 0.0
    %2214 = vmatpush.msra.mxu0 %v2145
    %2215 = vmatpush.msra.mxu0 %v2143
    %2216 = vmatpush.msra.mxu0 %v2141
    %2217 = vmatpush.msra.mxu0 %v2139
    %2218 = vmatpush.msra.mxu0 %v2137
    %2219 = vmatpush.msra.mxu0 %v2135
    %2220 = vmatpush.msra.mxu0 %v2133
    %2221 = vmatpush.msra.mxu0 %v2131
    %2222 = vmatmul.f32.gmra.mxu0 %v2204
    %v2223 = vpop.f32.mrf.mxu0
    %v2224 = vadd.f32 %v2181, %v2223
    %2225 = vdwg.mxu0
    %2226 = vmatpush.msra.mxu0 0.0
    %2227 = vmatpush.msra.mxu0 0.0
    %2228 = vmatpush.msra.mxu0 0.0
    %2229 = vmatpush.msra.mxu0 0.0
    %2230 = vmatpush.msra.mxu0 0.0
    %2231 = vmatpush.msra.mxu0 0.0
    %2232 = vmatpush.msra.mxu0 0.0
    %2233 = vmatpush.msra.mxu0 0.0
    %2234 = vmatpush.msra.mxu0 %v2146
    %2235 = vmatpush.msra.mxu0 %v2144
    %2236 = vmatpush.msra.mxu0 %v2142
    %2237 = vmatpush.msra.mxu0 %v2140
    %2238 = vmatpush.msra.mxu0 %v2138
    %2239 = vmatpush.msra.mxu0 %v2136
    %2240 = vmatpush.msra.mxu0 %v2134
    %2241 = vmatpush.msra.mxu0 %v2132
    %2242 = vmatmul.f32.gmra.mxu0 %v2204
    %v2243 = vpop.f32.mrf.mxu0
    %v2244 = vadd.f32 %v2201, %v2243
    %2245 = vdwg.mxu0
    %v2246 = vld [vmem:[%s334] sm:$0x3]
    %v2248 = vperm.slane %v2246, 0
    %v2249 = vperm.slane %v2246, 1
    %v2252 = vadd.f32 %v2224, %v2248
    %v2253 = vadd.f32 %v2244, %v2249
    %v2254 = vtanh.pop %v2252
    %v2255 = vtanh.pop %v2253
    %v2256 = vmul.f32 %v2254, 0.5
    %v2257 = vmul.f32 %v2255, 0.5
    %v2258 = vadd.f32 %v2256, 0.5
    %v2259 = vadd.f32 %v2257, 0.5
    %v2260 = vmul.f32 %v2258, %v1952
    %2262 = vrot.lane.b32.xlu0 %v2255, 64
    %v2263 = vpop.permute.xlu0 %2262
    %v2265 = vmul.f32 %v2258, %v2263
    %2267 = vrot.lane.b32.xlu0 %v2265, 64
    %v2268 = vpop.permute.xlu0 %2267
    %v2270 = vadd.f32 %v2260, %v2268
    %v2271 = vtanh.pop %v2270
    %2273 = vrot.lane.b32.xlu0 %v2271, 64
    %v2274 = vpop.permute.xlu0 %2273
    %v2276 = vmul.f32 %v2259, %v2274
    %v2277 = vld [vmem:[%s7] sm:$0xff]
    %v2278 = vld [vmem:[%s7 + $0x8] sm:$0xff]
    %v2279 = vld [vmem:[%s7 + $0x10] sm:$0xff]
    %v2280 = vld [vmem:[%s7 + $0x18] sm:$0xff]
    %v2281 = vld [vmem:[%s7 + $0x20] sm:$0xff]
    %v2282 = vld [vmem:[%s7 + $0x28] sm:$0xff]
    %v2283 = vld [vmem:[%s7 + $0x30] sm:$0xff]
    %v2284 = vld [vmem:[%s7 + $0x38] sm:$0xff]
    %v2285 = vld [vmem:[%s8] sm:$0x1]
    %v2287 = vperm.slane %v2285, 0
    %v2290 = vsel %vm92, %v2276, 0
    %2292 = vmatpush.msra.mxu0 0.0
    %2293 = vmatpush.msra.mxu0 0.0
    %2294 = vmatpush.msra.mxu0 0.0
    %2295 = vmatpush.msra.mxu0 0.0
    %2296 = vmatpush.msra.mxu0 0.0
    %2297 = vmatpush.msra.mxu0 0.0
    %2298 = vmatpush.msra.mxu0 0.0
    %2299 = vmatpush.msra.mxu0 0.0
    %2300 = vmatpush.msra.mxu0 %v2284
    %2301 = vmatpush.msra.mxu0 %v2283
    %2302 = vmatpush.msra.mxu0 %v2282
    %2303 = vmatpush.msra.mxu0 %v2281
    %2304 = vmatpush.msra.mxu0 %v2280
    %2305 = vmatpush.msra.mxu0 %v2279
    %2306 = vmatpush.msra.mxu0 %v2278
    %2307 = vmatpush.msra.mxu0 %v2277
    %2308 = vmatmul.f32.gmra.mxu0 %v2290
    %v2309 = vpop.f32.mrf.mxu0
    %v2310 = vadd.f32 %v2287, %v2309
    %2311 = vdwg.mxu0
    %v2312 = vtanh.pop %v2310
    %s2313 = scalar_lea.vmem [#allocation7], 48
    %2314 = vst.msk [vmem:[%s2313] sm:$0xff] %vm136, %v2312
    %v2315 = vld [vmem:[%s3] sm:$0xff]
    %v2316 = vld [vmem:[%s3 + $0x8] sm:$0xff]
    %v2317 = vld [vmem:[%s3 + $0x10] sm:$0xff]
    %v2318 = vld [vmem:[%s3 + $0x18] sm:$0xff]
    %v2319 = vld [vmem:[#allocation5] sm:$0xff]
    %v2320 = vld [vmem:[#allocation5 + $0x8] sm:$0xff]
    %v2321 = vld [vmem:[#allocation5 + $0x10] sm:$0xff]
    %v2322 = vld [vmem:[#allocation5 + $0x18] sm:$0xff]
    %v2323 = vld [vmem:[#allocation5 + $0x20] sm:$0xff]
    %v2324 = vld [vmem:[#allocation5 + $0x28] sm:$0xff]
    %v2325 = vld [vmem:[#allocation5 + $0x30] sm:$0xff]
    %v2326 = vld [vmem:[#allocation5 + $0x38] sm:$0xff]
    %v2327 = vld [vmem:[#allocation5 + $0x40] sm:$0xff]
    %v2328 = vld [vmem:[#allocation5 + $0x48] sm:$0xff]
    %v2329 = vld [vmem:[#allocation5 + $0x50] sm:$0xff]
    %v2330 = vld [vmem:[#allocation5 + $0x58] sm:$0xff]
    %v2331 = vld [vmem:[#allocation5 + $0x60] sm:$0xff]
    %v2332 = vld [vmem:[#allocation5 + $0x68] sm:$0xff]
    %v2333 = vld [vmem:[#allocation5 + $0x70] sm:$0xff]
    %v2334 = vld [vmem:[#allocation5 + $0x78] sm:$0xff]
    %2335 = vmatpush.msra.mxu0 0.0
    %2336 = vmatpush.msra.mxu0 0.0
    %2337 = vmatpush.msra.mxu0 0.0
    %2338 = vmatpush.msra.mxu0 0.0
    %2339 = vmatpush.msra.mxu0 0.0
    %2340 = vmatpush.msra.mxu0 0.0
    %2341 = vmatpush.msra.mxu0 0.0
    %2342 = vmatpush.msra.mxu0 0.0
    %2343 = vmatpush.msra.mxu0 %v2333
    %2344 = vmatpush.msra.mxu0 %v2331
    %2345 = vmatpush.msra.mxu0 %v2329
    %2346 = vmatpush.msra.mxu0 %v2327
    %2347 = vmatpush.msra.mxu0 %v2325
    %2348 = vmatpush.msra.mxu0 %v2323
    %2349 = vmatpush.msra.mxu0 %v2321
    %2350 = vmatpush.msra.mxu0 %v2319
    %2351 = vmatmul.f32.gmra.mxu0 %v2204
    %v2352 = vpop.f32.mrf.mxu0
    %v2353 = vadd.f32 0.0, %v2352
    %2354 = vdwg.mxu0
    %2355 = vmatpush.msra.mxu0 0.0
    %2356 = vmatpush.msra.mxu0 0.0
    %2357 = vmatpush.msra.mxu0 0.0
    %2358 = vmatpush.msra.mxu0 0.0
    %2359 = vmatpush.msra.mxu0 0.0
    %2360 = vmatpush.msra.mxu0 0.0
    %2361 = vmatpush.msra.mxu0 0.0
    %2362 = vmatpush.msra.mxu0 0.0
    %2363 = vmatpush.msra.mxu0 %v2334
    %2364 = vmatpush.msra.mxu0 %v2332
    %2365 = vmatpush.msra.mxu0 %v2330
    %2366 = vmatpush.msra.mxu0 %v2328
    %2367 = vmatpush.msra.mxu0 %v2326
    %2368 = vmatpush.msra.mxu0 %v2324
    %2369 = vmatpush.msra.mxu0 %v2322
    %2370 = vmatpush.msra.mxu0 %v2320
    %2371 = vmatmul.f32.gmra.mxu0 %v2204
    %v2372 = vpop.f32.mrf.mxu0
    %v2373 = vadd.f32 0.0, %v2372
    %2374 = vdwg.mxu0
    %v2376 = vsel %vm136, %v2312, 0
    %2378 = vmatpush.msra.mxu0 0.0
    %2379 = vmatpush.msra.mxu0 0.0
    %2380 = vmatpush.msra.mxu0 0.0
    %2381 = vmatpush.msra.mxu0 0.0
    %2382 = vmatpush.msra.mxu0 0.0
    %2383 = vmatpush.msra.mxu0 0.0
    %2384 = vmatpush.msra.mxu0 0.0
    %2385 = vmatpush.msra.mxu0 0.0
    %2386 = vmatpush.msra.mxu0 0.0
    %2387 = vmatpush.msra.mxu0 0.0
    %2388 = vmatpush.msra.mxu0 0.0
    %2389 = vmatpush.msra.mxu0 0.0
    %2390 = vmatpush.msra.mxu0 0.0
    %2391 = vmatpush.msra.mxu0 0.0
    %2392 = vmatpush.msra.mxu0 %v2317
    %2393 = vmatpush.msra.mxu0 %v2315
    %2394 = vmatmul.f32.gmra.mxu0 %v2376
    %v2395 = vpop.f32.mrf.mxu0
    %v2396 = vadd.f32 %v2353, %v2395
    %2397 = vdwg.mxu0
    %2398 = vmatpush.msra.mxu0 0.0
    %2399 = vmatpush.msra.mxu0 0.0
    %2400 = vmatpush.msra.mxu0 0.0
    %2401 = vmatpush.msra.mxu0 0.0
    %2402 = vmatpush.msra.mxu0 0.0
    %2403 = vmatpush.msra.mxu0 0.0
    %2404 = vmatpush.msra.mxu0 0.0
    %2405 = vmatpush.msra.mxu0 0.0
    %2406 = vmatpush.msra.mxu0 0.0
    %2407 = vmatpush.msra.mxu0 0.0
    %2408 = vmatpush.msra.mxu0 0.0
    %2409 = vmatpush.msra.mxu0 0.0
    %2410 = vmatpush.msra.mxu0 0.0
    %2411 = vmatpush.msra.mxu0 0.0
    %2412 = vmatpush.msra.mxu0 %v2318
    %2413 = vmatpush.msra.mxu0 %v2316
    %2414 = vmatmul.f32.gmra.mxu0 %v2376
    %v2415 = vpop.f32.mrf.mxu0
    %v2416 = vadd.f32 %v2373, %v2415
    %2417 = vdwg.mxu0
    %v2418 = vld [vmem:[%s6] sm:$0x3]
    %v2420 = vperm.slane %v2418, 0
    %v2421 = vperm.slane %v2418, 1
    %v2424 = vadd.f32 %v2396, %v2420
    %v2425 = vadd.f32 %v2416, %v2421
    %v2426 = vtanh.pop %v2424
    %v2427 = vtanh.pop %v2425
    %v2428 = vmul.f32 %v2426, 0.5
    %v2429 = vmul.f32 %v2427, 0.5
    %v2430 = vadd.f32 %v2428, 0.5
    %v2431 = vadd.f32 %v2429, 0.5
    %v2432 = vmul.f32 %v2430, %v2124
    %2434 = vrot.lane.b32.xlu0 %v2427, 64
    %v2435 = vpop.permute.xlu0 %2434
    %v2437 = vmul.f32 %v2430, %v2435
    %2439 = vrot.lane.b32.xlu0 %v2437, 64
    %v2440 = vpop.permute.xlu0 %2439
    %v2442 = vadd.f32 %v2432, %v2440
    %v2443 = vtanh.pop %v2442
    %2445 = vrot.lane.b32.xlu0 %v2443, 64
    %v2446 = vpop.permute.xlu0 %2445
    %v2448 = vmul.f32 %v2431, %v2446
    %v2449 = vld [vmem:[#allocation2] sm:$0xff]
    %v2450 = vld [vmem:[#allocation2 + $0x8] sm:$0xff]
    %v2451 = vld [vmem:[#allocation2 + $0x10] sm:$0xff]
    %v2452 = vld [vmem:[#allocation2 + $0x18] sm:$0xff]
    %v2453 = vld [vmem:[#allocation2 + $0x20] sm:$0xff]
    %v2454 = vld [vmem:[#allocation2 + $0x28] sm:$0xff]
    %v2455 = vld [vmem:[#allocation2 + $0x30] sm:$0xff]
    %v2456 = vld [vmem:[#allocation2 + $0x38] sm:$0xff]
    %v2457 = vld [vmem:[#allocation2 + $0x40] sm:$0xff]
    %v2458 = vld [vmem:[#allocation2 + $0x48] sm:$0xff]
    %v2459 = vld [vmem:[#allocation2 + $0x50] sm:$0xff]
    %v2460 = vld [vmem:[#allocation2 + $0x58] sm:$0xff]
    %v2461 = vld [vmem:[#allocation2 + $0x60] sm:$0xff]
    %v2462 = vld [vmem:[#allocation2 + $0x68] sm:$0xff]
    %v2463 = vld [vmem:[#allocation2 + $0x70] sm:$0xff]
    %v2464 = vld [vmem:[#allocation2 + $0x78] sm:$0xff]
    %v2465 = vld [vmem:[%s231] sm:$0xff]
    %v2466 = vld [vmem:[%s231 + $0x8] sm:$0xff]
    %v2467 = vld [vmem:[%s231 + $0x10] sm:$0xff]
    %v2468 = vld [vmem:[%s231 + $0x18] sm:$0xff]
    %v2469 = vld [vmem:[%s231 + $0x20] sm:$0xff]
    %v2470 = vld [vmem:[%s231 + $0x28] sm:$0xff]
    %v2471 = vld [vmem:[%s231 + $0x30] sm:$0xff]
    %v2472 = vld [vmem:[%s231 + $0x38] sm:$0xff]
    %v2473 = vld [vmem:[%s231 + $0x40] sm:$0xff]
    %v2474 = vld [vmem:[%s231 + $0x48] sm:$0xff]
    %v2475 = vld [vmem:[%s231 + $0x50] sm:$0xff]
    %v2476 = vld [vmem:[%s231 + $0x58] sm:$0xff]
    %v2477 = vld [vmem:[%s231 + $0x60] sm:$0xff]
    %v2478 = vld [vmem:[%s231 + $0x68] sm:$0xff]
    %v2479 = vld [vmem:[%s231 + $0x70] sm:$0xff]
    %v2480 = vld [vmem:[%s231 + $0x78] sm:$0xff]
    %2481 = vmatpush.msra.mxu0 0.0
    %2482 = vmatpush.msra.mxu0 0.0
    %2483 = vmatpush.msra.mxu0 0.0
    %2484 = vmatpush.msra.mxu0 0.0
    %2485 = vmatpush.msra.mxu0 0.0
    %2486 = vmatpush.msra.mxu0 0.0
    %2487 = vmatpush.msra.mxu0 0.0
    %2488 = vmatpush.msra.mxu0 0.0
    %2489 = vmatpush.msra.mxu0 %v2479
    %2490 = vmatpush.msra.mxu0 %v2477
    %2491 = vmatpush.msra.mxu0 %v2475
    %2492 = vmatpush.msra.mxu0 %v2473
    %2493 = vmatpush.msra.mxu0 %v2471
    %2494 = vmatpush.msra.mxu0 %v2469
    %2495 = vmatpush.msra.mxu0 %v2467
    %2496 = vmatpush.msra.mxu0 %v2465
    %2497 = vmatmul.f32.gmra.mxu0 %v2290
    %v2498 = vpop.f32.mrf.mxu0
    %v2499 = vadd.f32 0.0, %v2498
    %2500 = vdwg.mxu0
    %2501 = vmatpush.msra.mxu0 0.0
    %2502 = vmatpush.msra.mxu0 0.0
    %2503 = vmatpush.msra.mxu0 0.0
    %2504 = vmatpush.msra.mxu0 0.0
    %2505 = vmatpush.msra.mxu0 0.0
    %2506 = vmatpush.msra.mxu0 0.0
    %2507 = vmatpush.msra.mxu0 0.0
    %2508 = vmatpush.msra.mxu0 0.0
    %2509 = vmatpush.msra.mxu0 %v2480
    %2510 = vmatpush.msra.mxu0 %v2478
    %2511 = vmatpush.msra.mxu0 %v2476
    %2512 = vmatpush.msra.mxu0 %v2474
    %2513 = vmatpush.msra.mxu0 %v2472
    %2514 = vmatpush.msra.mxu0 %v2470
    %2515 = vmatpush.msra.mxu0 %v2468
    %2516 = vmatpush.msra.mxu0 %v2466
    %2517 = vmatmul.f32.gmra.mxu0 %v2290
    %v2518 = vpop.f32.mrf.mxu0
    %v2519 = vadd.f32 0.0, %v2518
    %2520 = vdwg.mxu0
    %v2522 = vsel %vm92, %v2448, 0
    %2524 = vmatpush.msra.mxu0 0.0
    %2525 = vmatpush.msra.mxu0 0.0
    %2526 = vmatpush.msra.mxu0 0.0
    %2527 = vmatpush.msra.mxu0 0.0
    %2528 = vmatpush.msra.mxu0 0.0
    %2529 = vmatpush.msra.mxu0 0.0
    %2530 = vmatpush.msra.mxu0 0.0
    %2531 = vmatpush.msra.mxu0 0.0
    %2532 = vmatpush.msra.mxu0 %v2463
    %2533 = vmatpush.msra.mxu0 %v2461
    %2534 = vmatpush.msra.mxu0 %v2459
    %2535 = vmatpush.msra.mxu0 %v2457
    %2536 = vmatpush.msra.mxu0 %v2455
    %2537 = vmatpush.msra.mxu0 %v2453
    %2538 = vmatpush.msra.mxu0 %v2451
    %2539 = vmatpush.msra.mxu0 %v2449
    %2540 = vmatmul.f32.gmra.mxu0 %v2522
    %v2541 = vpop.f32.mrf.mxu0
    %v2542 = vadd.f32 %v2499, %v2541
    %2543 = vdwg.mxu0
    %2544 = vmatpush.msra.mxu0 0.0
    %2545 = vmatpush.msra.mxu0 0.0
    %2546 = vmatpush.msra.mxu0 0.0
    %2547 = vmatpush.msra.mxu0 0.0
    %2548 = vmatpush.msra.mxu0 0.0
    %2549 = vmatpush.msra.mxu0 0.0
    %2550 = vmatpush.msra.mxu0 0.0
    %2551 = vmatpush.msra.mxu0 0.0
    %2552 = vmatpush.msra.mxu0 %v2464
    %2553 = vmatpush.msra.mxu0 %v2462
    %2554 = vmatpush.msra.mxu0 %v2460
    %2555 = vmatpush.msra.mxu0 %v2458
    %2556 = vmatpush.msra.mxu0 %v2456
    %2557 = vmatpush.msra.mxu0 %v2454
    %2558 = vmatpush.msra.mxu0 %v2452
    %2559 = vmatpush.msra.mxu0 %v2450
    %2560 = vmatmul.f32.gmra.mxu0 %v2522
    %v2561 = vpop.f32.mrf.mxu0
    %v2562 = vadd.f32 %v2519, %v2561
    %2563 = vdwg.mxu0
    %v2564 = vld [vmem:[%s334] sm:$0x3]
    %v2566 = vperm.slane %v2564, 0
    %v2567 = vperm.slane %v2564, 1
    %v2570 = vadd.f32 %v2542, %v2566
    %v2571 = vadd.f32 %v2562, %v2567
    %v2572 = vtanh.pop %v2570
    %v2573 = vtanh.pop %v2571
    %v2574 = vmul.f32 %v2572, 0.5
    %v2575 = vmul.f32 %v2573, 0.5
    %v2576 = vadd.f32 %v2574, 0.5
    %v2577 = vadd.f32 %v2575, 0.5
    %v2578 = vmul.f32 %v2576, %v2270
    %2580 = vrot.lane.b32.xlu0 %v2573, 64
    %v2581 = vpop.permute.xlu0 %2580
    %v2583 = vmul.f32 %v2576, %v2581
    %2585 = vrot.lane.b32.xlu0 %v2583, 64
    %v2586 = vpop.permute.xlu0 %2585
    %v2588 = vadd.f32 %v2578, %v2586
    %v2589 = vtanh.pop %v2588
    %2591 = vrot.lane.b32.xlu0 %v2589, 64
    %v2592 = vpop.permute.xlu0 %2591
    %v2594 = vmul.f32 %v2577, %v2592
    %v2595 = vld [vmem:[%s7] sm:$0xff]
    %v2596 = vld [vmem:[%s7 + $0x8] sm:$0xff]
    %v2597 = vld [vmem:[%s7 + $0x10] sm:$0xff]
    %v2598 = vld [vmem:[%s7 + $0x18] sm:$0xff]
    %v2599 = vld [vmem:[%s7 + $0x20] sm:$0xff]
    %v2600 = vld [vmem:[%s7 + $0x28] sm:$0xff]
    %v2601 = vld [vmem:[%s7 + $0x30] sm:$0xff]
    %v2602 = vld [vmem:[%s7 + $0x38] sm:$0xff]
    %v2603 = vld [vmem:[%s8] sm:$0x1]
    %v2605 = vperm.slane %v2603, 0
    %v2608 = vsel %vm92, %v2594, 0
    %2610 = vmatpush.msra.mxu0 0.0
    %2611 = vmatpush.msra.mxu0 0.0
    %2612 = vmatpush.msra.mxu0 0.0
    %2613 = vmatpush.msra.mxu0 0.0
    %2614 = vmatpush.msra.mxu0 0.0
    %2615 = vmatpush.msra.mxu0 0.0
    %2616 = vmatpush.msra.mxu0 0.0
    %2617 = vmatpush.msra.mxu0 0.0
    %2618 = vmatpush.msra.mxu0 %v2602
    %2619 = vmatpush.msra.mxu0 %v2601
    %2620 = vmatpush.msra.mxu0 %v2600
    %2621 = vmatpush.msra.mxu0 %v2599
    %2622 = vmatpush.msra.mxu0 %v2598
    %2623 = vmatpush.msra.mxu0 %v2597
    %2624 = vmatpush.msra.mxu0 %v2596
    %2625 = vmatpush.msra.mxu0 %v2595
    %2626 = vmatmul.f32.gmra.mxu0 %v2608
    %v2627 = vpop.f32.mrf.mxu0
    %v2628 = vadd.f32 %v2605, %v2627
    %2629 = vdwg.mxu0
    %v2630 = vtanh.pop %v2628
    %s2631 = scalar_lea.vmem [#allocation7], 56
    %2632 = vst.msk [vmem:[%s2631] sm:$0xff] %vm136, %v2630
    // Predicated region
    $region46: #{tpu_custom_call.1} parent=1 // pred_check
      _
    $region47: #{tpu_custom_call.1} parent=1 // pred_check_branch
      %2634 = sbr.rel (0) target = $region49
    $region48: #{tpu_custom_call.1} parent=1 // pred_region
      %2636 = vsyncadd [#allocation4], 0
      %s2637 = sshll.u32 [#allocation7], 4
      %s2638 = int_to_ptr.vmem [resolvable:$true] %s2637
      %s2639 = sshll.u32 %s9, 4
      %s2640 = int_to_ptr.hbm [resolvable:$true] %s2639
      %2645 = dma.vmem_to_hbm [thread:$0]  %s2638, 1024, %s2640, [#allocation4], 128, 128, 8
    $region49: #{tpu_custom_call.1} parent=1 // pred_fallthru
      _
    // Predicated region
    $region50: #{tpu_custom_call.1} parent=1 // pred_check
      _
    $region51: #{tpu_custom_call.1} parent=1 // pred_check_branch
      %2647 = sbr.rel (0) target = $region53
    $region52: #{tpu_custom_call.1} parent=1 // pred_region
      %2649 = dma.done [#allocation4], 1024
    $region53: #{tpu_custom_call.1} parent=1 // pred_fallthru
      _
    %2650 = vsyncpa [#allocation3], 1
    %2651 = vsyncpa [#allocation6], 1
    %2652 = vsyncpa [#allocation4], 1

</llo_original>
